<compile_context>
chip_gen: v6e
topology: v6e:2x2x1
jax: 0.10.0
libtpu: 0.0.40
codegen_flags: <defaults>
</compile_context>

<pallas_src>
import functools
import math

import jax
import jax.numpy as jnp
from jax.experimental import pallas as pl
from jax.experimental.pallas import tpu as pltpu

_LANE = 128
_SUBLANE = 8
# HIGHEST for parity with the fp32 PyTorch reference; use DEFAULT for speed
# on wide (compute-bound) hidden dims.
_MATMUL_PRECISION = jax.lax.Precision.HIGHEST


def _round_up(n, m):
    return ((n + m - 1) // m) * m


def _cdiv(a, b):
    return -(-a // b)


# --------------------------------------------------------------------------
# Fused MLP kernel: x -> [dot + bias + tanh] * (L-1) -> dot + bias -> out
# --------------------------------------------------------------------------
def _fused_mlp_kernel(*refs, n_layers):
    x_ref = refs[0]
    o_ref = refs[-1]
    wb_refs = refs[1:-1]          # w1, b1, w2, b2, ..., wL, bL

    h = x_ref[...]
    for i in range(n_layers):
        w = wb_refs[2 * i][...]           # (din[_pad], dout_pad)
        b = wb_refs[2 * i + 1][...]       # (1, dout_pad) -> broadcasts
        h = jnp.dot(h, w, preferred_element_type=jnp.float32,
                    precision=_MATMUL_PRECISION) + b
        if i < n_layers - 1:
            h = jnp.tanh(h)               # EUP; padded lanes stay 0
    o_ref[...] = h.astype(o_ref.dtype)


def fused_mlp(x_pad, padded_params, *, batch_tile, single_buffer_weights):
    """x_pad: (b_pad, din); padded_params: list of (w_t[_pad], b_row_pad)."""
    b_pad, din = x_pad.shape
    dout_pad = padded_params[-1][0].shape[1]
    n_layers = len(padded_params)
    grid = (b_pad // batch_tile,)

    in_specs = [pl.BlockSpec((batch_tile, din), lambda i: (i, 0))]
    flat_args = [x_pad]
    wb_kwargs = ({"pipeline_mode": pl.Buffered(1)}
                 if single_buffer_weights else {})
    for w_t, b_row in padded_params:
        # Weights / biases are grid-invariant -> VMEM-resident across steps;
        # Buffered(1) avoids a useless second buffer copy of each.
        in_specs.append(pl.BlockSpec(w_t.shape, lambda i: (0, 0), **wb_kwargs))
        in_specs.append(pl.BlockSpec(b_row.shape, lambda i: (0, 0), **wb_kwargs))
        flat_args += [w_t, b_row]

    # --- explicit VMEM budget ------------------------------------------------
    weight_bufs = 1 if single_buffer_weights else 2
    weight_bytes = weight_bufs * 4 * sum(int(w.size) + int(b.size)
                                         for w, b in padded_params)
    io_bytes = 4 * (2 * batch_tile * din + 2 * batch_tile * dout_pad)
    max_width = max([din] + [int(w.shape[1]) for w, _ in padded_params])
    act_bytes = 2 * 4 * batch_tile * max_width
    vmem_limit = int(1.5 * (weight_bytes + io_bytes + act_bytes)) + (2 << 20)
    vmem_limit = min(max(vmem_limit, 4 << 20), 64 << 20)

    # --- cost estimate ---------------------------------------------------------
    flops = int(2 * b_pad * sum(int(w.shape[0]) * int(w.shape[1])
                                for w, _ in padded_params))
    transcendentals = int(b_pad * sum(int(w.shape[1])
                                      for w, _ in padded_params[:-1]))
    bytes_accessed = int(4 * (x_pad.size + b_pad * dout_pad
                              + sum(int(w.size) + int(b.size)
                                    for w, b in padded_params)))

    kernel = functools.partial(_fused_mlp_kernel, n_layers=n_layers)
    return pl.pallas_call(
        kernel,
        out_shape=jax.ShapeDtypeStruct((b_pad, dout_pad), jnp.float32),
        grid=grid,
        in_specs=in_specs,
        out_specs=pl.BlockSpec((batch_tile, dout_pad), lambda i: (i, 0)),
        compiler_params=pltpu.CompilerParams(
            dimension_semantics=("parallel",),
            vmem_limit_bytes=vmem_limit),
        cost_estimate=pl.CostEstimate(
            flops=flops,
            transcendentals=transcendentals,
            bytes_accessed=bytes_accessed),
    )(*flat_args)


# --------------------------------------------------------------------------
# Parameter init (matches NeuralNetwork._initialize_weights) and preparation
# --------------------------------------------------------------------------
def init_params(key, input_dim, hidden_dims, output_dim):
    """PyTorch-layout params: W (out, in), b (out,)."""
    dims = [input_dim] + list(hidden_dims) + [output_dim]
    n_layers = len(dims) - 1
    width = hidden_dims[0]
    params = []
    for i in range(n_layers):
        key, wk = jax.random.split(key)
        if 0 < i < n_layers - 1:
            std = 1.0 / math.sqrt(width)
        else:
            std = 1.0 / math.sqrt(dims[i])
        w = std * jax.random.normal(wk, (dims[i + 1], dims[i]), jnp.float32)
        b = jnp.zeros((dims[i + 1],), jnp.float32)
        params.append((w, b))
    return params


def prepare_params(params):
    """Pre-transpose to (in, out); pad out-dims (and non-first in-dims) to 128."""
    padded = []
    for i, (w, b) in enumerate(params):
        dout, din = w.shape
        # First layer keeps its natural (small) input dim: the MXU pads K<128
        # internally for free and we avoid reading 128/din x more input bytes.
        din_p = din if i == 0 else _round_up(din, _LANE)
        dout_p = _round_up(dout, _LANE)
        w_t = jnp.zeros((din_p, dout_p), jnp.float32).at[:din, :dout].set(w.T)
        b_row = jnp.zeros((1, dout_p), jnp.float32).at[:, :dout].set(b)
        padded.append((w_t, b_row))
    return padded


# --------------------------------------------------------------------------
# Forward
# --------------------------------------------------------------------------
@functools.partial(
    jax.jit,
    static_argnames=("output_dim", "batch_tile", "single_buffer_weights"))
def _forward_impl(padded_params, x, *, output_dim, batch_tile,
                  single_buffer_weights):
    batch, din = x.shape

    # v7x (64 MiB VMEM) guard: shrink the batch tile if resident weights grow.
    weight_mib = 4 * sum(int(w.size) + int(b.size)
                         for w, b in padded_params) / float(1 << 20)
    if weight_mib > 24.0:
        batch_tile = min(batch_tile, 256)
    # TODO(synk): for very wide layers (>~28 MiB resident weights) switch to a
    # K/N-tiled grid axis that streams weight tiles from HBM instead.

    # Balanced batch tiles: pad waste < 8 rows per tile, and >= 2 grid steps
    # once batch >= 16 so v7x's two TensorCores both get work.
    n_tiles = max(1, _cdiv(batch, batch_tile))
    if batch >= 16:
        n_tiles = max(n_tiles, 2)
    tb = _round_up(_cdiv(batch, n_tiles), _SUBLANE)
    b_pad = n_tiles * tb

    if b_pad == batch:
        x_pad = x
    else:
        x_pad = jnp.zeros((b_pad, din), x.dtype).at[:batch, :].set(x)

    out_pad = fused_mlp(x_pad, padded_params, batch_tile=tb,
                        single_buffer_weights=single_buffer_weights)
    return out_pad[:batch, :output_dim]


def forward(padded_params, x, *, output_dim, batch_tile=1024):
    try:
        return _forward_impl(padded_params, x, output_dim=output_dim,
                             batch_tile=batch_tile,
                             single_buffer_weights=True)
    except Exception:
        # Fallback if this jax build rejects pipeline_mode=pl.Buffered(1).
        return _forward_impl(padded_params, x, output_dim=output_dim,
                             batch_tile=batch_tile,
                             single_buffer_weights=False)


def forward_ref(params, x):
    """Pure-JAX reference matching the PyTorch fp32 forward semantics."""
    n = len(params)
    for i, (w, b) in enumerate(params):
        x = jnp.dot(x, w.T, precision=jax.lax.Precision.HIGHEST) + b
        if i < n - 1:
            x = jnp.tanh(x)
    return x


if __name__ == "__main__":
    input_dim = 4
    hidden_dims = [32, 32]
    output_dim = 2
    batch = 8

    key = jax.random.PRNGKey(0)
    key, pkey, xkey = jax.random.split(key, 3)

    params = init_params(pkey, input_dim, hidden_dims, output_dim)
    padded_params = prepare_params(params)
    x = jax.random.normal(xkey, (batch, input_dim), jnp.float32)

    out = forward(padded_params, x, output_dim=output_dim)
    out = jax.block_until_ready(out)

    ref = forward_ref(params, x)
    assert out.shape == (batch, output_dim)
    assert jnp.allclose(out, ref, atol=1e-5, rtol=1e-5), (
        float(jnp.max(jnp.abs(out - ref))))

    print("KERNEL_OK")
</pallas_src>

<mosaic_0001>
module attributes {stable_mosaic.version = 11 : i64} {
  func.func @_fused_mlp_kernel(%arg0: i32, %arg1: memref<8x4xf32, #tpu.memory_space<vmem>>, %arg2: memref<4x128xf32, #tpu.memory_space<vmem>>, %arg3: memref<1x128xf32, #tpu.memory_space<vmem>>, %arg4: memref<128x128xf32, #tpu.memory_space<vmem>>, %arg5: memref<1x128xf32, #tpu.memory_space<vmem>>, %arg6: memref<128x128xf32, #tpu.memory_space<vmem>>, %arg7: memref<1x128xf32, #tpu.memory_space<vmem>>, %arg8: memref<8x128xf32, #tpu.memory_space<vmem>>) attributes {dimension_semantics = [#tpu.dimension_semantics<parallel>], iteration_bounds = array<i64: 1>, scalar_prefetch = 0 : i64, scratch_operands = 0 : i64, tpu.core_type = #tpu.core_type<tc>, window_params = [{transform_indices = @transform_0, window_bounds = array<i64: 8, 4>}, {pipeline_mode = #tpu.pipeline_mode<synchronous>, transform_indices = @transform_1, window_bounds = array<i64: 4, 128>}, {pipeline_mode = #tpu.pipeline_mode<synchronous>, transform_indices = @transform_2, window_bounds = array<i64: 1, 128>}, {pipeline_mode = #tpu.pipeline_mode<synchronous>, transform_indices = @transform_3, window_bounds = array<i64: 128, 128>}, {pipeline_mode = #tpu.pipeline_mode<synchronous>, transform_indices = @transform_4, window_bounds = array<i64: 1, 128>}, {pipeline_mode = #tpu.pipeline_mode<synchronous>, transform_indices = @transform_5, window_bounds = array<i64: 128, 128>}, {pipeline_mode = #tpu.pipeline_mode<synchronous>, transform_indices = @transform_6, window_bounds = array<i64: 1, 128>}, {transform_indices = @transform_7, window_bounds = array<i64: 8, 128>}]} {
    %c0 = arith.constant 0 : index
    %c0_0 = arith.constant 0 : index
    %0 = vector.load %arg1[%c0, %c0_0] : memref<8x4xf32, #tpu.memory_space<vmem>>, vector<8x4xf32>
    %c0_1 = arith.constant 0 : index
    %c0_2 = arith.constant 0 : index
    %1 = vector.load %arg2[%c0_1, %c0_2] : memref<4x128xf32, #tpu.memory_space<vmem>>, vector<4x128xf32>
    %c0_3 = arith.constant 0 : index
    %c0_4 = arith.constant 0 : index
    %2 = vector.load %arg3[%c0_3, %c0_4] : memref<1x128xf32, #tpu.memory_space<vmem>>, vector<1x128xf32>
    %cst = arith.constant dense<0.000000e+00> : vector<8x128xf32>
    %3 = tpu.matmul %0, %1, %cst {dimension_numbers = #tpu.dot_dimension_numbers<[1], [0], [0], [1], [0, 0, 1, 1], [], []>, precision = #tpu.contract_precision<fp32>} : vector<8x4xf32>, vector<4x128xf32>, vector<8x128xf32> -> vector<8x128xf32>
    %4 = vector.broadcast %2 : vector<1x128xf32> to vector<8x128xf32>
    %5 = arith.addf %3, %4 : vector<8x128xf32>
    %6 = math.tanh %5 : vector<8x128xf32>
    %c0_5 = arith.constant 0 : index
    %c0_6 = arith.constant 0 : index
    %7 = vector.load %arg4[%c0_5, %c0_6] : memref<128x128xf32, #tpu.memory_space<vmem>>, vector<128x128xf32>
    %c0_7 = arith.constant 0 : index
    %c0_8 = arith.constant 0 : index
    %8 = vector.load %arg5[%c0_7, %c0_8] : memref<1x128xf32, #tpu.memory_space<vmem>>, vector<1x128xf32>
    %cst_9 = arith.constant dense<0.000000e+00> : vector<8x128xf32>
    %9 = tpu.matmul %6, %7, %cst_9 {dimension_numbers = #tpu.dot_dimension_numbers<[1], [0], [0], [1], [0, 0, 1, 1], [], []>, precision = #tpu.contract_precision<fp32>} : vector<8x128xf32>, vector<128x128xf32>, vector<8x128xf32> -> vector<8x128xf32>
    %10 = vector.broadcast %8 : vector<1x128xf32> to vector<8x128xf32>
    %11 = arith.addf %9, %10 : vector<8x128xf32>
    %12 = math.tanh %11 : vector<8x128xf32>
    %c0_10 = arith.constant 0 : index
    %c0_11 = arith.constant 0 : index
    %13 = vector.load %arg6[%c0_10, %c0_11] : memref<128x128xf32, #tpu.memory_space<vmem>>, vector<128x128xf32>
    %c0_12 = arith.constant 0 : index
    %c0_13 = arith.constant 0 : index
    %14 = vector.load %arg7[%c0_12, %c0_13] : memref<1x128xf32, #tpu.memory_space<vmem>>, vector<1x128xf32>
    %cst_14 = arith.constant dense<0.000000e+00> : vector<8x128xf32>
    %15 = tpu.matmul %12, %13, %cst_14 {dimension_numbers = #tpu.dot_dimension_numbers<[1], [0], [0], [1], [0, 0, 1, 1], [], []>, precision = #tpu.contract_precision<fp32>} : vector<8x128xf32>, vector<128x128xf32>, vector<8x128xf32> -> vector<8x128xf32>
    %16 = vector.broadcast %14 : vector<1x128xf32> to vector<8x128xf32>
    %17 = arith.addf %15, %16 : vector<8x128xf32>
    %c0_15 = arith.constant 0 : index
    %c0_16 = arith.constant 0 : index
    %18 = vector.load %arg8[%c0_15, %c0_16] : memref<8x128xf32, #tpu.memory_space<vmem>>, vector<8x128xf32>
    tpu.vector_store %arg8[%c0_15, %c0_16], %17 {strides = array<i32>} : memref<8x128xf32, #tpu.memory_space<vmem>>, vector<8x128xf32>,
    return
  }
  func.func @transform_0(%arg0: i32) -> (i32, i32) {
    %c0_i32 = arith.constant 0 : i32
    %c0_i32_0 = arith.constant 0 : i32
    return %arg0, %c0_i32 : i32, i32
  }
  func.func @transform_1(%arg0: i32) -> (i32, i32) {
    %c0_i32 = arith.constant 0 : i32
    %c0_i32_0 = arith.constant 0 : i32
    %c0_i32_1 = arith.constant 0 : i32
    return %c0_i32, %c0_i32_0 : i32, i32
  }
  func.func @transform_2(%arg0: i32) -> (i32, i32) {
    %c0_i32 = arith.constant 0 : i32
    %c0_i32_0 = arith.constant 0 : i32
    %c0_i32_1 = arith.constant 0 : i32
    return %c0_i32, %c0_i32_0 : i32, i32
  }
  func.func @transform_3(%arg0: i32) -> (i32, i32) {
    %c0_i32 = arith.constant 0 : i32
    %c0_i32_0 = arith.constant 0 : i32
    %c0_i32_1 = arith.constant 0 : i32
    return %c0_i32, %c0_i32_0 : i32, i32
  }
  func.func @transform_4(%arg0: i32) -> (i32, i32) {
    %c0_i32 = arith.constant 0 : i32
    %c0_i32_0 = arith.constant 0 : i32
    %c0_i32_1 = arith.constant 0 : i32
    return %c0_i32, %c0_i32_0 : i32, i32
  }
  func.func @transform_5(%arg0: i32) -> (i32, i32) {
    %c0_i32 = arith.constant 0 : i32
    %c0_i32_0 = arith.constant 0 : i32
    %c0_i32_1 = arith.constant 0 : i32
    return %c0_i32, %c0_i32_0 : i32, i32
  }
  func.func @transform_6(%arg0: i32) -> (i32, i32) {
    %c0_i32 = arith.constant 0 : i32
    %c0_i32_0 = arith.constant 0 : i32
    %c0_i32_1 = arith.constant 0 : i32
    return %c0_i32, %c0_i32_0 : i32, i32
  }
  func.func @transform_7(%arg0: i32) -> (i32, i32) {
    %c0_i32 = arith.constant 0 : i32
    %c0_i32_0 = arith.constant 0 : i32
    return %arg0, %c0_i32 : i32, i32
  }
}

module attributes {stable_mosaic.version = 11 : i64} {
  func.func @_fused_mlp_kernel(%arg0: i32, %arg1: memref<8x4xf32, #tpu.memory_space<vmem>>, %arg2: memref<4x128xf32, #tpu.memory_space<vmem>>, %arg3: memref<1x128xf32, #tpu.memory_space<vmem>>, %arg4: memref<128x128xf32, #tpu.memory_space<vmem>>, %arg5: memref<1x128xf32, #tpu.memory_space<vmem>>, %arg6: memref<128x128xf32, #tpu.memory_space<vmem>>, %arg7: memref<1x128xf32, #tpu.memory_space<vmem>>, %arg8: memref<8x128xf32, #tpu.memory_space<vmem>>) attributes {dimension_semantics = [#tpu.dimension_semantics<parallel>], iteration_bounds = array<i64: 1>, scalar_prefetch = 0 : i64, scratch_operands = 0 : i64, tpu.core_type = #tpu.core_type<tc>, window_params = [{transform_indices = @transform_0, window_bounds = array<i64: 8, 4>}, {pipeline_mode = #tpu.pipeline_mode<synchronous>, transform_indices = @transform_1, window_bounds = array<i64: 4, 128>}, {pipeline_mode = #tpu.pipeline_mode<synchronous>, transform_indices = @transform_2, window_bounds = array<i64: 1, 128>}, {pipeline_mode = #tpu.pipeline_mode<synchronous>, transform_indices = @transform_3, window_bounds = array<i64: 128, 128>}, {pipeline_mode = #tpu.pipeline_mode<synchronous>, transform_indices = @transform_4, window_bounds = array<i64: 1, 128>}, {pipeline_mode = #tpu.pipeline_mode<synchronous>, transform_indices = @transform_5, window_bounds = array<i64: 128, 128>}, {pipeline_mode = #tpu.pipeline_mode<synchronous>, transform_indices = @transform_6, window_bounds = array<i64: 1, 128>}, {transform_indices = @transform_7, window_bounds = array<i64: 8, 128>}]} {
    %c0 = arith.constant 0 : index
    %c0_0 = arith.constant 0 : index
    %0 = vector.load %arg1[%c0, %c0_0] : memref<8x4xf32, #tpu.memory_space<vmem>>, vector<8x4xf32>
    %c0_1 = arith.constant 0 : index
    %c0_2 = arith.constant 0 : index
    %1 = vector.load %arg2[%c0_1, %c0_2] : memref<4x128xf32, #tpu.memory_space<vmem>>, vector<4x128xf32>
    %c0_3 = arith.constant 0 : index
    %c0_4 = arith.constant 0 : index
    %2 = vector.load %arg3[%c0_3, %c0_4] : memref<1x128xf32, #tpu.memory_space<vmem>>, vector<1x128xf32>
    %cst = arith.constant dense<0.000000e+00> : vector<8x128xf32>
    %3 = tpu.matmul %0, %1, %cst {dimension_numbers = #tpu.dot_dimension_numbers<[1], [0], [0], [1], [0, 0, 1, 1], [], []>, precision = #tpu.contract_precision<fp32>} : vector<8x4xf32>, vector<4x128xf32>, vector<8x128xf32> -> vector<8x128xf32>
    %4 = vector.broadcast %2 : vector<1x128xf32> to vector<8x128xf32>
    %5 = arith.addf %3, %4 : vector<8x128xf32>
    %6 = math.tanh %5 : vector<8x128xf32>
    %c0_5 = arith.constant 0 : index
    %c0_6 = arith.constant 0 : index
    %7 = vector.load %arg4[%c0_5, %c0_6] : memref<128x128xf32, #tpu.memory_space<vmem>>, vector<128x128xf32>
    %c0_7 = arith.constant 0 : index
    %c0_8 = arith.constant 0 : index
    %8 = vector.load %arg5[%c0_7, %c0_8] : memref<1x128xf32, #tpu.memory_space<vmem>>, vector<1x128xf32>
    %cst_9 = arith.constant dense<0.000000e+00> : vector<8x128xf32>
    %9 = tpu.matmul %6, %7, %cst_9 {dimension_numbers = #tpu.dot_dimension_numbers<[1], [0], [0], [1], [0, 0, 1, 1], [], []>, precision = #tpu.contract_precision<fp32>} : vector<8x128xf32>, vector<128x128xf32>, vector<8x128xf32> -> vector<8x128xf32>
    %10 = vector.broadcast %8 : vector<1x128xf32> to vector<8x128xf32>
    %11 = arith.addf %9, %10 : vector<8x128xf32>
    %12 = math.tanh %11 : vector<8x128xf32>
    %c0_10 = arith.constant 0 : index
    %c0_11 = arith.constant 0 : index
    %13 = vector.load %arg6[%c0_10, %c0_11] : memref<128x128xf32, #tpu.memory_space<vmem>>, vector<128x128xf32>
    %c0_12 = arith.constant 0 : index
    %c0_13 = arith.constant 0 : index
    %14 = vector.load %arg7[%c0_12, %c0_13] : memref<1x128xf32, #tpu.memory_space<vmem>>, vector<1x128xf32>
    %cst_14 = arith.constant dense<0.000000e+00> : vector<8x128xf32>
    %15 = tpu.matmul %12, %13, %cst_14 {dimension_numbers = #tpu.dot_dimension_numbers<[1], [0], [0], [1], [0, 0, 1, 1], [], []>, precision = #tpu.contract_precision<fp32>} : vector<8x128xf32>, vector<128x128xf32>, vector<8x128xf32> -> vector<8x128xf32>
    %16 = vector.broadcast %14 : vector<1x128xf32> to vector<8x128xf32>
    %17 = arith.addf %15, %16 : vector<8x128xf32>
    %c0_15 = arith.constant 0 : index
    %c0_16 = arith.constant 0 : index
    %18 = vector.load %arg8[%c0_15, %c0_16] : memref<8x128xf32, #tpu.memory_space<vmem>>, vector<8x128xf32>
    tpu.vector_store %arg8[%c0_15, %c0_16], %17 {strides = array<i32>} : memref<8x128xf32, #tpu.memory_space<vmem>>, vector<8x128xf32>,
    return
  }
  func.func @transform_0(%arg0: i32) -> (i32, i32) {
    %c0_i32 = arith.constant 0 : i32
    %c0_i32_0 = arith.constant 0 : i32
    return %arg0, %c0_i32 : i32, i32
  }
  func.func @transform_1(%arg0: i32) -> (i32, i32) {
    %c0_i32 = arith.constant 0 : i32
    %c0_i32_0 = arith.constant 0 : i32
    %c0_i32_1 = arith.constant 0 : i32
    return %c0_i32, %c0_i32_0 : i32, i32
  }
  func.func @transform_2(%arg0: i32) -> (i32, i32) {
    %c0_i32 = arith.constant 0 : i32
    %c0_i32_0 = arith.constant 0 : i32
    %c0_i32_1 = arith.constant 0 : i32
    return %c0_i32, %c0_i32_0 : i32, i32
  }
  func.func @transform_3(%arg0: i32) -> (i32, i32) {
    %c0_i32 = arith.constant 0 : i32
    %c0_i32_0 = arith.constant 0 : i32
    %c0_i32_1 = arith.constant 0 : i32
    return %c0_i32, %c0_i32_0 : i32, i32
  }
  func.func @transform_4(%arg0: i32) -> (i32, i32) {
    %c0_i32 = arith.constant 0 : i32
    %c0_i32_0 = arith.constant 0 : i32
    %c0_i32_1 = arith.constant 0 : i32
    return %c0_i32, %c0_i32_0 : i32, i32
  }
  func.func @transform_5(%arg0: i32) -> (i32, i32) {
    %c0_i32 = arith.constant 0 : i32
    %c0_i32_0 = arith.constant 0 : i32
    %c0_i32_1 = arith.constant 0 : i32
    return %c0_i32, %c0_i32_0 : i32, i32
  }
  func.func @transform_6(%arg0: i32) -> (i32, i32) {
    %c0_i32 = arith.constant 0 : i32
    %c0_i32_0 = arith.constant 0 : i32
    %c0_i32_1 = arith.constant 0 : i32
    return %c0_i32, %c0_i32_0 : i32, i32
  }
  func.func @transform_7(%arg0: i32) -> (i32, i32) {
    %c0_i32 = arith.constant 0 : i32
    %c0_i32_0 = arith.constant 0 : i32
    return %arg0, %c0_i32 : i32, i32
  }
}

</mosaic_0001>

<llo_original>
// kernel: _forward_impl.1
$region0: #{_forward_impl.1}
  #allocation0 [shape = 'u32[]', space=smem, size = 0x4, offset = 0x4, fixed_abs, tag = 'smem constant byte address 0x4 - core index']
  #allocation1 [shape = 'u32[144,128]{1,0:T(1,128)}', space=vmem, size = 0x12000, scoped, tag = 'internal scratch']
  %s0 = inlined_call_operand.vmem [shape: f32[8,4], index: 0, kind: input, shape index: {}]
  %s1 = inlined_call_operand.vmem [shape: f32[4,128], index: 1, kind: input, shape index: {}]
  %s2 = inlined_call_operand.vmem [shape: f32[1,128], index: 2, kind: input, shape index: {}]
  %s3 = inlined_call_operand.hbm [shape: f32[128,128], index: 3, kind: input, shape index: {}]
  %s4 = inlined_call_operand.vmem [shape: f32[1,128], index: 4, kind: input, shape index: {}]
  %s5 = inlined_call_operand.hbm [shape: f32[128,128], index: 5, kind: input, shape index: {}]
  %s6 = inlined_call_operand.vmem [shape: f32[1,128], index: 6, kind: input, shape index: {}]
  %s7 = inlined_call_operand.vmem [shape: f32[8,128], index: 7, kind: output, shape index: {}]
  %s8 = sld [smem:[#allocation0]]
  $region46: #{_forward_impl.1} parent=0
    _
  %s10 = ssub.s32 1, %s8
  %s11 = scalar_select 0, %s10, %s8
  $region1: #{_forward_impl.1} parent=0
    #allocation2 [shape = 'u8[65536]{0}', space=vmem, size = 0x10000, scoped, tag = 'input window, operand 3, single buffered']
    #allocation3 [shape = 's32[1]{0}', space=sflag, size = 0x4, scoped, tag = 'scoped memory for _forward_impl.1']
    #allocation4 [shape = 'u8[65536]{0}', space=vmem, size = 0x10000, scoped, tag = 'input window, operand 5, single buffered']
    #allocation5 [shape = 's32[1]{0}', space=sflag, size = 0x4, scoped, tag = 'scoped memory for _forward_impl.1']
    %12 = vsyncpa [#allocation3], 0
    %13 = vsyncpa [#allocation5], 0
    // Predicated region
    $region2: #{_forward_impl.1} parent=1 // pred_check
      _
    $region3: #{_forward_impl.1} parent=1 // pred_check_branch
      %15 = sbr.rel (0) target = $region5
    $region4: #{_forward_impl.1} parent=1 // pred_region
      _
    $region5: #{_forward_impl.1} parent=1 // pred_fallthru
      _
    // Predicated region
    $region6: #{_forward_impl.1} parent=1 // pred_check
      _
    $region7: #{_forward_impl.1} parent=1 // pred_check_branch
      %17 = sbr.rel (0) target = $region9
    $region8: #{_forward_impl.1} parent=1 // pred_region
      _
    $region9: #{_forward_impl.1} parent=1 // pred_fallthru
      _
    // Predicated region
    $region10: #{_forward_impl.1} parent=1 // pred_check
      _
    $region11: #{_forward_impl.1} parent=1 // pred_check_branch
      %19 = sbr.rel (0) target = $region13
    $region12: #{_forward_impl.1} parent=1 // pred_region
      _
    $region13: #{_forward_impl.1} parent=1 // pred_fallthru
      _
    // Predicated region
    $region14: #{_forward_impl.1} parent=1 // pred_check
      _
    $region15: #{_forward_impl.1} parent=1 // pred_check_branch
      %21 = sbr.rel (0) target = $region17
    $region16: #{_forward_impl.1} parent=1 // pred_region
      %s23 = ssub.s32 2048, 2048
      %24 = vsyncadd [#allocation3], %s23
      %s25 = sshll.u32 [#allocation2], 4
      %s26 = int_to_ptr.vmem [resolvable:$true] %s25
      %31 = dma.hbm_to_vmem [thread:$0]  %s3, 2048, %s26, [#allocation3], 128, 128, 8
    $region17: #{_forward_impl.1} parent=1 // pred_fallthru
      _
    // Predicated region
    $region18: #{_forward_impl.1} parent=1 // pred_check
      _
    $region19: #{_forward_impl.1} parent=1 // pred_check_branch
      %33 = sbr.rel (0) target = $region21
    $region20: #{_forward_impl.1} parent=1 // pred_region
      _
    $region21: #{_forward_impl.1} parent=1 // pred_fallthru
      _
    // Predicated region
    $region22: #{_forward_impl.1} parent=1 // pred_check
      _
    $region23: #{_forward_impl.1} parent=1 // pred_check_branch
      %35 = sbr.rel (0) target = $region25
    $region24: #{_forward_impl.1} parent=1 // pred_region
      %s37 = ssub.s32 2048, 2048
      %38 = vsyncadd [#allocation5], %s37
      %s39 = sshll.u32 [#allocation4], 4
      %s40 = int_to_ptr.vmem [resolvable:$true] %s39
      %45 = dma.hbm_to_vmem [thread:$0]  %s5, 2048, %s40, [#allocation5], 128, 128, 8
    $region25: #{_forward_impl.1} parent=1 // pred_fallthru
      _
    // Predicated region
    $region26: #{_forward_impl.1} parent=1 // pred_check
      _
    $region27: #{_forward_impl.1} parent=1 // pred_check_branch
      %47 = sbr.rel (0) target = $region29
    $region28: #{_forward_impl.1} parent=1 // pred_region
      _
    $region29: #{_forward_impl.1} parent=1 // pred_fallthru
      _
    // Predicated region
    $region30: #{_forward_impl.1} parent=1 // pred_check
      _
    $region31: #{_forward_impl.1} parent=1 // pred_check_branch
      %49 = sbr.rel (0) target = $region33
    $region32: #{_forward_impl.1} parent=1 // pred_region
      %50 = dma.done [#allocation3], 2048
    $region33: #{_forward_impl.1} parent=1 // pred_fallthru
      _
    // Predicated region
    $region34: #{_forward_impl.1} parent=1 // pred_check
      _
    $region35: #{_forward_impl.1} parent=1 // pred_check_branch
      %52 = sbr.rel (0) target = $region37
    $region36: #{_forward_impl.1} parent=1 // pred_region
      %53 = dma.done [#allocation5], 2048
    $region37: #{_forward_impl.1} parent=1 // pred_fallthru
      _
    %v54 = vld [vmem:[%s0] sm:$0xff]
    %v55 = vld [vmem:[%s1] sm:$0xf]
    %v56 = vld [vmem:[%s2] sm:$0x1]
    %v58 = vlaneseq
    %v59 = vshrl.u32 %v58, 7
    %v60 = vsub.s32 0, %v59
    %v61 = vrot.slane %v56, %v60
    %vm63 = vcmask 31744
    %v65 = vsel %vm63, %v54, 0
    %vm67 = vcmask 1043456
    %v69 = vsel %vm67, %v55, 0
    %71 = vmatprep.subr.mxu0 0.0
    %72 = vmatpush1.msra.mxu0 0.0
    %73 = vmatprep.subr.mxu0 0.0
    %74 = vmatpush1.msra.mxu0 0.0
    %75 = vmatprep.subr.mxu0 0.0
    %76 = vmatpush1.msra.mxu0 0.0
    %77 = vmatprep.subr.mxu0 0.0
    %78 = vmatpush1.msra.mxu0 0.0
    %79 = vmatprep.subr.mxu0 0.0
    %80 = vmatpush1.msra.mxu0 0.0
    %81 = vmatprep.subr.mxu0 0.0
    %82 = vmatpush1.msra.mxu0 0.0
    %83 = vmatprep.subr.mxu0 0.0
    %84 = vmatpush1.msra.mxu0 0.0
    %85 = vmatprep.subr.mxu0 0.0
    %86 = vmatpush1.msra.mxu0 0.0
    %87 = vmatprep.subr.mxu0 0.0
    %88 = vmatpush1.msra.mxu0 0.0
    %89 = vmatprep.subr.mxu0 0.0
    %90 = vmatpush1.msra.mxu0 0.0
    %91 = vmatprep.subr.mxu0 0.0
    %92 = vmatpush1.msra.mxu0 0.0
    %93 = vmatprep.subr.mxu0 0.0
    %94 = vmatpush1.msra.mxu0 0.0
    %95 = vmatprep.subr.mxu0 0.0
    %96 = vmatpush1.msra.mxu0 0.0
    %97 = vmatprep.subr.mxu0 0.0
    %98 = vmatpush1.msra.mxu0 0.0
    %99 = vmatprep.subr.mxu0 0.0
    %100 = vmatpush1.msra.mxu0 0.0
    %101 = vmatprep.subr.mxu0 0.0
    %v102 = vand.u32 %v69, 4294901760
    %103 = vmatpush1.msra.mxu0 %v102
    %104 = vmatprep.subr.mxu0 0.0
    %105 = vmatpush2.msra.mxu0 0.0
    %106 = vmatprep.subr.mxu0 0.0
    %107 = vmatpush2.msra.mxu0 0.0
    %108 = vmatprep.subr.mxu0 0.0
    %109 = vmatpush2.msra.mxu0 0.0
    %110 = vmatprep.subr.mxu0 0.0
    %111 = vmatpush2.msra.mxu0 0.0
    %112 = vmatprep.subr.mxu0 0.0
    %113 = vmatpush2.msra.mxu0 0.0
    %114 = vmatprep.subr.mxu0 0.0
    %115 = vmatpush2.msra.mxu0 0.0
    %116 = vmatprep.subr.mxu0 0.0
    %117 = vmatpush2.msra.mxu0 0.0
    %118 = vmatprep.subr.mxu0 0.0
    %119 = vmatpush2.msra.mxu0 0.0
    %120 = vmatprep.subr.mxu0 0.0
    %121 = vmatpush2.msra.mxu0 0.0
    %122 = vmatprep.subr.mxu0 0.0
    %123 = vmatpush2.msra.mxu0 0.0
    %124 = vmatprep.subr.mxu0 0.0
    %125 = vmatpush2.msra.mxu0 0.0
    %126 = vmatprep.subr.mxu0 0.0
    %127 = vmatpush2.msra.mxu0 0.0
    %128 = vmatprep.subr.mxu0 0.0
    %129 = vmatpush2.msra.mxu0 0.0
    %130 = vmatprep.subr.mxu0 0.0
    %131 = vmatpush2.msra.mxu0 0.0
    %132 = vmatprep.subr.mxu0 0.0
    %133 = vmatpush2.msra.mxu0 0.0
    %134 = vmatprep.subr.mxu0 0.0
    %135 = vmatpush2.msra.mxu0 0.0
    %136 = vmatprep.mubr.f32.mxu0 0.0
    %v137 = vand.u32 %v65, 4294901760
    %v138 = vsub.f32 %v65, %v137
    %v139 = vand.u32 %v138, 4294901760
    %v140 = vsub.f32 %v138, %v139
    %v141 = vand.u32 %v140, 4294901760
    %142 = vmatmul.mubr.f32.gmra.mxu0 %v141
    %v143 = vpop.f32.mrf.mxu0
    %v144 = vadd.f32 %v61, %v143
    %v145 = vpop.f32.mrf.mxu0
    %146 = vdwg.mxu0
    %147 = vmatprep.subr.mxu0 0.0
    %148 = vmatpush1.msra.mxu0 0.0
    %149 = vmatprep.subr.mxu0 0.0
    %150 = vmatpush1.msra.mxu0 0.0
    %151 = vmatprep.subr.mxu0 0.0
    %152 = vmatpush1.msra.mxu0 0.0
    %153 = vmatprep.subr.mxu0 0.0
    %154 = vmatpush1.msra.mxu0 0.0
    %155 = vmatprep.subr.mxu0 0.0
    %156 = vmatpush1.msra.mxu0 0.0
    %157 = vmatprep.subr.mxu0 0.0
    %158 = vmatpush1.msra.mxu0 0.0
    %159 = vmatprep.subr.mxu0 0.0
    %160 = vmatpush1.msra.mxu0 0.0
    %161 = vmatprep.subr.mxu0 0.0
    %162 = vmatpush1.msra.mxu0 0.0
    %163 = vmatprep.subr.mxu0 0.0
    %164 = vmatpush1.msra.mxu0 0.0
    %165 = vmatprep.subr.mxu0 0.0
    %166 = vmatpush1.msra.mxu0 0.0
    %167 = vmatprep.subr.mxu0 0.0
    %168 = vmatpush1.msra.mxu0 0.0
    %169 = vmatprep.subr.mxu0 0.0
    %170 = vmatpush1.msra.mxu0 0.0
    %171 = vmatprep.subr.mxu0 0.0
    %172 = vmatpush1.msra.mxu0 0.0
    %173 = vmatprep.subr.mxu0 0.0
    %174 = vmatpush1.msra.mxu0 0.0
    %175 = vmatprep.subr.mxu0 0.0
    %176 = vmatpush1.msra.mxu0 0.0
    %177 = vmatprep.subr.mxu0 0.0
    %v178 = vand.u32 %v69, 4294901760
    %v179 = vsub.f32 %v69, %v178
    %v180 = vand.u32 %v179, 4294901760
    %v181 = vsub.f32 %v179, %v180
    %v182 = vand.u32 %v181, 4294901760
    %183 = vmatpush1.msra.mxu0 %v182
    %184 = vmatprep.subr.mxu0 0.0
    %185 = vmatpush2.msra.mxu0 0.0
    %186 = vmatprep.subr.mxu0 0.0
    %187 = vmatpush2.msra.mxu0 0.0
    %188 = vmatprep.subr.mxu0 0.0
    %189 = vmatpush2.msra.mxu0 0.0
    %190 = vmatprep.subr.mxu0 0.0
    %191 = vmatpush2.msra.mxu0 0.0
    %192 = vmatprep.subr.mxu0 0.0
    %193 = vmatpush2.msra.mxu0 0.0
    %194 = vmatprep.subr.mxu0 0.0
    %195 = vmatpush2.msra.mxu0 0.0
    %196 = vmatprep.subr.mxu0 0.0
    %197 = vmatpush2.msra.mxu0 0.0
    %198 = vmatprep.subr.mxu0 0.0
    %199 = vmatpush2.msra.mxu0 0.0
    %200 = vmatprep.subr.mxu0 0.0
    %201 = vmatpush2.msra.mxu0 0.0
    %202 = vmatprep.subr.mxu0 0.0
    %203 = vmatpush2.msra.mxu0 0.0
    %204 = vmatprep.subr.mxu0 0.0
    %205 = vmatpush2.msra.mxu0 0.0
    %206 = vmatprep.subr.mxu0 0.0
    %207 = vmatpush2.msra.mxu0 0.0
    %208 = vmatprep.subr.mxu0 0.0
    %209 = vmatpush2.msra.mxu0 0.0
    %210 = vmatprep.subr.mxu0 0.0
    %211 = vmatpush2.msra.mxu0 0.0
    %212 = vmatprep.subr.mxu0 0.0
    %213 = vmatpush2.msra.mxu0 0.0
    %214 = vmatprep.subr.mxu0 0.0
    %215 = vmatpush2.msra.mxu0 0.0
    %216 = vmatprep.mubr.f32.mxu0 0.0
    %v217 = vand.u32 %v65, 4294901760
    %218 = vmatmul.mubr.f32.gmra.mxu0 %v217
    %v219 = vpop.f32.mrf.mxu0
    %v220 = vadd.f32 %v144, %v219
    %v221 = vpop.f32.mrf.mxu0
    %222 = vdwg.mxu0
    %223 = vmatprep.subr.mxu0 0.0
    %224 = vmatpush1.msra.mxu0 0.0
    %225 = vmatprep.subr.mxu0 0.0
    %226 = vmatpush1.msra.mxu0 0.0
    %227 = vmatprep.subr.mxu0 0.0
    %228 = vmatpush1.msra.mxu0 0.0
    %229 = vmatprep.subr.mxu0 0.0
    %230 = vmatpush1.msra.mxu0 0.0
    %231 = vmatprep.subr.mxu0 0.0
    %232 = vmatpush1.msra.mxu0 0.0
    %233 = vmatprep.subr.mxu0 0.0
    %234 = vmatpush1.msra.mxu0 0.0
    %235 = vmatprep.subr.mxu0 0.0
    %236 = vmatpush1.msra.mxu0 0.0
    %237 = vmatprep.subr.mxu0 0.0
    %238 = vmatpush1.msra.mxu0 0.0
    %239 = vmatprep.subr.mxu0 0.0
    %240 = vmatpush1.msra.mxu0 0.0
    %241 = vmatprep.subr.mxu0 0.0
    %242 = vmatpush1.msra.mxu0 0.0
    %243 = vmatprep.subr.mxu0 0.0
    %244 = vmatpush1.msra.mxu0 0.0
    %245 = vmatprep.subr.mxu0 0.0
    %246 = vmatpush1.msra.mxu0 0.0
    %247 = vmatprep.subr.mxu0 0.0
    %248 = vmatpush1.msra.mxu0 0.0
    %249 = vmatprep.subr.mxu0 0.0
    %250 = vmatpush1.msra.mxu0 0.0
    %251 = vmatprep.subr.mxu0 0.0
    %252 = vmatpush1.msra.mxu0 0.0
    %253 = vmatprep.subr.mxu0 0.0
    %v254 = vand.u32 %v69, 4294901760
    %v255 = vsub.f32 %v69, %v254
    %256 = vmatpush1.msra.mxu0 %v255
    %257 = vmatprep.subr.mxu0 0.0
    %258 = vmatpush2.msra.mxu0 0.0
    %259 = vmatprep.subr.mxu0 0.0
    %260 = vmatpush2.msra.mxu0 0.0
    %261 = vmatprep.subr.mxu0 0.0
    %262 = vmatpush2.msra.mxu0 0.0
    %263 = vmatprep.subr.mxu0 0.0
    %264 = vmatpush2.msra.mxu0 0.0
    %265 = vmatprep.subr.mxu0 0.0
    %266 = vmatpush2.msra.mxu0 0.0
    %267 = vmatprep.subr.mxu0 0.0
    %268 = vmatpush2.msra.mxu0 0.0
    %269 = vmatprep.subr.mxu0 0.0
    %270 = vmatpush2.msra.mxu0 0.0
    %271 = vmatprep.subr.mxu0 0.0
    %272 = vmatpush2.msra.mxu0 0.0
    %273 = vmatprep.subr.mxu0 0.0
    %274 = vmatpush2.msra.mxu0 0.0
    %275 = vmatprep.subr.mxu0 0.0
    %276 = vmatpush2.msra.mxu0 0.0
    %277 = vmatprep.subr.mxu0 0.0
    %278 = vmatpush2.msra.mxu0 0.0
    %279 = vmatprep.subr.mxu0 0.0
    %280 = vmatpush2.msra.mxu0 0.0
    %281 = vmatprep.subr.mxu0 0.0
    %282 = vmatpush2.msra.mxu0 0.0
    %283 = vmatprep.subr.mxu0 0.0
    %284 = vmatpush2.msra.mxu0 0.0
    %285 = vmatprep.subr.mxu0 0.0
    %286 = vmatpush2.msra.mxu0 0.0
    %287 = vmatprep.subr.mxu0 0.0
    %288 = vmatpush2.msra.mxu0 0.0
    %289 = vmatprep.mubr.f32.mxu0 0.0
    %v290 = vand.u32 %v65, 4294901760
    %v291 = vsub.f32 %v65, %v290
    %292 = vmatmul.mubr.f32.gmra.mxu0 %v291
    %v293 = vpop.f32.mrf.mxu0
    %v294 = vadd.f32 %v220, %v293
    %v295 = vpop.f32.mrf.mxu0
    %296 = vdwg.mxu0
    %297 = vmatprep.subr.mxu0 0.0
    %298 = vmatpush1.msra.mxu0 0.0
    %299 = vmatprep.subr.mxu0 0.0
    %300 = vmatpush1.msra.mxu0 0.0
    %301 = vmatprep.subr.mxu0 0.0
    %302 = vmatpush1.msra.mxu0 0.0
    %303 = vmatprep.subr.mxu0 0.0
    %304 = vmatpush1.msra.mxu0 0.0
    %305 = vmatprep.subr.mxu0 0.0
    %306 = vmatpush1.msra.mxu0 0.0
    %307 = vmatprep.subr.mxu0 0.0
    %308 = vmatpush1.msra.mxu0 0.0
    %309 = vmatprep.subr.mxu0 0.0
    %310 = vmatpush1.msra.mxu0 0.0
    %311 = vmatprep.subr.mxu0 0.0
    %312 = vmatpush1.msra.mxu0 0.0
    %313 = vmatprep.subr.mxu0 0.0
    %314 = vmatpush1.msra.mxu0 0.0
    %315 = vmatprep.subr.mxu0 0.0
    %316 = vmatpush1.msra.mxu0 0.0
    %317 = vmatprep.subr.mxu0 0.0
    %318 = vmatpush1.msra.mxu0 0.0
    %319 = vmatprep.subr.mxu0 0.0
    %320 = vmatpush1.msra.mxu0 0.0
    %321 = vmatprep.subr.mxu0 0.0
    %322 = vmatpush1.msra.mxu0 0.0
    %323 = vmatprep.subr.mxu0 0.0
    %324 = vmatpush1.msra.mxu0 0.0
    %325 = vmatprep.subr.mxu0 0.0
    %326 = vmatpush1.msra.mxu0 0.0
    %327 = vmatprep.subr.mxu0 0.0
    %v328 = vand.u32 %v69, 4294901760
    %329 = vmatpush1.msra.mxu0 %v328
    %330 = vmatprep.subr.mxu0 0.0
    %331 = vmatpush2.msra.mxu0 0.0
    %332 = vmatprep.subr.mxu0 0.0
    %333 = vmatpush2.msra.mxu0 0.0
    %334 = vmatprep.subr.mxu0 0.0
    %335 = vmatpush2.msra.mxu0 0.0
    %336 = vmatprep.subr.mxu0 0.0
    %337 = vmatpush2.msra.mxu0 0.0
    %338 = vmatprep.subr.mxu0 0.0
    %339 = vmatpush2.msra.mxu0 0.0
    %340 = vmatprep.subr.mxu0 0.0
    %341 = vmatpush2.msra.mxu0 0.0
    %342 = vmatprep.subr.mxu0 0.0
    %343 = vmatpush2.msra.mxu0 0.0
    %344 = vmatprep.subr.mxu0 0.0
    %345 = vmatpush2.msra.mxu0 0.0
    %346 = vmatprep.subr.mxu0 0.0
    %347 = vmatpush2.msra.mxu0 0.0
    %348 = vmatprep.subr.mxu0 0.0
    %349 = vmatpush2.msra.mxu0 0.0
    %350 = vmatprep.subr.mxu0 0.0
    %351 = vmatpush2.msra.mxu0 0.0
    %352 = vmatprep.subr.mxu0 0.0
    %353 = vmatpush2.msra.mxu0 0.0
    %354 = vmatprep.subr.mxu0 0.0
    %355 = vmatpush2.msra.mxu0 0.0
    %356 = vmatprep.subr.mxu0 0.0
    %357 = vmatpush2.msra.mxu0 0.0
    %358 = vmatprep.subr.mxu0 0.0
    %359 = vmatpush2.msra.mxu0 0.0
    %360 = vmatprep.subr.mxu0 0.0
    %361 = vmatpush2.msra.mxu0 0.0
    %362 = vmatprep.mubr.f32.mxu0 0.0
    %v363 = vand.u32 %v65, 4294901760
    %v364 = vsub.f32 %v65, %v363
    %v365 = vand.u32 %v364, 4294901760
    %366 = vmatmul.mubr.f32.gmra.mxu0 %v365
    %v367 = vpop.f32.mrf.mxu0
    %v368 = vadd.f32 %v294, %v367
    %v369 = vpop.f32.mrf.mxu0
    %370 = vdwg.mxu0
    %371 = vmatprep.subr.mxu0 0.0
    %372 = vmatpush1.msra.mxu0 0.0
    %373 = vmatprep.subr.mxu0 0.0
    %374 = vmatpush1.msra.mxu0 0.0
    %375 = vmatprep.subr.mxu0 0.0
    %376 = vmatpush1.msra.mxu0 0.0
    %377 = vmatprep.subr.mxu0 0.0
    %378 = vmatpush1.msra.mxu0 0.0
    %379 = vmatprep.subr.mxu0 0.0
    %380 = vmatpush1.msra.mxu0 0.0
    %381 = vmatprep.subr.mxu0 0.0
    %382 = vmatpush1.msra.mxu0 0.0
    %383 = vmatprep.subr.mxu0 0.0
    %384 = vmatpush1.msra.mxu0 0.0
    %385 = vmatprep.subr.mxu0 0.0
    %386 = vmatpush1.msra.mxu0 0.0
    %387 = vmatprep.subr.mxu0 0.0
    %388 = vmatpush1.msra.mxu0 0.0
    %389 = vmatprep.subr.mxu0 0.0
    %390 = vmatpush1.msra.mxu0 0.0
    %391 = vmatprep.subr.mxu0 0.0
    %392 = vmatpush1.msra.mxu0 0.0
    %393 = vmatprep.subr.mxu0 0.0
    %394 = vmatpush1.msra.mxu0 0.0
    %395 = vmatprep.subr.mxu0 0.0
    %396 = vmatpush1.msra.mxu0 0.0
    %397 = vmatprep.subr.mxu0 0.0
    %398 = vmatpush1.msra.mxu0 0.0
    %399 = vmatprep.subr.mxu0 0.0
    %400 = vmatpush1.msra.mxu0 0.0
    %401 = vmatprep.subr.mxu0 0.0
    %v402 = vand.u32 %v69, 4294901760
    %v403 = vsub.f32 %v69, %v402
    %v404 = vand.u32 %v403, 4294901760
    %405 = vmatpush1.msra.mxu0 %v404
    %406 = vmatprep.subr.mxu0 0.0
    %407 = vmatpush2.msra.mxu0 0.0
    %408 = vmatprep.subr.mxu0 0.0
    %409 = vmatpush2.msra.mxu0 0.0
    %410 = vmatprep.subr.mxu0 0.0
    %411 = vmatpush2.msra.mxu0 0.0
    %412 = vmatprep.subr.mxu0 0.0
    %413 = vmatpush2.msra.mxu0 0.0
    %414 = vmatprep.subr.mxu0 0.0
    %415 = vmatpush2.msra.mxu0 0.0
    %416 = vmatprep.subr.mxu0 0.0
    %417 = vmatpush2.msra.mxu0 0.0
    %418 = vmatprep.subr.mxu0 0.0
    %419 = vmatpush2.msra.mxu0 0.0
    %420 = vmatprep.subr.mxu0 0.0
    %421 = vmatpush2.msra.mxu0 0.0
    %422 = vmatprep.subr.mxu0 0.0
    %423 = vmatpush2.msra.mxu0 0.0
    %424 = vmatprep.subr.mxu0 0.0
    %425 = vmatpush2.msra.mxu0 0.0
    %426 = vmatprep.subr.mxu0 0.0
    %427 = vmatpush2.msra.mxu0 0.0
    %428 = vmatprep.subr.mxu0 0.0
    %429 = vmatpush2.msra.mxu0 0.0
    %430 = vmatprep.subr.mxu0 0.0
    %431 = vmatpush2.msra.mxu0 0.0
    %432 = vmatprep.subr.mxu0 0.0
    %433 = vmatpush2.msra.mxu0 0.0
    %434 = vmatprep.subr.mxu0 0.0
    %435 = vmatpush2.msra.mxu0 0.0
    %436 = vmatprep.subr.mxu0 0.0
    %437 = vmatpush2.msra.mxu0 0.0
    %438 = vmatprep.mubr.f32.mxu0 0.0
    %v439 = vand.u32 %v65, 4294901760
    %440 = vmatmul.mubr.f32.gmra.mxu0 %v439
    %v441 = vpop.f32.mrf.mxu0
    %v442 = vadd.f32 %v368, %v441
    %v443 = vpop.f32.mrf.mxu0
    %444 = vdwg.mxu0
    %445 = vmatprep.subr.mxu0 0.0
    %446 = vmatpush1.msra.mxu0 0.0
    %447 = vmatprep.subr.mxu0 0.0
    %448 = vmatpush1.msra.mxu0 0.0
    %449 = vmatprep.subr.mxu0 0.0
    %450 = vmatpush1.msra.mxu0 0.0
    %451 = vmatprep.subr.mxu0 0.0
    %452 = vmatpush1.msra.mxu0 0.0
    %453 = vmatprep.subr.mxu0 0.0
    %454 = vmatpush1.msra.mxu0 0.0
    %455 = vmatprep.subr.mxu0 0.0
    %456 = vmatpush1.msra.mxu0 0.0
    %457 = vmatprep.subr.mxu0 0.0
    %458 = vmatpush1.msra.mxu0 0.0
    %459 = vmatprep.subr.mxu0 0.0
    %460 = vmatpush1.msra.mxu0 0.0
    %461 = vmatprep.subr.mxu0 0.0
    %462 = vmatpush1.msra.mxu0 0.0
    %463 = vmatprep.subr.mxu0 0.0
    %464 = vmatpush1.msra.mxu0 0.0
    %465 = vmatprep.subr.mxu0 0.0
    %466 = vmatpush1.msra.mxu0 0.0
    %467 = vmatprep.subr.mxu0 0.0
    %468 = vmatpush1.msra.mxu0 0.0
    %469 = vmatprep.subr.mxu0 0.0
    %470 = vmatpush1.msra.mxu0 0.0
    %471 = vmatprep.subr.mxu0 0.0
    %472 = vmatpush1.msra.mxu0 0.0
    %473 = vmatprep.subr.mxu0 0.0
    %474 = vmatpush1.msra.mxu0 0.0
    %475 = vmatprep.subr.mxu0 0.0
    %v476 = vand.u32 %v69, 4294901760
    %477 = vmatpush1.msra.mxu0 %v476
    %478 = vmatprep.subr.mxu0 0.0
    %479 = vmatpush2.msra.mxu0 0.0
    %480 = vmatprep.subr.mxu0 0.0
    %481 = vmatpush2.msra.mxu0 0.0
    %482 = vmatprep.subr.mxu0 0.0
    %483 = vmatpush2.msra.mxu0 0.0
    %484 = vmatprep.subr.mxu0 0.0
    %485 = vmatpush2.msra.mxu0 0.0
    %486 = vmatprep.subr.mxu0 0.0
    %487 = vmatpush2.msra.mxu0 0.0
    %488 = vmatprep.subr.mxu0 0.0
    %489 = vmatpush2.msra.mxu0 0.0
    %490 = vmatprep.subr.mxu0 0.0
    %491 = vmatpush2.msra.mxu0 0.0
    %492 = vmatprep.subr.mxu0 0.0
    %493 = vmatpush2.msra.mxu0 0.0
    %494 = vmatprep.subr.mxu0 0.0
    %495 = vmatpush2.msra.mxu0 0.0
    %496 = vmatprep.subr.mxu0 0.0
    %497 = vmatpush2.msra.mxu0 0.0
    %498 = vmatprep.subr.mxu0 0.0
    %499 = vmatpush2.msra.mxu0 0.0
    %500 = vmatprep.subr.mxu0 0.0
    %501 = vmatpush2.msra.mxu0 0.0
    %502 = vmatprep.subr.mxu0 0.0
    %503 = vmatpush2.msra.mxu0 0.0
    %504 = vmatprep.subr.mxu0 0.0
    %505 = vmatpush2.msra.mxu0 0.0
    %506 = vmatprep.subr.mxu0 0.0
    %507 = vmatpush2.msra.mxu0 0.0
    %508 = vmatprep.subr.mxu0 0.0
    %509 = vmatpush2.msra.mxu0 0.0
    %510 = vmatprep.mubr.f32.mxu0 0.0
    %v511 = vand.u32 %v65, 4294901760
    %512 = vmatmul.mubr.f32.gmra.mxu0 %v511
    %v513 = vpop.f32.mrf.mxu0
    %v514 = vadd.f32 %v442, %v513
    %v515 = vpop.f32.mrf.mxu0
    %516 = vdwg.mxu0
    %v517 = vtanh.pop %v514
    %v518 = vld [vmem:[#allocation2] sm:$0xff]
    %v519 = vld [vmem:[#allocation2 + $0x8] sm:$0xff]
    %v520 = vld [vmem:[#allocation2 + $0x10] sm:$0xff]
    %v521 = vld [vmem:[#allocation2 + $0x18] sm:$0xff]
    %v522 = vld [vmem:[#allocation2 + $0x20] sm:$0xff]
    %v523 = vld [vmem:[#allocation2 + $0x28] sm:$0xff]
    %v524 = vld [vmem:[#allocation2 + $0x30] sm:$0xff]
    %v525 = vld [vmem:[#allocation2 + $0x38] sm:$0xff]
    %v526 = vld [vmem:[#allocation2 + $0x40] sm:$0xff]
    %v527 = vld [vmem:[#allocation2 + $0x48] sm:$0xff]
    %v528 = vld [vmem:[#allocation2 + $0x50] sm:$0xff]
    %v529 = vld [vmem:[#allocation2 + $0x58] sm:$0xff]
    %v530 = vld [vmem:[#allocation2 + $0x60] sm:$0xff]
    %v531 = vld [vmem:[#allocation2 + $0x68] sm:$0xff]
    %v532 = vld [vmem:[#allocation2 + $0x70] sm:$0xff]
    %v533 = vld [vmem:[#allocation2 + $0x78] sm:$0xff]
    %v534 = vld [vmem:[%s4] sm:$0x1]
    %v536 = vlaneseq
    %v537 = vshrl.u32 %v536, 7
    %v538 = vsub.s32 0, %v537
    %v539 = vrot.slane %v534, %v538
    %541 = vmatprep.subr.mxu0 0.0
    %v542 = vand.u32 %v533, 4294901760
    %543 = vmatpush1.msra.mxu0 %v542
    %544 = vmatprep.subr.mxu0 0.0
    %v545 = vand.u32 %v532, 4294901760
    %546 = vmatpush1.msra.mxu0 %v545
    %547 = vmatprep.subr.mxu0 0.0
    %v548 = vand.u32 %v531, 4294901760
    %549 = vmatpush1.msra.mxu0 %v548
    %550 = vmatprep.subr.mxu0 0.0
    %v551 = vand.u32 %v530, 4294901760
    %552 = vmatpush1.msra.mxu0 %v551
    %553 = vmatprep.subr.mxu0 0.0
    %v554 = vand.u32 %v529, 4294901760
    %555 = vmatpush1.msra.mxu0 %v554
    %556 = vmatprep.subr.mxu0 0.0
    %v557 = vand.u32 %v528, 4294901760
    %558 = vmatpush1.msra.mxu0 %v557
    %559 = vmatprep.subr.mxu0 0.0
    %v560 = vand.u32 %v527, 4294901760
    %561 = vmatpush1.msra.mxu0 %v560
    %562 = vmatprep.subr.mxu0 0.0
    %v563 = vand.u32 %v526, 4294901760
    %564 = vmatpush1.msra.mxu0 %v563
    %565 = vmatprep.subr.mxu0 0.0
    %v566 = vand.u32 %v525, 4294901760
    %567 = vmatpush1.msra.mxu0 %v566
    %568 = vmatprep.subr.mxu0 0.0
    %v569 = vand.u32 %v524, 4294901760
    %570 = vmatpush1.msra.mxu0 %v569
    %571 = vmatprep.subr.mxu0 0.0
    %v572 = vand.u32 %v523, 4294901760
    %573 = vmatpush1.msra.mxu0 %v572
    %574 = vmatprep.subr.mxu0 0.0
    %v575 = vand.u32 %v522, 4294901760
    %576 = vmatpush1.msra.mxu0 %v575
    %577 = vmatprep.subr.mxu0 0.0
    %v578 = vand.u32 %v521, 4294901760
    %579 = vmatpush1.msra.mxu0 %v578
    %580 = vmatprep.subr.mxu0 0.0
    %v581 = vand.u32 %v520, 4294901760
    %582 = vmatpush1.msra.mxu0 %v581
    %583 = vmatprep.subr.mxu0 0.0
    %v584 = vand.u32 %v519, 4294901760
    %585 = vmatpush1.msra.mxu0 %v584
    %586 = vmatprep.subr.mxu0 0.0
    %v587 = vand.u32 %v518, 4294901760
    %588 = vmatpush1.msra.mxu0 %v587
    %589 = vmatprep.subr.mxu0 0.0
    %590 = vmatpush2.msra.mxu0 0.0
    %591 = vmatprep.subr.mxu0 0.0
    %592 = vmatpush2.msra.mxu0 0.0
    %593 = vmatprep.subr.mxu0 0.0
    %594 = vmatpush2.msra.mxu0 0.0
    %595 = vmatprep.subr.mxu0 0.0
    %596 = vmatpush2.msra.mxu0 0.0
    %597 = vmatprep.subr.mxu0 0.0
    %598 = vmatpush2.msra.mxu0 0.0
    %599 = vmatprep.subr.mxu0 0.0
    %600 = vmatpush2.msra.mxu0 0.0
    %601 = vmatprep.subr.mxu0 0.0
    %602 = vmatpush2.msra.mxu0 0.0
    %603 = vmatprep.subr.mxu0 0.0
    %604 = vmatpush2.msra.mxu0 0.0
    %605 = vmatprep.subr.mxu0 0.0
    %606 = vmatpush2.msra.mxu0 0.0
    %607 = vmatprep.subr.mxu0 0.0
    %608 = vmatpush2.msra.mxu0 0.0
    %609 = vmatprep.subr.mxu0 0.0
    %610 = vmatpush2.msra.mxu0 0.0
    %611 = vmatprep.subr.mxu0 0.0
    %612 = vmatpush2.msra.mxu0 0.0
    %613 = vmatprep.subr.mxu0 0.0
    %614 = vmatpush2.msra.mxu0 0.0
    %615 = vmatprep.subr.mxu0 0.0
    %616 = vmatpush2.msra.mxu0 0.0
    %617 = vmatprep.subr.mxu0 0.0
    %618 = vmatpush2.msra.mxu0 0.0
    %619 = vmatprep.subr.mxu0 0.0
    %620 = vmatpush2.msra.mxu0 0.0
    %621 = vmatprep.mubr.f32.mxu0 0.0
    %v622 = vand.u32 %v517, 4294901760
    %v623 = vsub.f32 %v517, %v622
    %v624 = vand.u32 %v623, 4294901760
    %v625 = vsub.f32 %v623, %v624
    %v626 = vand.u32 %v625, 4294901760
    %627 = vmatmul.mubr.f32.gmra.mxu0 %v626
    %v628 = vpop.f32.mrf.mxu0
    %v629 = vadd.f32 %v539, %v628
    %v630 = vpop.f32.mrf.mxu0
    %631 = vdwg.mxu0
    %632 = vmatprep.subr.mxu0 0.0
    %v633 = vand.u32 %v533, 4294901760
    %v634 = vsub.f32 %v533, %v633
    %v635 = vand.u32 %v634, 4294901760
    %v636 = vsub.f32 %v634, %v635
    %v637 = vand.u32 %v636, 4294901760
    %638 = vmatpush1.msra.mxu0 %v637
    %639 = vmatprep.subr.mxu0 0.0
    %v640 = vand.u32 %v532, 4294901760
    %v641 = vsub.f32 %v532, %v640
    %v642 = vand.u32 %v641, 4294901760
    %v643 = vsub.f32 %v641, %v642
    %v644 = vand.u32 %v643, 4294901760
    %645 = vmatpush1.msra.mxu0 %v644
    %646 = vmatprep.subr.mxu0 0.0
    %v647 = vand.u32 %v531, 4294901760
    %v648 = vsub.f32 %v531, %v647
    %v649 = vand.u32 %v648, 4294901760
    %v650 = vsub.f32 %v648, %v649
    %v651 = vand.u32 %v650, 4294901760
    %652 = vmatpush1.msra.mxu0 %v651
    %653 = vmatprep.subr.mxu0 0.0
    %v654 = vand.u32 %v530, 4294901760
    %v655 = vsub.f32 %v530, %v654
    %v656 = vand.u32 %v655, 4294901760
    %v657 = vsub.f32 %v655, %v656
    %v658 = vand.u32 %v657, 4294901760
    %659 = vmatpush1.msra.mxu0 %v658
    %660 = vmatprep.subr.mxu0 0.0
    %v661 = vand.u32 %v529, 4294901760
    %v662 = vsub.f32 %v529, %v661
    %v663 = vand.u32 %v662, 4294901760
    %v664 = vsub.f32 %v662, %v663
    %v665 = vand.u32 %v664, 4294901760
    %666 = vmatpush1.msra.mxu0 %v665
    %667 = vmatprep.subr.mxu0 0.0
    %v668 = vand.u32 %v528, 4294901760
    %v669 = vsub.f32 %v528, %v668
    %v670 = vand.u32 %v669, 4294901760
    %v671 = vsub.f32 %v669, %v670
    %v672 = vand.u32 %v671, 4294901760
    %673 = vmatpush1.msra.mxu0 %v672
    %674 = vmatprep.subr.mxu0 0.0
    %v675 = vand.u32 %v527, 4294901760
    %v676 = vsub.f32 %v527, %v675
    %v677 = vand.u32 %v676, 4294901760
    %v678 = vsub.f32 %v676, %v677
    %v679 = vand.u32 %v678, 4294901760
    %680 = vmatpush1.msra.mxu0 %v679
    %681 = vmatprep.subr.mxu0 0.0
    %v682 = vand.u32 %v526, 4294901760
    %v683 = vsub.f32 %v526, %v682
    %v684 = vand.u32 %v683, 4294901760
    %v685 = vsub.f32 %v683, %v684
    %v686 = vand.u32 %v685, 4294901760
    %687 = vmatpush1.msra.mxu0 %v686
    %688 = vmatprep.subr.mxu0 0.0
    %v689 = vand.u32 %v525, 4294901760
    %v690 = vsub.f32 %v525, %v689
    %v691 = vand.u32 %v690, 4294901760
    %v692 = vsub.f32 %v690, %v691
    %v693 = vand.u32 %v692, 4294901760
    %694 = vmatpush1.msra.mxu0 %v693
    %695 = vmatprep.subr.mxu0 0.0
    %v696 = vand.u32 %v524, 4294901760
    %v697 = vsub.f32 %v524, %v696
    %v698 = vand.u32 %v697, 4294901760
    %v699 = vsub.f32 %v697, %v698
    %v700 = vand.u32 %v699, 4294901760
    %701 = vmatpush1.msra.mxu0 %v700
    %702 = vmatprep.subr.mxu0 0.0
    %v703 = vand.u32 %v523, 4294901760
    %v704 = vsub.f32 %v523, %v703
    %v705 = vand.u32 %v704, 4294901760
    %v706 = vsub.f32 %v704, %v705
    %v707 = vand.u32 %v706, 4294901760
    %708 = vmatpush1.msra.mxu0 %v707
    %709 = vmatprep.subr.mxu0 0.0
    %v710 = vand.u32 %v522, 4294901760
    %v711 = vsub.f32 %v522, %v710
    %v712 = vand.u32 %v711, 4294901760
    %v713 = vsub.f32 %v711, %v712
    %v714 = vand.u32 %v713, 4294901760
    %715 = vmatpush1.msra.mxu0 %v714
    %716 = vmatprep.subr.mxu0 0.0
    %v717 = vand.u32 %v521, 4294901760
    %v718 = vsub.f32 %v521, %v717
    %v719 = vand.u32 %v718, 4294901760
    %v720 = vsub.f32 %v718, %v719
    %v721 = vand.u32 %v720, 4294901760
    %722 = vmatpush1.msra.mxu0 %v721
    %723 = vmatprep.subr.mxu0 0.0
    %v724 = vand.u32 %v520, 4294901760
    %v725 = vsub.f32 %v520, %v724
    %v726 = vand.u32 %v725, 4294901760
    %v727 = vsub.f32 %v725, %v726
    %v728 = vand.u32 %v727, 4294901760
    %729 = vmatpush1.msra.mxu0 %v728
    %730 = vmatprep.subr.mxu0 0.0
    %v731 = vand.u32 %v519, 4294901760
    %v732 = vsub.f32 %v519, %v731
    %v733 = vand.u32 %v732, 4294901760
    %v734 = vsub.f32 %v732, %v733
    %v735 = vand.u32 %v734, 4294901760
    %736 = vmatpush1.msra.mxu0 %v735
    %737 = vmatprep.subr.mxu0 0.0
    %v738 = vand.u32 %v518, 4294901760
    %v739 = vsub.f32 %v518, %v738
    %v740 = vand.u32 %v739, 4294901760
    %v741 = vsub.f32 %v739, %v740
    %v742 = vand.u32 %v741, 4294901760
    %743 = vmatpush1.msra.mxu0 %v742
    %744 = vmatprep.subr.mxu0 0.0
    %745 = vmatpush2.msra.mxu0 0.0
    %746 = vmatprep.subr.mxu0 0.0
    %747 = vmatpush2.msra.mxu0 0.0
    %748 = vmatprep.subr.mxu0 0.0
    %749 = vmatpush2.msra.mxu0 0.0
    %750 = vmatprep.subr.mxu0 0.0
    %751 = vmatpush2.msra.mxu0 0.0
    %752 = vmatprep.subr.mxu0 0.0
    %753 = vmatpush2.msra.mxu0 0.0
    %754 = vmatprep.subr.mxu0 0.0
    %755 = vmatpush2.msra.mxu0 0.0
    %756 = vmatprep.subr.mxu0 0.0
    %757 = vmatpush2.msra.mxu0 0.0
    %758 = vmatprep.subr.mxu0 0.0
    %759 = vmatpush2.msra.mxu0 0.0
    %760 = vmatprep.subr.mxu0 0.0
    %761 = vmatpush2.msra.mxu0 0.0
    %762 = vmatprep.subr.mxu0 0.0
    %763 = vmatpush2.msra.mxu0 0.0
    %764 = vmatprep.subr.mxu0 0.0
    %765 = vmatpush2.msra.mxu0 0.0
    %766 = vmatprep.subr.mxu0 0.0
    %767 = vmatpush2.msra.mxu0 0.0
    %768 = vmatprep.subr.mxu0 0.0
    %769 = vmatpush2.msra.mxu0 0.0
    %770 = vmatprep.subr.mxu0 0.0
    %771 = vmatpush2.msra.mxu0 0.0
    %772 = vmatprep.subr.mxu0 0.0
    %773 = vmatpush2.msra.mxu0 0.0
    %774 = vmatprep.subr.mxu0 0.0
    %775 = vmatpush2.msra.mxu0 0.0
    %776 = vmatprep.mubr.f32.mxu0 0.0
    %v777 = vand.u32 %v517, 4294901760
    %778 = vmatmul.mubr.f32.gmra.mxu0 %v777
    %v779 = vpop.f32.mrf.mxu0
    %v780 = vadd.f32 %v629, %v779
    %v781 = vpop.f32.mrf.mxu0
    %782 = vdwg.mxu0
    %783 = vmatprep.subr.mxu0 0.0
    %v784 = vand.u32 %v533, 4294901760
    %v785 = vsub.f32 %v533, %v784
    %786 = vmatpush1.msra.mxu0 %v785
    %787 = vmatprep.subr.mxu0 0.0
    %v788 = vand.u32 %v532, 4294901760
    %v789 = vsub.f32 %v532, %v788
    %790 = vmatpush1.msra.mxu0 %v789
    %791 = vmatprep.subr.mxu0 0.0
    %v792 = vand.u32 %v531, 4294901760
    %v793 = vsub.f32 %v531, %v792
    %794 = vmatpush1.msra.mxu0 %v793
    %795 = vmatprep.subr.mxu0 0.0
    %v796 = vand.u32 %v530, 4294901760
    %v797 = vsub.f32 %v530, %v796
    %798 = vmatpush1.msra.mxu0 %v797
    %799 = vmatprep.subr.mxu0 0.0
    %v800 = vand.u32 %v529, 4294901760
    %v801 = vsub.f32 %v529, %v800
    %802 = vmatpush1.msra.mxu0 %v801
    %803 = vmatprep.subr.mxu0 0.0
    %v804 = vand.u32 %v528, 4294901760
    %v805 = vsub.f32 %v528, %v804
    %806 = vmatpush1.msra.mxu0 %v805
    %807 = vmatprep.subr.mxu0 0.0
    %v808 = vand.u32 %v527, 4294901760
    %v809 = vsub.f32 %v527, %v808
    %810 = vmatpush1.msra.mxu0 %v809
    %811 = vmatprep.subr.mxu0 0.0
    %v812 = vand.u32 %v526, 4294901760
    %v813 = vsub.f32 %v526, %v812
    %814 = vmatpush1.msra.mxu0 %v813
    %815 = vmatprep.subr.mxu0 0.0
    %v816 = vand.u32 %v525, 4294901760
    %v817 = vsub.f32 %v525, %v816
    %818 = vmatpush1.msra.mxu0 %v817
    %819 = vmatprep.subr.mxu0 0.0
    %v820 = vand.u32 %v524, 4294901760
    %v821 = vsub.f32 %v524, %v820
    %822 = vmatpush1.msra.mxu0 %v821
    %823 = vmatprep.subr.mxu0 0.0
    %v824 = vand.u32 %v523, 4294901760
    %v825 = vsub.f32 %v523, %v824
    %826 = vmatpush1.msra.mxu0 %v825
    %827 = vmatprep.subr.mxu0 0.0
    %v828 = vand.u32 %v522, 4294901760
    %v829 = vsub.f32 %v522, %v828
    %830 = vmatpush1.msra.mxu0 %v829
    %831 = vmatprep.subr.mxu0 0.0
    %v832 = vand.u32 %v521, 4294901760
    %v833 = vsub.f32 %v521, %v832
    %834 = vmatpush1.msra.mxu0 %v833
    %835 = vmatprep.subr.mxu0 0.0
    %v836 = vand.u32 %v520, 4294901760
    %v837 = vsub.f32 %v520, %v836
    %838 = vmatpush1.msra.mxu0 %v837
    %839 = vmatprep.subr.mxu0 0.0
    %v840 = vand.u32 %v519, 4294901760
    %v841 = vsub.f32 %v519, %v840
    %842 = vmatpush1.msra.mxu0 %v841
    %843 = vmatprep.subr.mxu0 0.0
    %v844 = vand.u32 %v518, 4294901760
    %v845 = vsub.f32 %v518, %v844
    %846 = vmatpush1.msra.mxu0 %v845
    %847 = vmatprep.subr.mxu0 0.0
    %848 = vmatpush2.msra.mxu0 0.0
    %849 = vmatprep.subr.mxu0 0.0
    %850 = vmatpush2.msra.mxu0 0.0
    %851 = vmatprep.subr.mxu0 0.0
    %852 = vmatpush2.msra.mxu0 0.0
    %853 = vmatprep.subr.mxu0 0.0
    %854 = vmatpush2.msra.mxu0 0.0
    %855 = vmatprep.subr.mxu0 0.0
    %856 = vmatpush2.msra.mxu0 0.0
    %857 = vmatprep.subr.mxu0 0.0
    %858 = vmatpush2.msra.mxu0 0.0
    %859 = vmatprep.subr.mxu0 0.0
    %860 = vmatpush2.msra.mxu0 0.0
    %861 = vmatprep.subr.mxu0 0.0
    %862 = vmatpush2.msra.mxu0 0.0
    %863 = vmatprep.subr.mxu0 0.0
    %864 = vmatpush2.msra.mxu0 0.0
    %865 = vmatprep.subr.mxu0 0.0
    %866 = vmatpush2.msra.mxu0 0.0
    %867 = vmatprep.subr.mxu0 0.0
    %868 = vmatpush2.msra.mxu0 0.0
    %869 = vmatprep.subr.mxu0 0.0
    %870 = vmatpush2.msra.mxu0 0.0
    %871 = vmatprep.subr.mxu0 0.0
    %872 = vmatpush2.msra.mxu0 0.0
    %873 = vmatprep.subr.mxu0 0.0
    %874 = vmatpush2.msra.mxu0 0.0
    %875 = vmatprep.subr.mxu0 0.0
    %876 = vmatpush2.msra.mxu0 0.0
    %877 = vmatprep.subr.mxu0 0.0
    %878 = vmatpush2.msra.mxu0 0.0
    %879 = vmatprep.mubr.f32.mxu0 0.0
    %v880 = vand.u32 %v517, 4294901760
    %v881 = vsub.f32 %v517, %v880
    %882 = vmatmul.mubr.f32.gmra.mxu0 %v881
    %v883 = vpop.f32.mrf.mxu0
    %v884 = vadd.f32 %v780, %v883
    %v885 = vpop.f32.mrf.mxu0
    %886 = vdwg.mxu0
    %887 = vmatprep.subr.mxu0 0.0
    %v888 = vand.u32 %v533, 4294901760
    %889 = vmatpush1.msra.mxu0 %v888
    %890 = vmatprep.subr.mxu0 0.0
    %v891 = vand.u32 %v532, 4294901760
    %892 = vmatpush1.msra.mxu0 %v891
    %893 = vmatprep.subr.mxu0 0.0
    %v894 = vand.u32 %v531, 4294901760
    %895 = vmatpush1.msra.mxu0 %v894
    %896 = vmatprep.subr.mxu0 0.0
    %v897 = vand.u32 %v530, 4294901760
    %898 = vmatpush1.msra.mxu0 %v897
    %899 = vmatprep.subr.mxu0 0.0
    %v900 = vand.u32 %v529, 4294901760
    %901 = vmatpush1.msra.mxu0 %v900
    %902 = vmatprep.subr.mxu0 0.0
    %v903 = vand.u32 %v528, 4294901760
    %904 = vmatpush1.msra.mxu0 %v903
    %905 = vmatprep.subr.mxu0 0.0
    %v906 = vand.u32 %v527, 4294901760
    %907 = vmatpush1.msra.mxu0 %v906
    %908 = vmatprep.subr.mxu0 0.0
    %v909 = vand.u32 %v526, 4294901760
    %910 = vmatpush1.msra.mxu0 %v909
    %911 = vmatprep.subr.mxu0 0.0
    %v912 = vand.u32 %v525, 4294901760
    %913 = vmatpush1.msra.mxu0 %v912
    %914 = vmatprep.subr.mxu0 0.0
    %v915 = vand.u32 %v524, 4294901760
    %916 = vmatpush1.msra.mxu0 %v915
    %917 = vmatprep.subr.mxu0 0.0
    %v918 = vand.u32 %v523, 4294901760
    %919 = vmatpush1.msra.mxu0 %v918
    %920 = vmatprep.subr.mxu0 0.0
    %v921 = vand.u32 %v522, 4294901760
    %922 = vmatpush1.msra.mxu0 %v921
    %923 = vmatprep.subr.mxu0 0.0
    %v924 = vand.u32 %v521, 4294901760
    %925 = vmatpush1.msra.mxu0 %v924
    %926 = vmatprep.subr.mxu0 0.0
    %v927 = vand.u32 %v520, 4294901760
    %928 = vmatpush1.msra.mxu0 %v927
    %929 = vmatprep.subr.mxu0 0.0
    %v930 = vand.u32 %v519, 4294901760
    %931 = vmatpush1.msra.mxu0 %v930
    %932 = vmatprep.subr.mxu0 0.0
    %v933 = vand.u32 %v518, 4294901760
    %934 = vmatpush1.msra.mxu0 %v933
    %935 = vmatprep.subr.mxu0 0.0
    %936 = vmatpush2.msra.mxu0 0.0
    %937 = vmatprep.subr.mxu0 0.0
    %938 = vmatpush2.msra.mxu0 0.0
    %939 = vmatprep.subr.mxu0 0.0
    %940 = vmatpush2.msra.mxu0 0.0
    %941 = vmatprep.subr.mxu0 0.0
    %942 = vmatpush2.msra.mxu0 0.0
    %943 = vmatprep.subr.mxu0 0.0
    %944 = vmatpush2.msra.mxu0 0.0
    %945 = vmatprep.subr.mxu0 0.0
    %946 = vmatpush2.msra.mxu0 0.0
    %947 = vmatprep.subr.mxu0 0.0
    %948 = vmatpush2.msra.mxu0 0.0
    %949 = vmatprep.subr.mxu0 0.0
    %950 = vmatpush2.msra.mxu0 0.0
    %951 = vmatprep.subr.mxu0 0.0
    %952 = vmatpush2.msra.mxu0 0.0
    %953 = vmatprep.subr.mxu0 0.0
    %954 = vmatpush2.msra.mxu0 0.0
    %955 = vmatprep.subr.mxu0 0.0
    %956 = vmatpush2.msra.mxu0 0.0
    %957 = vmatprep.subr.mxu0 0.0
    %958 = vmatpush2.msra.mxu0 0.0
    %959 = vmatprep.subr.mxu0 0.0
    %960 = vmatpush2.msra.mxu0 0.0
    %961 = vmatprep.subr.mxu0 0.0
    %962 = vmatpush2.msra.mxu0 0.0
    %963 = vmatprep.subr.mxu0 0.0
    %964 = vmatpush2.msra.mxu0 0.0
    %965 = vmatprep.subr.mxu0 0.0
    %966 = vmatpush2.msra.mxu0 0.0
    %967 = vmatprep.mubr.f32.mxu0 0.0
    %v968 = vand.u32 %v517, 4294901760
    %v969 = vsub.f32 %v517, %v968
    %v970 = vand.u32 %v969, 4294901760
    %971 = vmatmul.mubr.f32.gmra.mxu0 %v970
    %v972 = vpop.f32.mrf.mxu0
    %v973 = vadd.f32 %v884, %v972
    %v974 = vpop.f32.mrf.mxu0
    %975 = vdwg.mxu0
    %976 = vmatprep.subr.mxu0 0.0
    %v977 = vand.u32 %v533, 4294901760
    %v978 = vsub.f32 %v533, %v977
    %v979 = vand.u32 %v978, 4294901760
    %980 = vmatpush1.msra.mxu0 %v979
    %981 = vmatprep.subr.mxu0 0.0
    %v982 = vand.u32 %v532, 4294901760
    %v983 = vsub.f32 %v532, %v982
    %v984 = vand.u32 %v983, 4294901760
    %985 = vmatpush1.msra.mxu0 %v984
    %986 = vmatprep.subr.mxu0 0.0
    %v987 = vand.u32 %v531, 4294901760
    %v988 = vsub.f32 %v531, %v987
    %v989 = vand.u32 %v988, 4294901760
    %990 = vmatpush1.msra.mxu0 %v989
    %991 = vmatprep.subr.mxu0 0.0
    %v992 = vand.u32 %v530, 4294901760
    %v993 = vsub.f32 %v530, %v992
    %v994 = vand.u32 %v993, 4294901760
    %995 = vmatpush1.msra.mxu0 %v994
    %996 = vmatprep.subr.mxu0 0.0
    %v997 = vand.u32 %v529, 4294901760
    %v998 = vsub.f32 %v529, %v997
    %v999 = vand.u32 %v998, 4294901760
    %1000 = vmatpush1.msra.mxu0 %v999
    %1001 = vmatprep.subr.mxu0 0.0
    %v1002 = vand.u32 %v528, 4294901760
    %v1003 = vsub.f32 %v528, %v1002
    %v1004 = vand.u32 %v1003, 4294901760
    %1005 = vmatpush1.msra.mxu0 %v1004
    %1006 = vmatprep.subr.mxu0 0.0
    %v1007 = vand.u32 %v527, 4294901760
    %v1008 = vsub.f32 %v527, %v1007
    %v1009 = vand.u32 %v1008, 4294901760
    %1010 = vmatpush1.msra.mxu0 %v1009
    %1011 = vmatprep.subr.mxu0 0.0
    %v1012 = vand.u32 %v526, 4294901760
    %v1013 = vsub.f32 %v526, %v1012
    %v1014 = vand.u32 %v1013, 4294901760
    %1015 = vmatpush1.msra.mxu0 %v1014
    %1016 = vmatprep.subr.mxu0 0.0
    %v1017 = vand.u32 %v525, 4294901760
    %v1018 = vsub.f32 %v525, %v1017
    %v1019 = vand.u32 %v1018, 4294901760
    %1020 = vmatpush1.msra.mxu0 %v1019
    %1021 = vmatprep.subr.mxu0 0.0
    %v1022 = vand.u32 %v524, 4294901760
    %v1023 = vsub.f32 %v524, %v1022
    %v1024 = vand.u32 %v1023, 4294901760
    %1025 = vmatpush1.msra.mxu0 %v1024
    %1026 = vmatprep.subr.mxu0 0.0
    %v1027 = vand.u32 %v523, 4294901760
    %v1028 = vsub.f32 %v523, %v1027
    %v1029 = vand.u32 %v1028, 4294901760
    %1030 = vmatpush1.msra.mxu0 %v1029
    %1031 = vmatprep.subr.mxu0 0.0
    %v1032 = vand.u32 %v522, 4294901760
    %v1033 = vsub.f32 %v522, %v1032
    %v1034 = vand.u32 %v1033, 4294901760
    %1035 = vmatpush1.msra.mxu0 %v1034
    %1036 = vmatprep.subr.mxu0 0.0
    %v1037 = vand.u32 %v521, 4294901760
    %v1038 = vsub.f32 %v521, %v1037
    %v1039 = vand.u32 %v1038, 4294901760
    %1040 = vmatpush1.msra.mxu0 %v1039
    %1041 = vmatprep.subr.mxu0 0.0
    %v1042 = vand.u32 %v520, 4294901760
    %v1043 = vsub.f32 %v520, %v1042
    %v1044 = vand.u32 %v1043, 4294901760
    %1045 = vmatpush1.msra.mxu0 %v1044
    %1046 = vmatprep.subr.mxu0 0.0
    %v1047 = vand.u32 %v519, 4294901760
    %v1048 = vsub.f32 %v519, %v1047
    %v1049 = vand.u32 %v1048, 4294901760
    %1050 = vmatpush1.msra.mxu0 %v1049
    %1051 = vmatprep.subr.mxu0 0.0
    %v1052 = vand.u32 %v518, 4294901760
    %v1053 = vsub.f32 %v518, %v1052
    %v1054 = vand.u32 %v1053, 4294901760
    %1055 = vmatpush1.msra.mxu0 %v1054
    %1056 = vmatprep.subr.mxu0 0.0
    %1057 = vmatpush2.msra.mxu0 0.0
    %1058 = vmatprep.subr.mxu0 0.0
    %1059 = vmatpush2.msra.mxu0 0.0
    %1060 = vmatprep.subr.mxu0 0.0
    %1061 = vmatpush2.msra.mxu0 0.0
    %1062 = vmatprep.subr.mxu0 0.0
    %1063 = vmatpush2.msra.mxu0 0.0
    %1064 = vmatprep.subr.mxu0 0.0
    %1065 = vmatpush2.msra.mxu0 0.0
    %1066 = vmatprep.subr.mxu0 0.0
    %1067 = vmatpush2.msra.mxu0 0.0
    %1068 = vmatprep.subr.mxu0 0.0
    %1069 = vmatpush2.msra.mxu0 0.0
    %1070 = vmatprep.subr.mxu0 0.0
    %1071 = vmatpush2.msra.mxu0 0.0
    %1072 = vmatprep.subr.mxu0 0.0
    %1073 = vmatpush2.msra.mxu0 0.0
    %1074 = vmatprep.subr.mxu0 0.0
    %1075 = vmatpush2.msra.mxu0 0.0
    %1076 = vmatprep.subr.mxu0 0.0
    %1077 = vmatpush2.msra.mxu0 0.0
    %1078 = vmatprep.subr.mxu0 0.0
    %1079 = vmatpush2.msra.mxu0 0.0
    %1080 = vmatprep.subr.mxu0 0.0
    %1081 = vmatpush2.msra.mxu0 0.0
    %1082 = vmatprep.subr.mxu0 0.0
    %1083 = vmatpush2.msra.mxu0 0.0
    %1084 = vmatprep.subr.mxu0 0.0
    %1085 = vmatpush2.msra.mxu0 0.0
    %1086 = vmatprep.subr.mxu0 0.0
    %1087 = vmatpush2.msra.mxu0 0.0
    %1088 = vmatprep.mubr.f32.mxu0 0.0
    %v1089 = vand.u32 %v517, 4294901760
    %1090 = vmatmul.mubr.f32.gmra.mxu0 %v1089
    %v1091 = vpop.f32.mrf.mxu0
    %v1092 = vadd.f32 %v973, %v1091
    %v1093 = vpop.f32.mrf.mxu0
    %1094 = vdwg.mxu0
    %1095 = vmatprep.subr.mxu0 0.0
    %v1096 = vand.u32 %v533, 4294901760
    %1097 = vmatpush1.msra.mxu0 %v1096
    %1098 = vmatprep.subr.mxu0 0.0
    %v1099 = vand.u32 %v532, 4294901760
    %1100 = vmatpush1.msra.mxu0 %v1099
    %1101 = vmatprep.subr.mxu0 0.0
    %v1102 = vand.u32 %v531, 4294901760
    %1103 = vmatpush1.msra.mxu0 %v1102
    %1104 = vmatprep.subr.mxu0 0.0
    %v1105 = vand.u32 %v530, 4294901760
    %1106 = vmatpush1.msra.mxu0 %v1105
    %1107 = vmatprep.subr.mxu0 0.0
    %v1108 = vand.u32 %v529, 4294901760
    %1109 = vmatpush1.msra.mxu0 %v1108
    %1110 = vmatprep.subr.mxu0 0.0
    %v1111 = vand.u32 %v528, 4294901760
    %1112 = vmatpush1.msra.mxu0 %v1111
    %1113 = vmatprep.subr.mxu0 0.0
    %v1114 = vand.u32 %v527, 4294901760
    %1115 = vmatpush1.msra.mxu0 %v1114
    %1116 = vmatprep.subr.mxu0 0.0
    %v1117 = vand.u32 %v526, 4294901760
    %1118 = vmatpush1.msra.mxu0 %v1117
    %1119 = vmatprep.subr.mxu0 0.0
    %v1120 = vand.u32 %v525, 4294901760
    %1121 = vmatpush1.msra.mxu0 %v1120
    %1122 = vmatprep.subr.mxu0 0.0
    %v1123 = vand.u32 %v524, 4294901760
    %1124 = vmatpush1.msra.mxu0 %v1123
    %1125 = vmatprep.subr.mxu0 0.0
    %v1126 = vand.u32 %v523, 4294901760
    %1127 = vmatpush1.msra.mxu0 %v1126
    %1128 = vmatprep.subr.mxu0 0.0
    %v1129 = vand.u32 %v522, 4294901760
    %1130 = vmatpush1.msra.mxu0 %v1129
    %1131 = vmatprep.subr.mxu0 0.0
    %v1132 = vand.u32 %v521, 4294901760
    %1133 = vmatpush1.msra.mxu0 %v1132
    %1134 = vmatprep.subr.mxu0 0.0
    %v1135 = vand.u32 %v520, 4294901760
    %1136 = vmatpush1.msra.mxu0 %v1135
    %1137 = vmatprep.subr.mxu0 0.0
    %v1138 = vand.u32 %v519, 4294901760
    %1139 = vmatpush1.msra.mxu0 %v1138
    %1140 = vmatprep.subr.mxu0 0.0
    %v1141 = vand.u32 %v518, 4294901760
    %1142 = vmatpush1.msra.mxu0 %v1141
    %1143 = vmatprep.subr.mxu0 0.0
    %1144 = vmatpush2.msra.mxu0 0.0
    %1145 = vmatprep.subr.mxu0 0.0
    %1146 = vmatpush2.msra.mxu0 0.0
    %1147 = vmatprep.subr.mxu0 0.0
    %1148 = vmatpush2.msra.mxu0 0.0
    %1149 = vmatprep.subr.mxu0 0.0
    %1150 = vmatpush2.msra.mxu0 0.0
    %1151 = vmatprep.subr.mxu0 0.0
    %1152 = vmatpush2.msra.mxu0 0.0
    %1153 = vmatprep.subr.mxu0 0.0
    %1154 = vmatpush2.msra.mxu0 0.0
    %1155 = vmatprep.subr.mxu0 0.0
    %1156 = vmatpush2.msra.mxu0 0.0
    %1157 = vmatprep.subr.mxu0 0.0
    %1158 = vmatpush2.msra.mxu0 0.0
    %1159 = vmatprep.subr.mxu0 0.0
    %1160 = vmatpush2.msra.mxu0 0.0
    %1161 = vmatprep.subr.mxu0 0.0
    %1162 = vmatpush2.msra.mxu0 0.0
    %1163 = vmatprep.subr.mxu0 0.0
    %1164 = vmatpush2.msra.mxu0 0.0
    %1165 = vmatprep.subr.mxu0 0.0
    %1166 = vmatpush2.msra.mxu0 0.0
    %1167 = vmatprep.subr.mxu0 0.0
    %1168 = vmatpush2.msra.mxu0 0.0
    %1169 = vmatprep.subr.mxu0 0.0
    %1170 = vmatpush2.msra.mxu0 0.0
    %1171 = vmatprep.subr.mxu0 0.0
    %1172 = vmatpush2.msra.mxu0 0.0
    %1173 = vmatprep.subr.mxu0 0.0
    %1174 = vmatpush2.msra.mxu0 0.0
    %1175 = vmatprep.mubr.f32.mxu0 0.0
    %v1176 = vand.u32 %v517, 4294901760
    %1177 = vmatmul.mubr.f32.gmra.mxu0 %v1176
    %v1178 = vpop.f32.mrf.mxu0
    %v1179 = vadd.f32 %v1092, %v1178
    %v1180 = vpop.f32.mrf.mxu0
    %1181 = vdwg.mxu0
    %v1182 = vtanh.pop %v1179
    %v1183 = vld [vmem:[#allocation4] sm:$0xff]
    %v1184 = vld [vmem:[#allocation4 + $0x8] sm:$0xff]
    %v1185 = vld [vmem:[#allocation4 + $0x10] sm:$0xff]
    %v1186 = vld [vmem:[#allocation4 + $0x18] sm:$0xff]
    %v1187 = vld [vmem:[#allocation4 + $0x20] sm:$0xff]
    %v1188 = vld [vmem:[#allocation4 + $0x28] sm:$0xff]
    %v1189 = vld [vmem:[#allocation4 + $0x30] sm:$0xff]
    %v1190 = vld [vmem:[#allocation4 + $0x38] sm:$0xff]
    %v1191 = vld [vmem:[#allocation4 + $0x40] sm:$0xff]
    %v1192 = vld [vmem:[#allocation4 + $0x48] sm:$0xff]
    %v1193 = vld [vmem:[#allocation4 + $0x50] sm:$0xff]
    %v1194 = vld [vmem:[#allocation4 + $0x58] sm:$0xff]
    %v1195 = vld [vmem:[#allocation4 + $0x60] sm:$0xff]
    %v1196 = vld [vmem:[#allocation4 + $0x68] sm:$0xff]
    %v1197 = vld [vmem:[#allocation4 + $0x70] sm:$0xff]
    %v1198 = vld [vmem:[#allocation4 + $0x78] sm:$0xff]
    %v1199 = vld [vmem:[%s6] sm:$0x1]
    %v1201 = vlaneseq
    %v1202 = vshrl.u32 %v1201, 7
    %v1203 = vsub.s32 0, %v1202
    %v1204 = vrot.slane %v1199, %v1203
    %1206 = vmatprep.subr.mxu0 0.0
    %v1207 = vand.u32 %v1198, 4294901760
    %1208 = vmatpush1.msra.mxu0 %v1207
    %1209 = vmatprep.subr.mxu0 0.0
    %v1210 = vand.u32 %v1197, 4294901760
    %1211 = vmatpush1.msra.mxu0 %v1210
    %1212 = vmatprep.subr.mxu0 0.0
    %v1213 = vand.u32 %v1196, 4294901760
    %1214 = vmatpush1.msra.mxu0 %v1213
    %1215 = vmatprep.subr.mxu0 0.0
    %v1216 = vand.u32 %v1195, 4294901760
    %1217 = vmatpush1.msra.mxu0 %v1216
    %1218 = vmatprep.subr.mxu0 0.0
    %v1219 = vand.u32 %v1194, 4294901760
    %1220 = vmatpush1.msra.mxu0 %v1219
    %1221 = vmatprep.subr.mxu0 0.0
    %v1222 = vand.u32 %v1193, 4294901760
    %1223 = vmatpush1.msra.mxu0 %v1222
    %1224 = vmatprep.subr.mxu0 0.0
    %v1225 = vand.u32 %v1192, 4294901760
    %1226 = vmatpush1.msra.mxu0 %v1225
    %1227 = vmatprep.subr.mxu0 0.0
    %v1228 = vand.u32 %v1191, 4294901760
    %1229 = vmatpush1.msra.mxu0 %v1228
    %1230 = vmatprep.subr.mxu0 0.0
    %v1231 = vand.u32 %v1190, 4294901760
    %1232 = vmatpush1.msra.mxu0 %v1231
    %1233 = vmatprep.subr.mxu0 0.0
    %v1234 = vand.u32 %v1189, 4294901760
    %1235 = vmatpush1.msra.mxu0 %v1234
    %1236 = vmatprep.subr.mxu0 0.0
    %v1237 = vand.u32 %v1188, 4294901760
    %1238 = vmatpush1.msra.mxu0 %v1237
    %1239 = vmatprep.subr.mxu0 0.0
    %v1240 = vand.u32 %v1187, 4294901760
    %1241 = vmatpush1.msra.mxu0 %v1240
    %1242 = vmatprep.subr.mxu0 0.0
    %v1243 = vand.u32 %v1186, 4294901760
    %1244 = vmatpush1.msra.mxu0 %v1243
    %1245 = vmatprep.subr.mxu0 0.0
    %v1246 = vand.u32 %v1185, 4294901760
    %1247 = vmatpush1.msra.mxu0 %v1246
    %1248 = vmatprep.subr.mxu0 0.0
    %v1249 = vand.u32 %v1184, 4294901760
    %1250 = vmatpush1.msra.mxu0 %v1249
    %1251 = vmatprep.subr.mxu0 0.0
    %v1252 = vand.u32 %v1183, 4294901760
    %1253 = vmatpush1.msra.mxu0 %v1252
    %1254 = vmatprep.subr.mxu0 0.0
    %1255 = vmatpush2.msra.mxu0 0.0
    %1256 = vmatprep.subr.mxu0 0.0
    %1257 = vmatpush2.msra.mxu0 0.0
    %1258 = vmatprep.subr.mxu0 0.0
    %1259 = vmatpush2.msra.mxu0 0.0
    %1260 = vmatprep.subr.mxu0 0.0
    %1261 = vmatpush2.msra.mxu0 0.0
    %1262 = vmatprep.subr.mxu0 0.0
    %1263 = vmatpush2.msra.mxu0 0.0
    %1264 = vmatprep.subr.mxu0 0.0
    %1265 = vmatpush2.msra.mxu0 0.0
    %1266 = vmatprep.subr.mxu0 0.0
    %1267 = vmatpush2.msra.mxu0 0.0
    %1268 = vmatprep.subr.mxu0 0.0
    %1269 = vmatpush2.msra.mxu0 0.0
    %1270 = vmatprep.subr.mxu0 0.0
    %1271 = vmatpush2.msra.mxu0 0.0
    %1272 = vmatprep.subr.mxu0 0.0
    %1273 = vmatpush2.msra.mxu0 0.0
    %1274 = vmatprep.subr.mxu0 0.0
    %1275 = vmatpush2.msra.mxu0 0.0
    %1276 = vmatprep.subr.mxu0 0.0
    %1277 = vmatpush2.msra.mxu0 0.0
    %1278 = vmatprep.subr.mxu0 0.0
    %1279 = vmatpush2.msra.mxu0 0.0
    %1280 = vmatprep.subr.mxu0 0.0
    %1281 = vmatpush2.msra.mxu0 0.0
    %1282 = vmatprep.subr.mxu0 0.0
    %1283 = vmatpush2.msra.mxu0 0.0
    %1284 = vmatprep.subr.mxu0 0.0
    %1285 = vmatpush2.msra.mxu0 0.0
    %1286 = vmatprep.mubr.f32.mxu0 0.0
    %v1287 = vand.u32 %v1182, 4294901760
    %v1288 = vsub.f32 %v1182, %v1287
    %v1289 = vand.u32 %v1288, 4294901760
    %v1290 = vsub.f32 %v1288, %v1289
    %v1291 = vand.u32 %v1290, 4294901760
    %1292 = vmatmul.mubr.f32.gmra.mxu0 %v1291
    %v1293 = vpop.f32.mrf.mxu0
    %v1294 = vadd.f32 %v1204, %v1293
    %v1295 = vpop.f32.mrf.mxu0
    %1296 = vdwg.mxu0
    %1297 = vmatprep.subr.mxu0 0.0
    %v1298 = vand.u32 %v1198, 4294901760
    %v1299 = vsub.f32 %v1198, %v1298
    %v1300 = vand.u32 %v1299, 4294901760
    %v1301 = vsub.f32 %v1299, %v1300
    %v1302 = vand.u32 %v1301, 4294901760
    %1303 = vmatpush1.msra.mxu0 %v1302
    %1304 = vmatprep.subr.mxu0 0.0
    %v1305 = vand.u32 %v1197, 4294901760
    %v1306 = vsub.f32 %v1197, %v1305
    %v1307 = vand.u32 %v1306, 4294901760
    %v1308 = vsub.f32 %v1306, %v1307
    %v1309 = vand.u32 %v1308, 4294901760
    %1310 = vmatpush1.msra.mxu0 %v1309
    %1311 = vmatprep.subr.mxu0 0.0
    %v1312 = vand.u32 %v1196, 4294901760
    %v1313 = vsub.f32 %v1196, %v1312
    %v1314 = vand.u32 %v1313, 4294901760
    %v1315 = vsub.f32 %v1313, %v1314
    %v1316 = vand.u32 %v1315, 4294901760
    %1317 = vmatpush1.msra.mxu0 %v1316
    %1318 = vmatprep.subr.mxu0 0.0
    %v1319 = vand.u32 %v1195, 4294901760
    %v1320 = vsub.f32 %v1195, %v1319
    %v1321 = vand.u32 %v1320, 4294901760
    %v1322 = vsub.f32 %v1320, %v1321
    %v1323 = vand.u32 %v1322, 4294901760
    %1324 = vmatpush1.msra.mxu0 %v1323
    %1325 = vmatprep.subr.mxu0 0.0
    %v1326 = vand.u32 %v1194, 4294901760
    %v1327 = vsub.f32 %v1194, %v1326
    %v1328 = vand.u32 %v1327, 4294901760
    %v1329 = vsub.f32 %v1327, %v1328
    %v1330 = vand.u32 %v1329, 4294901760
    %1331 = vmatpush1.msra.mxu0 %v1330
    %1332 = vmatprep.subr.mxu0 0.0
    %v1333 = vand.u32 %v1193, 4294901760
    %v1334 = vsub.f32 %v1193, %v1333
    %v1335 = vand.u32 %v1334, 4294901760
    %v1336 = vsub.f32 %v1334, %v1335
    %v1337 = vand.u32 %v1336, 4294901760
    %1338 = vmatpush1.msra.mxu0 %v1337
    %1339 = vmatprep.subr.mxu0 0.0
    %v1340 = vand.u32 %v1192, 4294901760
    %v1341 = vsub.f32 %v1192, %v1340
    %v1342 = vand.u32 %v1341, 4294901760
    %v1343 = vsub.f32 %v1341, %v1342
    %v1344 = vand.u32 %v1343, 4294901760
    %1345 = vmatpush1.msra.mxu0 %v1344
    %1346 = vmatprep.subr.mxu0 0.0
    %v1347 = vand.u32 %v1191, 4294901760
    %v1348 = vsub.f32 %v1191, %v1347
    %v1349 = vand.u32 %v1348, 4294901760
    %v1350 = vsub.f32 %v1348, %v1349
    %v1351 = vand.u32 %v1350, 4294901760
    %1352 = vmatpush1.msra.mxu0 %v1351
    %1353 = vmatprep.subr.mxu0 0.0
    %v1354 = vand.u32 %v1190, 4294901760
    %v1355 = vsub.f32 %v1190, %v1354
    %v1356 = vand.u32 %v1355, 4294901760
    %v1357 = vsub.f32 %v1355, %v1356
    %v1358 = vand.u32 %v1357, 4294901760
    %1359 = vmatpush1.msra.mxu0 %v1358
    %1360 = vmatprep.subr.mxu0 0.0
    %v1361 = vand.u32 %v1189, 4294901760
    %v1362 = vsub.f32 %v1189, %v1361
    %v1363 = vand.u32 %v1362, 4294901760
    %v1364 = vsub.f32 %v1362, %v1363
    %v1365 = vand.u32 %v1364, 4294901760
    %1366 = vmatpush1.msra.mxu0 %v1365
    %1367 = vmatprep.subr.mxu0 0.0
    %v1368 = vand.u32 %v1188, 4294901760
    %v1369 = vsub.f32 %v1188, %v1368
    %v1370 = vand.u32 %v1369, 4294901760
    %v1371 = vsub.f32 %v1369, %v1370
    %v1372 = vand.u32 %v1371, 4294901760
    %1373 = vmatpush1.msra.mxu0 %v1372
    %1374 = vmatprep.subr.mxu0 0.0
    %v1375 = vand.u32 %v1187, 4294901760
    %v1376 = vsub.f32 %v1187, %v1375
    %v1377 = vand.u32 %v1376, 4294901760
    %v1378 = vsub.f32 %v1376, %v1377
    %v1379 = vand.u32 %v1378, 4294901760
    %1380 = vmatpush1.msra.mxu0 %v1379
    %1381 = vmatprep.subr.mxu0 0.0
    %v1382 = vand.u32 %v1186, 4294901760
    %v1383 = vsub.f32 %v1186, %v1382
    %v1384 = vand.u32 %v1383, 4294901760
    %v1385 = vsub.f32 %v1383, %v1384
    %v1386 = vand.u32 %v1385, 4294901760
    %1387 = vmatpush1.msra.mxu0 %v1386
    %1388 = vmatprep.subr.mxu0 0.0
    %v1389 = vand.u32 %v1185, 4294901760
    %v1390 = vsub.f32 %v1185, %v1389
    %v1391 = vand.u32 %v1390, 4294901760
    %v1392 = vsub.f32 %v1390, %v1391
    %v1393 = vand.u32 %v1392, 4294901760
    %1394 = vmatpush1.msra.mxu0 %v1393
    %1395 = vmatprep.subr.mxu0 0.0
    %v1396 = vand.u32 %v1184, 4294901760
    %v1397 = vsub.f32 %v1184, %v1396
    %v1398 = vand.u32 %v1397, 4294901760
    %v1399 = vsub.f32 %v1397, %v1398
    %v1400 = vand.u32 %v1399, 4294901760
    %1401 = vmatpush1.msra.mxu0 %v1400
    %1402 = vmatprep.subr.mxu0 0.0
    %v1403 = vand.u32 %v1183, 4294901760
    %v1404 = vsub.f32 %v1183, %v1403
    %v1405 = vand.u32 %v1404, 4294901760
    %v1406 = vsub.f32 %v1404, %v1405
    %v1407 = vand.u32 %v1406, 4294901760
    %1408 = vmatpush1.msra.mxu0 %v1407
    %1409 = vmatprep.subr.mxu0 0.0
    %1410 = vmatpush2.msra.mxu0 0.0
    %1411 = vmatprep.subr.mxu0 0.0
    %1412 = vmatpush2.msra.mxu0 0.0
    %1413 = vmatprep.subr.mxu0 0.0
    %1414 = vmatpush2.msra.mxu0 0.0
    %1415 = vmatprep.subr.mxu0 0.0
    %1416 = vmatpush2.msra.mxu0 0.0
    %1417 = vmatprep.subr.mxu0 0.0
    %1418 = vmatpush2.msra.mxu0 0.0
    %1419 = vmatprep.subr.mxu0 0.0
    %1420 = vmatpush2.msra.mxu0 0.0
    %1421 = vmatprep.subr.mxu0 0.0
    %1422 = vmatpush2.msra.mxu0 0.0
    %1423 = vmatprep.subr.mxu0 0.0
    %1424 = vmatpush2.msra.mxu0 0.0
    %1425 = vmatprep.subr.mxu0 0.0
    %1426 = vmatpush2.msra.mxu0 0.0
    %1427 = vmatprep.subr.mxu0 0.0
    %1428 = vmatpush2.msra.mxu0 0.0
    %1429 = vmatprep.subr.mxu0 0.0
    %1430 = vmatpush2.msra.mxu0 0.0
    %1431 = vmatprep.subr.mxu0 0.0
    %1432 = vmatpush2.msra.mxu0 0.0
    %1433 = vmatprep.subr.mxu0 0.0
    %1434 = vmatpush2.msra.mxu0 0.0
    %1435 = vmatprep.subr.mxu0 0.0
    %1436 = vmatpush2.msra.mxu0 0.0
    %1437 = vmatprep.subr.mxu0 0.0
    %1438 = vmatpush2.msra.mxu0 0.0
    %1439 = vmatprep.subr.mxu0 0.0
    %1440 = vmatpush2.msra.mxu0 0.0
    %1441 = vmatprep.mubr.f32.mxu0 0.0
    %v1442 = vand.u32 %v1182, 4294901760
    %1443 = vmatmul.mubr.f32.gmra.mxu0 %v1442
    %v1444 = vpop.f32.mrf.mxu0
    %v1445 = vadd.f32 %v1294, %v1444
    %v1446 = vpop.f32.mrf.mxu0
    %1447 = vdwg.mxu0
    %1448 = vmatprep.subr.mxu0 0.0
    %v1449 = vand.u32 %v1198, 4294901760
    %v1450 = vsub.f32 %v1198, %v1449
    %1451 = vmatpush1.msra.mxu0 %v1450
    %1452 = vmatprep.subr.mxu0 0.0
    %v1453 = vand.u32 %v1197, 4294901760
    %v1454 = vsub.f32 %v1197, %v1453
    %1455 = vmatpush1.msra.mxu0 %v1454
    %1456 = vmatprep.subr.mxu0 0.0
    %v1457 = vand.u32 %v1196, 4294901760
    %v1458 = vsub.f32 %v1196, %v1457
    %1459 = vmatpush1.msra.mxu0 %v1458
    %1460 = vmatprep.subr.mxu0 0.0
    %v1461 = vand.u32 %v1195, 4294901760
    %v1462 = vsub.f32 %v1195, %v1461
    %1463 = vmatpush1.msra.mxu0 %v1462
    %1464 = vmatprep.subr.mxu0 0.0
    %v1465 = vand.u32 %v1194, 4294901760
    %v1466 = vsub.f32 %v1194, %v1465
    %1467 = vmatpush1.msra.mxu0 %v1466
    %1468 = vmatprep.subr.mxu0 0.0
    %v1469 = vand.u32 %v1193, 4294901760
    %v1470 = vsub.f32 %v1193, %v1469
    %1471 = vmatpush1.msra.mxu0 %v1470
    %1472 = vmatprep.subr.mxu0 0.0
    %v1473 = vand.u32 %v1192, 4294901760
    %v1474 = vsub.f32 %v1192, %v1473
    %1475 = vmatpush1.msra.mxu0 %v1474
    %1476 = vmatprep.subr.mxu0 0.0
    %v1477 = vand.u32 %v1191, 4294901760
    %v1478 = vsub.f32 %v1191, %v1477
    %1479 = vmatpush1.msra.mxu0 %v1478
    %1480 = vmatprep.subr.mxu0 0.0
    %v1481 = vand.u32 %v1190, 4294901760
    %v1482 = vsub.f32 %v1190, %v1481
    %1483 = vmatpush1.msra.mxu0 %v1482
    %1484 = vmatprep.subr.mxu0 0.0
    %v1485 = vand.u32 %v1189, 4294901760
    %v1486 = vsub.f32 %v1189, %v1485
    %1487 = vmatpush1.msra.mxu0 %v1486
    %1488 = vmatprep.subr.mxu0 0.0
    %v1489 = vand.u32 %v1188, 4294901760
    %v1490 = vsub.f32 %v1188, %v1489
    %1491 = vmatpush1.msra.mxu0 %v1490
    %1492 = vmatprep.subr.mxu0 0.0
    %v1493 = vand.u32 %v1187, 4294901760
    %v1494 = vsub.f32 %v1187, %v1493
    %1495 = vmatpush1.msra.mxu0 %v1494
    %1496 = vmatprep.subr.mxu0 0.0
    %v1497 = vand.u32 %v1186, 4294901760
    %v1498 = vsub.f32 %v1186, %v1497
    %1499 = vmatpush1.msra.mxu0 %v1498
    %1500 = vmatprep.subr.mxu0 0.0
    %v1501 = vand.u32 %v1185, 4294901760
    %v1502 = vsub.f32 %v1185, %v1501
    %1503 = vmatpush1.msra.mxu0 %v1502
    %1504 = vmatprep.subr.mxu0 0.0
    %v1505 = vand.u32 %v1184, 4294901760
    %v1506 = vsub.f32 %v1184, %v1505
    %1507 = vmatpush1.msra.mxu0 %v1506
    %1508 = vmatprep.subr.mxu0 0.0
    %v1509 = vand.u32 %v1183, 4294901760
    %v1510 = vsub.f32 %v1183, %v1509
    %1511 = vmatpush1.msra.mxu0 %v1510
    %1512 = vmatprep.subr.mxu0 0.0
    %1513 = vmatpush2.msra.mxu0 0.0
    %1514 = vmatprep.subr.mxu0 0.0
    %1515 = vmatpush2.msra.mxu0 0.0
    %1516 = vmatprep.subr.mxu0 0.0
    %1517 = vmatpush2.msra.mxu0 0.0
    %1518 = vmatprep.subr.mxu0 0.0
    %1519 = vmatpush2.msra.mxu0 0.0
    %1520 = vmatprep.subr.mxu0 0.0
    %1521 = vmatpush2.msra.mxu0 0.0
    %1522 = vmatprep.subr.mxu0 0.0
    %1523 = vmatpush2.msra.mxu0 0.0
    %1524 = vmatprep.subr.mxu0 0.0
    %1525 = vmatpush2.msra.mxu0 0.0
    %1526 = vmatprep.subr.mxu0 0.0
    %1527 = vmatpush2.msra.mxu0 0.0
    %1528 = vmatprep.subr.mxu0 0.0
    %1529 = vmatpush2.msra.mxu0 0.0
    %1530 = vmatprep.subr.mxu0 0.0
    %1531 = vmatpush2.msra.mxu0 0.0
    %1532 = vmatprep.subr.mxu0 0.0
    %1533 = vmatpush2.msra.mxu0 0.0
    %1534 = vmatprep.subr.mxu0 0.0
    %1535 = vmatpush2.msra.mxu0 0.0
    %1536 = vmatprep.subr.mxu0 0.0
    %1537 = vmatpush2.msra.mxu0 0.0
    %1538 = vmatprep.subr.mxu0 0.0
    %1539 = vmatpush2.msra.mxu0 0.0
    %1540 = vmatprep.subr.mxu0 0.0
    %1541 = vmatpush2.msra.mxu0 0.0
    %1542 = vmatprep.subr.mxu0 0.0
    %1543 = vmatpush2.msra.mxu0 0.0
    %1544 = vmatprep.mubr.f32.mxu0 0.0
    %v1545 = vand.u32 %v1182, 4294901760
    %v1546 = vsub.f32 %v1182, %v1545
    %1547 = vmatmul.mubr.f32.gmra.mxu0 %v1546
    %v1548 = vpop.f32.mrf.mxu0
    %v1549 = vadd.f32 %v1445, %v1548
    %v1550 = vpop.f32.mrf.mxu0
    %1551 = vdwg.mxu0
    %1552 = vmatprep.subr.mxu0 0.0
    %v1553 = vand.u32 %v1198, 4294901760
    %1554 = vmatpush1.msra.mxu0 %v1553
    %1555 = vmatprep.subr.mxu0 0.0
    %v1556 = vand.u32 %v1197, 4294901760
    %1557 = vmatpush1.msra.mxu0 %v1556
    %1558 = vmatprep.subr.mxu0 0.0
    %v1559 = vand.u32 %v1196, 4294901760
    %1560 = vmatpush1.msra.mxu0 %v1559
    %1561 = vmatprep.subr.mxu0 0.0
    %v1562 = vand.u32 %v1195, 4294901760
    %1563 = vmatpush1.msra.mxu0 %v1562
    %1564 = vmatprep.subr.mxu0 0.0
    %v1565 = vand.u32 %v1194, 4294901760
    %1566 = vmatpush1.msra.mxu0 %v1565
    %1567 = vmatprep.subr.mxu0 0.0
    %v1568 = vand.u32 %v1193, 4294901760
    %1569 = vmatpush1.msra.mxu0 %v1568
    %1570 = vmatprep.subr.mxu0 0.0
    %v1571 = vand.u32 %v1192, 4294901760
    %1572 = vmatpush1.msra.mxu0 %v1571
    %1573 = vmatprep.subr.mxu0 0.0
    %v1574 = vand.u32 %v1191, 4294901760
    %1575 = vmatpush1.msra.mxu0 %v1574
    %1576 = vmatprep.subr.mxu0 0.0
    %v1577 = vand.u32 %v1190, 4294901760
    %1578 = vmatpush1.msra.mxu0 %v1577
    %1579 = vmatprep.subr.mxu0 0.0
    %v1580 = vand.u32 %v1189, 4294901760
    %1581 = vmatpush1.msra.mxu0 %v1580
    %1582 = vmatprep.subr.mxu0 0.0
    %v1583 = vand.u32 %v1188, 4294901760
    %1584 = vmatpush1.msra.mxu0 %v1583
    %1585 = vmatprep.subr.mxu0 0.0
    %v1586 = vand.u32 %v1187, 4294901760
    %1587 = vmatpush1.msra.mxu0 %v1586
    %1588 = vmatprep.subr.mxu0 0.0
    %v1589 = vand.u32 %v1186, 4294901760
    %1590 = vmatpush1.msra.mxu0 %v1589
    %1591 = vmatprep.subr.mxu0 0.0
    %v1592 = vand.u32 %v1185, 4294901760
    %1593 = vmatpush1.msra.mxu0 %v1592
    %1594 = vmatprep.subr.mxu0 0.0
    %v1595 = vand.u32 %v1184, 4294901760
    %1596 = vmatpush1.msra.mxu0 %v1595
    %1597 = vmatprep.subr.mxu0 0.0
    %v1598 = vand.u32 %v1183, 4294901760
    %1599 = vmatpush1.msra.mxu0 %v1598
    %1600 = vmatprep.subr.mxu0 0.0
    %1601 = vmatpush2.msra.mxu0 0.0
    %1602 = vmatprep.subr.mxu0 0.0
    %1603 = vmatpush2.msra.mxu0 0.0
    %1604 = vmatprep.subr.mxu0 0.0
    %1605 = vmatpush2.msra.mxu0 0.0
    %1606 = vmatprep.subr.mxu0 0.0
    %1607 = vmatpush2.msra.mxu0 0.0
    %1608 = vmatprep.subr.mxu0 0.0
    %1609 = vmatpush2.msra.mxu0 0.0
    %1610 = vmatprep.subr.mxu0 0.0
    %1611 = vmatpush2.msra.mxu0 0.0
    %1612 = vmatprep.subr.mxu0 0.0
    %1613 = vmatpush2.msra.mxu0 0.0
    %1614 = vmatprep.subr.mxu0 0.0
    %1615 = vmatpush2.msra.mxu0 0.0
    %1616 = vmatprep.subr.mxu0 0.0
    %1617 = vmatpush2.msra.mxu0 0.0
    %1618 = vmatprep.subr.mxu0 0.0
    %1619 = vmatpush2.msra.mxu0 0.0
    %1620 = vmatprep.subr.mxu0 0.0
    %1621 = vmatpush2.msra.mxu0 0.0
    %1622 = vmatprep.subr.mxu0 0.0
    %1623 = vmatpush2.msra.mxu0 0.0
    %1624 = vmatprep.subr.mxu0 0.0
    %1625 = vmatpush2.msra.mxu0 0.0
    %1626 = vmatprep.subr.mxu0 0.0
    %1627 = vmatpush2.msra.mxu0 0.0
    %1628 = vmatprep.subr.mxu0 0.0
    %1629 = vmatpush2.msra.mxu0 0.0
    %1630 = vmatprep.subr.mxu0 0.0
    %1631 = vmatpush2.msra.mxu0 0.0
    %1632 = vmatprep.mubr.f32.mxu0 0.0
    %v1633 = vand.u32 %v1182, 4294901760
    %v1634 = vsub.f32 %v1182, %v1633
    %v1635 = vand.u32 %v1634, 4294901760
    %1636 = vmatmul.mubr.f32.gmra.mxu0 %v1635
    %v1637 = vpop.f32.mrf.mxu0
    %v1638 = vadd.f32 %v1549, %v1637
    %v1639 = vpop.f32.mrf.mxu0
    %1640 = vdwg.mxu0
    %1641 = vmatprep.subr.mxu0 0.0
    %v1642 = vand.u32 %v1198, 4294901760
    %v1643 = vsub.f32 %v1198, %v1642
    %v1644 = vand.u32 %v1643, 4294901760
    %1645 = vmatpush1.msra.mxu0 %v1644
    %1646 = vmatprep.subr.mxu0 0.0
    %v1647 = vand.u32 %v1197, 4294901760
    %v1648 = vsub.f32 %v1197, %v1647
    %v1649 = vand.u32 %v1648, 4294901760
    %1650 = vmatpush1.msra.mxu0 %v1649
    %1651 = vmatprep.subr.mxu0 0.0
    %v1652 = vand.u32 %v1196, 4294901760
    %v1653 = vsub.f32 %v1196, %v1652
    %v1654 = vand.u32 %v1653, 4294901760
    %1655 = vmatpush1.msra.mxu0 %v1654
    %1656 = vmatprep.subr.mxu0 0.0
    %v1657 = vand.u32 %v1195, 4294901760
    %v1658 = vsub.f32 %v1195, %v1657
    %v1659 = vand.u32 %v1658, 4294901760
    %1660 = vmatpush1.msra.mxu0 %v1659
    %1661 = vmatprep.subr.mxu0 0.0
    %v1662 = vand.u32 %v1194, 4294901760
    %v1663 = vsub.f32 %v1194, %v1662
    %v1664 = vand.u32 %v1663, 4294901760
    %1665 = vmatpush1.msra.mxu0 %v1664
    %1666 = vmatprep.subr.mxu0 0.0
    %v1667 = vand.u32 %v1193, 4294901760
    %v1668 = vsub.f32 %v1193, %v1667
    %v1669 = vand.u32 %v1668, 4294901760
    %1670 = vmatpush1.msra.mxu0 %v1669
    %1671 = vmatprep.subr.mxu0 0.0
    %v1672 = vand.u32 %v1192, 4294901760
    %v1673 = vsub.f32 %v1192, %v1672
    %v1674 = vand.u32 %v1673, 4294901760
    %1675 = vmatpush1.msra.mxu0 %v1674
    %1676 = vmatprep.subr.mxu0 0.0
    %v1677 = vand.u32 %v1191, 4294901760
    %v1678 = vsub.f32 %v1191, %v1677
    %v1679 = vand.u32 %v1678, 4294901760
    %1680 = vmatpush1.msra.mxu0 %v1679
    %1681 = vmatprep.subr.mxu0 0.0
    %v1682 = vand.u32 %v1190, 4294901760
    %v1683 = vsub.f32 %v1190, %v1682
    %v1684 = vand.u32 %v1683, 4294901760
    %1685 = vmatpush1.msra.mxu0 %v1684
    %1686 = vmatprep.subr.mxu0 0.0
    %v1687 = vand.u32 %v1189, 4294901760
    %v1688 = vsub.f32 %v1189, %v1687
    %v1689 = vand.u32 %v1688, 4294901760
    %1690 = vmatpush1.msra.mxu0 %v1689
    %1691 = vmatprep.subr.mxu0 0.0
    %v1692 = vand.u32 %v1188, 4294901760
    %v1693 = vsub.f32 %v1188, %v1692
    %v1694 = vand.u32 %v1693, 4294901760
    %1695 = vmatpush1.msra.mxu0 %v1694
    %1696 = vmatprep.subr.mxu0 0.0
    %v1697 = vand.u32 %v1187, 4294901760
    %v1698 = vsub.f32 %v1187, %v1697
    %v1699 = vand.u32 %v1698, 4294901760
    %1700 = vmatpush1.msra.mxu0 %v1699
    %1701 = vmatprep.subr.mxu0 0.0
    %v1702 = vand.u32 %v1186, 4294901760
    %v1703 = vsub.f32 %v1186, %v1702
    %v1704 = vand.u32 %v1703, 4294901760
    %1705 = vmatpush1.msra.mxu0 %v1704
    %1706 = vmatprep.subr.mxu0 0.0
    %v1707 = vand.u32 %v1185, 4294901760
    %v1708 = vsub.f32 %v1185, %v1707
    %v1709 = vand.u32 %v1708, 4294901760
    %1710 = vmatpush1.msra.mxu0 %v1709
    %1711 = vmatprep.subr.mxu0 0.0
    %v1712 = vand.u32 %v1184, 4294901760
    %v1713 = vsub.f32 %v1184, %v1712
    %v1714 = vand.u32 %v1713, 4294901760
    %1715 = vmatpush1.msra.mxu0 %v1714
    %1716 = vmatprep.subr.mxu0 0.0
    %v1717 = vand.u32 %v1183, 4294901760
    %v1718 = vsub.f32 %v1183, %v1717
    %v1719 = vand.u32 %v1718, 4294901760
    %1720 = vmatpush1.msra.mxu0 %v1719
    %1721 = vmatprep.subr.mxu0 0.0
    %1722 = vmatpush2.msra.mxu0 0.0
    %1723 = vmatprep.subr.mxu0 0.0
    %1724 = vmatpush2.msra.mxu0 0.0
    %1725 = vmatprep.subr.mxu0 0.0
    %1726 = vmatpush2.msra.mxu0 0.0
    %1727 = vmatprep.subr.mxu0 0.0
    %1728 = vmatpush2.msra.mxu0 0.0
    %1729 = vmatprep.subr.mxu0 0.0
    %1730 = vmatpush2.msra.mxu0 0.0
    %1731 = vmatprep.subr.mxu0 0.0
    %1732 = vmatpush2.msra.mxu0 0.0
    %1733 = vmatprep.subr.mxu0 0.0
    %1734 = vmatpush2.msra.mxu0 0.0
    %1735 = vmatprep.subr.mxu0 0.0
    %1736 = vmatpush2.msra.mxu0 0.0
    %1737 = vmatprep.subr.mxu0 0.0
    %1738 = vmatpush2.msra.mxu0 0.0
    %1739 = vmatprep.subr.mxu0 0.0
    %1740 = vmatpush2.msra.mxu0 0.0
    %1741 = vmatprep.subr.mxu0 0.0
    %1742 = vmatpush2.msra.mxu0 0.0
    %1743 = vmatprep.subr.mxu0 0.0
    %1744 = vmatpush2.msra.mxu0 0.0
    %1745 = vmatprep.subr.mxu0 0.0
    %1746 = vmatpush2.msra.mxu0 0.0
    %1747 = vmatprep.subr.mxu0 0.0
    %1748 = vmatpush2.msra.mxu0 0.0
    %1749 = vmatprep.subr.mxu0 0.0
    %1750 = vmatpush2.msra.mxu0 0.0
    %1751 = vmatprep.subr.mxu0 0.0
    %1752 = vmatpush2.msra.mxu0 0.0
    %1753 = vmatprep.mubr.f32.mxu0 0.0
    %v1754 = vand.u32 %v1182, 4294901760
    %1755 = vmatmul.mubr.f32.gmra.mxu0 %v1754
    %v1756 = vpop.f32.mrf.mxu0
    %v1757 = vadd.f32 %v1638, %v1756
    %v1758 = vpop.f32.mrf.mxu0
    %1759 = vdwg.mxu0
    %1760 = vmatprep.subr.mxu0 0.0
    %v1761 = vand.u32 %v1198, 4294901760
    %1762 = vmatpush1.msra.mxu0 %v1761
    %1763 = vmatprep.subr.mxu0 0.0
    %v1764 = vand.u32 %v1197, 4294901760
    %1765 = vmatpush1.msra.mxu0 %v1764
    %1766 = vmatprep.subr.mxu0 0.0
    %v1767 = vand.u32 %v1196, 4294901760
    %1768 = vmatpush1.msra.mxu0 %v1767
    %1769 = vmatprep.subr.mxu0 0.0
    %v1770 = vand.u32 %v1195, 4294901760
    %1771 = vmatpush1.msra.mxu0 %v1770
    %1772 = vmatprep.subr.mxu0 0.0
    %v1773 = vand.u32 %v1194, 4294901760
    %1774 = vmatpush1.msra.mxu0 %v1773
    %1775 = vmatprep.subr.mxu0 0.0
    %v1776 = vand.u32 %v1193, 4294901760
    %1777 = vmatpush1.msra.mxu0 %v1776
    %1778 = vmatprep.subr.mxu0 0.0
    %v1779 = vand.u32 %v1192, 4294901760
    %1780 = vmatpush1.msra.mxu0 %v1779
    %1781 = vmatprep.subr.mxu0 0.0
    %v1782 = vand.u32 %v1191, 4294901760
    %1783 = vmatpush1.msra.mxu0 %v1782
    %1784 = vmatprep.subr.mxu0 0.0
    %v1785 = vand.u32 %v1190, 4294901760
    %1786 = vmatpush1.msra.mxu0 %v1785
    %1787 = vmatprep.subr.mxu0 0.0
    %v1788 = vand.u32 %v1189, 4294901760
    %1789 = vmatpush1.msra.mxu0 %v1788
    %1790 = vmatprep.subr.mxu0 0.0
    %v1791 = vand.u32 %v1188, 4294901760
    %1792 = vmatpush1.msra.mxu0 %v1791
    %1793 = vmatprep.subr.mxu0 0.0
    %v1794 = vand.u32 %v1187, 4294901760
    %1795 = vmatpush1.msra.mxu0 %v1794
    %1796 = vmatprep.subr.mxu0 0.0
    %v1797 = vand.u32 %v1186, 4294901760
    %1798 = vmatpush1.msra.mxu0 %v1797
    %1799 = vmatprep.subr.mxu0 0.0
    %v1800 = vand.u32 %v1185, 4294901760
    %1801 = vmatpush1.msra.mxu0 %v1800
    %1802 = vmatprep.subr.mxu0 0.0
    %v1803 = vand.u32 %v1184, 4294901760
    %1804 = vmatpush1.msra.mxu0 %v1803
    %1805 = vmatprep.subr.mxu0 0.0
    %v1806 = vand.u32 %v1183, 4294901760
    %1807 = vmatpush1.msra.mxu0 %v1806
    %1808 = vmatprep.subr.mxu0 0.0
    %1809 = vmatpush2.msra.mxu0 0.0
    %1810 = vmatprep.subr.mxu0 0.0
    %1811 = vmatpush2.msra.mxu0 0.0
    %1812 = vmatprep.subr.mxu0 0.0
    %1813 = vmatpush2.msra.mxu0 0.0
    %1814 = vmatprep.subr.mxu0 0.0
    %1815 = vmatpush2.msra.mxu0 0.0
    %1816 = vmatprep.subr.mxu0 0.0
    %1817 = vmatpush2.msra.mxu0 0.0
    %1818 = vmatprep.subr.mxu0 0.0
    %1819 = vmatpush2.msra.mxu0 0.0
    %1820 = vmatprep.subr.mxu0 0.0
    %1821 = vmatpush2.msra.mxu0 0.0
    %1822 = vmatprep.subr.mxu0 0.0
    %1823 = vmatpush2.msra.mxu0 0.0
    %1824 = vmatprep.subr.mxu0 0.0
    %1825 = vmatpush2.msra.mxu0 0.0
    %1826 = vmatprep.subr.mxu0 0.0
    %1827 = vmatpush2.msra.mxu0 0.0
    %1828 = vmatprep.subr.mxu0 0.0
    %1829 = vmatpush2.msra.mxu0 0.0
    %1830 = vmatprep.subr.mxu0 0.0
    %1831 = vmatpush2.msra.mxu0 0.0
    %1832 = vmatprep.subr.mxu0 0.0
    %1833 = vmatpush2.msra.mxu0 0.0
    %1834 = vmatprep.subr.mxu0 0.0
    %1835 = vmatpush2.msra.mxu0 0.0
    %1836 = vmatprep.subr.mxu0 0.0
    %1837 = vmatpush2.msra.mxu0 0.0
    %1838 = vmatprep.subr.mxu0 0.0
    %1839 = vmatpush2.msra.mxu0 0.0
    %1840 = vmatprep.mubr.f32.mxu0 0.0
    %v1841 = vand.u32 %v1182, 4294901760
    %1842 = vmatmul.mubr.f32.gmra.mxu0 %v1841
    %v1843 = vpop.f32.mrf.mxu0
    %v1844 = vadd.f32 %v1757, %v1843
    %v1845 = vpop.f32.mrf.mxu0
    %1846 = vdwg.mxu0
    %1847 = vst [vmem:[%s7] sm:$0xff] %v1844
    // Predicated region
    $region38: #{_forward_impl.1} parent=1 // pred_check
      _
    $region39: #{_forward_impl.1} parent=1 // pred_check_branch
      %1849 = sbr.rel (0) target = $region41
    $region40: #{_forward_impl.1} parent=1 // pred_region
      _
    $region41: #{_forward_impl.1} parent=1 // pred_fallthru
      _
    // Predicated region
    $region42: #{_forward_impl.1} parent=1 // pred_check
      _
    $region43: #{_forward_impl.1} parent=1 // pred_check_branch
      %1851 = sbr.rel (0) target = $region45
    $region44: #{_forward_impl.1} parent=1 // pred_region
      _
    $region45: #{_forward_impl.1} parent=1 // pred_fallthru
      _
    %1852 = vsyncpa [#allocation3], 1
    %1853 = vsyncpa [#allocation5], 1

// kernel: _forward_impl.1
$region0: #{_forward_impl.1}
  #allocation0 [shape = 'u32[]', space=smem, size = 0x4, offset = 0x4, fixed_abs, tag = 'smem constant byte address 0x4 - core index']
  #allocation1 [shape = 'u32[144,128]{1,0:T(1,128)}', space=vmem, size = 0x12000, scoped, tag = 'internal scratch']
  %s0 = inlined_call_operand.vmem [shape: f32[8,4], index: 0, kind: input, shape index: {}]
  %s1 = inlined_call_operand.vmem [shape: f32[4,128], index: 1, kind: input, shape index: {}]
  %s2 = inlined_call_operand.vmem [shape: f32[1,128], index: 2, kind: input, shape index: {}]
  %s3 = inlined_call_operand.hbm [shape: f32[128,128], index: 3, kind: input, shape index: {}]
  %s4 = inlined_call_operand.vmem [shape: f32[1,128], index: 4, kind: input, shape index: {}]
  %s5 = inlined_call_operand.hbm [shape: f32[128,128], index: 5, kind: input, shape index: {}]
  %s6 = inlined_call_operand.vmem [shape: f32[1,128], index: 6, kind: input, shape index: {}]
  %s7 = inlined_call_operand.vmem [shape: f32[8,128], index: 7, kind: output, shape index: {}]
  %s8 = sld [smem:[#allocation0]]
  $region46: #{_forward_impl.1} parent=0
    _
  %s10 = ssub.s32 1, %s8
  %s11 = scalar_select 0, %s10, %s8
  $region1: #{_forward_impl.1} parent=0
    #allocation2 [shape = 'u8[65536]{0}', space=vmem, size = 0x10000, scoped, tag = 'input window, operand 3, single buffered']
    #allocation3 [shape = 's32[1]{0}', space=sflag, size = 0x4, scoped, tag = 'scoped memory for _forward_impl.1']
    #allocation4 [shape = 'u8[65536]{0}', space=vmem, size = 0x10000, scoped, tag = 'input window, operand 5, single buffered']
    #allocation5 [shape = 's32[1]{0}', space=sflag, size = 0x4, scoped, tag = 'scoped memory for _forward_impl.1']
    %12 = vsyncpa [#allocation3], 0
    %13 = vsyncpa [#allocation5], 0
    // Predicated region
    $region2: #{_forward_impl.1} parent=1 // pred_check
      _
    $region3: #{_forward_impl.1} parent=1 // pred_check_branch
      %15 = sbr.rel (0) target = $region5
    $region4: #{_forward_impl.1} parent=1 // pred_region
      _
    $region5: #{_forward_impl.1} parent=1 // pred_fallthru
      _
    // Predicated region
    $region6: #{_forward_impl.1} parent=1 // pred_check
      _
    $region7: #{_forward_impl.1} parent=1 // pred_check_branch
      %17 = sbr.rel (0) target = $region9
    $region8: #{_forward_impl.1} parent=1 // pred_region
      _
    $region9: #{_forward_impl.1} parent=1 // pred_fallthru
      _
    // Predicated region
    $region10: #{_forward_impl.1} parent=1 // pred_check
      _
    $region11: #{_forward_impl.1} parent=1 // pred_check_branch
      %19 = sbr.rel (0) target = $region13
    $region12: #{_forward_impl.1} parent=1 // pred_region
      _
    $region13: #{_forward_impl.1} parent=1 // pred_fallthru
      _
    // Predicated region
    $region14: #{_forward_impl.1} parent=1 // pred_check
      _
    $region15: #{_forward_impl.1} parent=1 // pred_check_branch
      %21 = sbr.rel (0) target = $region17
    $region16: #{_forward_impl.1} parent=1 // pred_region
      %s23 = ssub.s32 2048, 2048
      %24 = vsyncadd [#allocation3], %s23
      %s25 = sshll.u32 [#allocation2], 4
      %s26 = int_to_ptr.vmem [resolvable:$true] %s25
      %31 = dma.hbm_to_vmem [thread:$0]  %s3, 2048, %s26, [#allocation3], 128, 128, 8
    $region17: #{_forward_impl.1} parent=1 // pred_fallthru
      _
    // Predicated region
    $region18: #{_forward_impl.1} parent=1 // pred_check
      _
    $region19: #{_forward_impl.1} parent=1 // pred_check_branch
      %33 = sbr.rel (0) target = $region21
    $region20: #{_forward_impl.1} parent=1 // pred_region
      _
    $region21: #{_forward_impl.1} parent=1 // pred_fallthru
      _
    // Predicated region
    $region22: #{_forward_impl.1} parent=1 // pred_check
      _
    $region23: #{_forward_impl.1} parent=1 // pred_check_branch
      %35 = sbr.rel (0) target = $region25
    $region24: #{_forward_impl.1} parent=1 // pred_region
      %s37 = ssub.s32 2048, 2048
      %38 = vsyncadd [#allocation5], %s37
      %s39 = sshll.u32 [#allocation4], 4
      %s40 = int_to_ptr.vmem [resolvable:$true] %s39
      %45 = dma.hbm_to_vmem [thread:$0]  %s5, 2048, %s40, [#allocation5], 128, 128, 8
    $region25: #{_forward_impl.1} parent=1 // pred_fallthru
      _
    // Predicated region
    $region26: #{_forward_impl.1} parent=1 // pred_check
      _
    $region27: #{_forward_impl.1} parent=1 // pred_check_branch
      %47 = sbr.rel (0) target = $region29
    $region28: #{_forward_impl.1} parent=1 // pred_region
      _
    $region29: #{_forward_impl.1} parent=1 // pred_fallthru
      _
    // Predicated region
    $region30: #{_forward_impl.1} parent=1 // pred_check
      _
    $region31: #{_forward_impl.1} parent=1 // pred_check_branch
      %49 = sbr.rel (0) target = $region33
    $region32: #{_forward_impl.1} parent=1 // pred_region
      %50 = dma.done [#allocation3], 2048
    $region33: #{_forward_impl.1} parent=1 // pred_fallthru
      _
    // Predicated region
    $region34: #{_forward_impl.1} parent=1 // pred_check
      _
    $region35: #{_forward_impl.1} parent=1 // pred_check_branch
      %52 = sbr.rel (0) target = $region37
    $region36: #{_forward_impl.1} parent=1 // pred_region
      %53 = dma.done [#allocation5], 2048
    $region37: #{_forward_impl.1} parent=1 // pred_fallthru
      _
    %v54 = vld [vmem:[%s0] sm:$0xff]
    %v55 = vld [vmem:[%s1] sm:$0xf]
    %v56 = vld [vmem:[%s2] sm:$0x1]
    %v58 = vlaneseq
    %v59 = vshrl.u32 %v58, 7
    %v60 = vsub.s32 0, %v59
    %v61 = vrot.slane %v56, %v60
    %vm63 = vcmask 31744
    %v65 = vsel %vm63, %v54, 0
    %vm67 = vcmask 1043456
    %v69 = vsel %vm67, %v55, 0
    %71 = vmatprep.subr.mxu0 0.0
    %72 = vmatpush1.msra.mxu0 0.0
    %73 = vmatprep.subr.mxu0 0.0
    %74 = vmatpush1.msra.mxu0 0.0
    %75 = vmatprep.subr.mxu0 0.0
    %76 = vmatpush1.msra.mxu0 0.0
    %77 = vmatprep.subr.mxu0 0.0
    %78 = vmatpush1.msra.mxu0 0.0
    %79 = vmatprep.subr.mxu0 0.0
    %80 = vmatpush1.msra.mxu0 0.0
    %81 = vmatprep.subr.mxu0 0.0
    %82 = vmatpush1.msra.mxu0 0.0
    %83 = vmatprep.subr.mxu0 0.0
    %84 = vmatpush1.msra.mxu0 0.0
    %85 = vmatprep.subr.mxu0 0.0
    %86 = vmatpush1.msra.mxu0 0.0
    %87 = vmatprep.subr.mxu0 0.0
    %88 = vmatpush1.msra.mxu0 0.0
    %89 = vmatprep.subr.mxu0 0.0
    %90 = vmatpush1.msra.mxu0 0.0
    %91 = vmatprep.subr.mxu0 0.0
    %92 = vmatpush1.msra.mxu0 0.0
    %93 = vmatprep.subr.mxu0 0.0
    %94 = vmatpush1.msra.mxu0 0.0
    %95 = vmatprep.subr.mxu0 0.0
    %96 = vmatpush1.msra.mxu0 0.0
    %97 = vmatprep.subr.mxu0 0.0
    %98 = vmatpush1.msra.mxu0 0.0
    %99 = vmatprep.subr.mxu0 0.0
    %100 = vmatpush1.msra.mxu0 0.0
    %101 = vmatprep.subr.mxu0 0.0
    %v102 = vand.u32 %v69, 4294901760
    %103 = vmatpush1.msra.mxu0 %v102
    %104 = vmatprep.subr.mxu0 0.0
    %105 = vmatpush2.msra.mxu0 0.0
    %106 = vmatprep.subr.mxu0 0.0
    %107 = vmatpush2.msra.mxu0 0.0
    %108 = vmatprep.subr.mxu0 0.0
    %109 = vmatpush2.msra.mxu0 0.0
    %110 = vmatprep.subr.mxu0 0.0
    %111 = vmatpush2.msra.mxu0 0.0
    %112 = vmatprep.subr.mxu0 0.0
    %113 = vmatpush2.msra.mxu0 0.0
    %114 = vmatprep.subr.mxu0 0.0
    %115 = vmatpush2.msra.mxu0 0.0
    %116 = vmatprep.subr.mxu0 0.0
    %117 = vmatpush2.msra.mxu0 0.0
    %118 = vmatprep.subr.mxu0 0.0
    %119 = vmatpush2.msra.mxu0 0.0
    %120 = vmatprep.subr.mxu0 0.0
    %121 = vmatpush2.msra.mxu0 0.0
    %122 = vmatprep.subr.mxu0 0.0
    %123 = vmatpush2.msra.mxu0 0.0
    %124 = vmatprep.subr.mxu0 0.0
    %125 = vmatpush2.msra.mxu0 0.0
    %126 = vmatprep.subr.mxu0 0.0
    %127 = vmatpush2.msra.mxu0 0.0
    %128 = vmatprep.subr.mxu0 0.0
    %129 = vmatpush2.msra.mxu0 0.0
    %130 = vmatprep.subr.mxu0 0.0
    %131 = vmatpush2.msra.mxu0 0.0
    %132 = vmatprep.subr.mxu0 0.0
    %133 = vmatpush2.msra.mxu0 0.0
    %134 = vmatprep.subr.mxu0 0.0
    %135 = vmatpush2.msra.mxu0 0.0
    %136 = vmatprep.mubr.f32.mxu0 0.0
    %v137 = vand.u32 %v65, 4294901760
    %v138 = vsub.f32 %v65, %v137
    %v139 = vand.u32 %v138, 4294901760
    %v140 = vsub.f32 %v138, %v139
    %v141 = vand.u32 %v140, 4294901760
    %142 = vmatmul.mubr.f32.gmra.mxu0 %v141
    %v143 = vpop.f32.mrf.mxu0
    %v144 = vadd.f32 %v61, %v143
    %v145 = vpop.f32.mrf.mxu0
    %146 = vdwg.mxu0
    %147 = vmatprep.subr.mxu0 0.0
    %148 = vmatpush1.msra.mxu0 0.0
    %149 = vmatprep.subr.mxu0 0.0
    %150 = vmatpush1.msra.mxu0 0.0
    %151 = vmatprep.subr.mxu0 0.0
    %152 = vmatpush1.msra.mxu0 0.0
    %153 = vmatprep.subr.mxu0 0.0
    %154 = vmatpush1.msra.mxu0 0.0
    %155 = vmatprep.subr.mxu0 0.0
    %156 = vmatpush1.msra.mxu0 0.0
    %157 = vmatprep.subr.mxu0 0.0
    %158 = vmatpush1.msra.mxu0 0.0
    %159 = vmatprep.subr.mxu0 0.0
    %160 = vmatpush1.msra.mxu0 0.0
    %161 = vmatprep.subr.mxu0 0.0
    %162 = vmatpush1.msra.mxu0 0.0
    %163 = vmatprep.subr.mxu0 0.0
    %164 = vmatpush1.msra.mxu0 0.0
    %165 = vmatprep.subr.mxu0 0.0
    %166 = vmatpush1.msra.mxu0 0.0
    %167 = vmatprep.subr.mxu0 0.0
    %168 = vmatpush1.msra.mxu0 0.0
    %169 = vmatprep.subr.mxu0 0.0
    %170 = vmatpush1.msra.mxu0 0.0
    %171 = vmatprep.subr.mxu0 0.0
    %172 = vmatpush1.msra.mxu0 0.0
    %173 = vmatprep.subr.mxu0 0.0
    %174 = vmatpush1.msra.mxu0 0.0
    %175 = vmatprep.subr.mxu0 0.0
    %176 = vmatpush1.msra.mxu0 0.0
    %177 = vmatprep.subr.mxu0 0.0
    %v178 = vand.u32 %v69, 4294901760
    %v179 = vsub.f32 %v69, %v178
    %v180 = vand.u32 %v179, 4294901760
    %v181 = vsub.f32 %v179, %v180
    %v182 = vand.u32 %v181, 4294901760
    %183 = vmatpush1.msra.mxu0 %v182
    %184 = vmatprep.subr.mxu0 0.0
    %185 = vmatpush2.msra.mxu0 0.0
    %186 = vmatprep.subr.mxu0 0.0
    %187 = vmatpush2.msra.mxu0 0.0
    %188 = vmatprep.subr.mxu0 0.0
    %189 = vmatpush2.msra.mxu0 0.0
    %190 = vmatprep.subr.mxu0 0.0
    %191 = vmatpush2.msra.mxu0 0.0
    %192 = vmatprep.subr.mxu0 0.0
    %193 = vmatpush2.msra.mxu0 0.0
    %194 = vmatprep.subr.mxu0 0.0
    %195 = vmatpush2.msra.mxu0 0.0
    %196 = vmatprep.subr.mxu0 0.0
    %197 = vmatpush2.msra.mxu0 0.0
    %198 = vmatprep.subr.mxu0 0.0
    %199 = vmatpush2.msra.mxu0 0.0
    %200 = vmatprep.subr.mxu0 0.0
    %201 = vmatpush2.msra.mxu0 0.0
    %202 = vmatprep.subr.mxu0 0.0
    %203 = vmatpush2.msra.mxu0 0.0
    %204 = vmatprep.subr.mxu0 0.0
    %205 = vmatpush2.msra.mxu0 0.0
    %206 = vmatprep.subr.mxu0 0.0
    %207 = vmatpush2.msra.mxu0 0.0
    %208 = vmatprep.subr.mxu0 0.0
    %209 = vmatpush2.msra.mxu0 0.0
    %210 = vmatprep.subr.mxu0 0.0
    %211 = vmatpush2.msra.mxu0 0.0
    %212 = vmatprep.subr.mxu0 0.0
    %213 = vmatpush2.msra.mxu0 0.0
    %214 = vmatprep.subr.mxu0 0.0
    %215 = vmatpush2.msra.mxu0 0.0
    %216 = vmatprep.mubr.f32.mxu0 0.0
    %v217 = vand.u32 %v65, 4294901760
    %218 = vmatmul.mubr.f32.gmra.mxu0 %v217
    %v219 = vpop.f32.mrf.mxu0
    %v220 = vadd.f32 %v144, %v219
    %v221 = vpop.f32.mrf.mxu0
    %222 = vdwg.mxu0
    %223 = vmatprep.subr.mxu0 0.0
    %224 = vmatpush1.msra.mxu0 0.0
    %225 = vmatprep.subr.mxu0 0.0
    %226 = vmatpush1.msra.mxu0 0.0
    %227 = vmatprep.subr.mxu0 0.0
    %228 = vmatpush1.msra.mxu0 0.0
    %229 = vmatprep.subr.mxu0 0.0
    %230 = vmatpush1.msra.mxu0 0.0
    %231 = vmatprep.subr.mxu0 0.0
    %232 = vmatpush1.msra.mxu0 0.0
    %233 = vmatprep.subr.mxu0 0.0
    %234 = vmatpush1.msra.mxu0 0.0
    %235 = vmatprep.subr.mxu0 0.0
    %236 = vmatpush1.msra.mxu0 0.0
    %237 = vmatprep.subr.mxu0 0.0
    %238 = vmatpush1.msra.mxu0 0.0
    %239 = vmatprep.subr.mxu0 0.0
    %240 = vmatpush1.msra.mxu0 0.0
    %241 = vmatprep.subr.mxu0 0.0
    %242 = vmatpush1.msra.mxu0 0.0
    %243 = vmatprep.subr.mxu0 0.0
    %244 = vmatpush1.msra.mxu0 0.0
    %245 = vmatprep.subr.mxu0 0.0
    %246 = vmatpush1.msra.mxu0 0.0
    %247 = vmatprep.subr.mxu0 0.0
    %248 = vmatpush1.msra.mxu0 0.0
    %249 = vmatprep.subr.mxu0 0.0
    %250 = vmatpush1.msra.mxu0 0.0
    %251 = vmatprep.subr.mxu0 0.0
    %252 = vmatpush1.msra.mxu0 0.0
    %253 = vmatprep.subr.mxu0 0.0
    %v254 = vand.u32 %v69, 4294901760
    %v255 = vsub.f32 %v69, %v254
    %256 = vmatpush1.msra.mxu0 %v255
    %257 = vmatprep.subr.mxu0 0.0
    %258 = vmatpush2.msra.mxu0 0.0
    %259 = vmatprep.subr.mxu0 0.0
    %260 = vmatpush2.msra.mxu0 0.0
    %261 = vmatprep.subr.mxu0 0.0
    %262 = vmatpush2.msra.mxu0 0.0
    %263 = vmatprep.subr.mxu0 0.0
    %264 = vmatpush2.msra.mxu0 0.0
    %265 = vmatprep.subr.mxu0 0.0
    %266 = vmatpush2.msra.mxu0 0.0
    %267 = vmatprep.subr.mxu0 0.0
    %268 = vmatpush2.msra.mxu0 0.0
    %269 = vmatprep.subr.mxu0 0.0
    %270 = vmatpush2.msra.mxu0 0.0
    %271 = vmatprep.subr.mxu0 0.0
    %272 = vmatpush2.msra.mxu0 0.0
    %273 = vmatprep.subr.mxu0 0.0
    %274 = vmatpush2.msra.mxu0 0.0
    %275 = vmatprep.subr.mxu0 0.0
    %276 = vmatpush2.msra.mxu0 0.0
    %277 = vmatprep.subr.mxu0 0.0
    %278 = vmatpush2.msra.mxu0 0.0
    %279 = vmatprep.subr.mxu0 0.0
    %280 = vmatpush2.msra.mxu0 0.0
    %281 = vmatprep.subr.mxu0 0.0
    %282 = vmatpush2.msra.mxu0 0.0
    %283 = vmatprep.subr.mxu0 0.0
    %284 = vmatpush2.msra.mxu0 0.0
    %285 = vmatprep.subr.mxu0 0.0
    %286 = vmatpush2.msra.mxu0 0.0
    %287 = vmatprep.subr.mxu0 0.0
    %288 = vmatpush2.msra.mxu0 0.0
    %289 = vmatprep.mubr.f32.mxu0 0.0
    %v290 = vand.u32 %v65, 4294901760
    %v291 = vsub.f32 %v65, %v290
    %292 = vmatmul.mubr.f32.gmra.mxu0 %v291
    %v293 = vpop.f32.mrf.mxu0
    %v294 = vadd.f32 %v220, %v293
    %v295 = vpop.f32.mrf.mxu0
    %296 = vdwg.mxu0
    %297 = vmatprep.subr.mxu0 0.0
    %298 = vmatpush1.msra.mxu0 0.0
    %299 = vmatprep.subr.mxu0 0.0
    %300 = vmatpush1.msra.mxu0 0.0
    %301 = vmatprep.subr.mxu0 0.0
    %302 = vmatpush1.msra.mxu0 0.0
    %303 = vmatprep.subr.mxu0 0.0
    %304 = vmatpush1.msra.mxu0 0.0
    %305 = vmatprep.subr.mxu0 0.0
    %306 = vmatpush1.msra.mxu0 0.0
    %307 = vmatprep.subr.mxu0 0.0
    %308 = vmatpush1.msra.mxu0 0.0
    %309 = vmatprep.subr.mxu0 0.0
    %310 = vmatpush1.msra.mxu0 0.0
    %311 = vmatprep.subr.mxu0 0.0
    %312 = vmatpush1.msra.mxu0 0.0
    %313 = vmatprep.subr.mxu0 0.0
    %314 = vmatpush1.msra.mxu0 0.0
    %315 = vmatprep.subr.mxu0 0.0
    %316 = vmatpush1.msra.mxu0 0.0
    %317 = vmatprep.subr.mxu0 0.0
    %318 = vmatpush1.msra.mxu0 0.0
    %319 = vmatprep.subr.mxu0 0.0
    %320 = vmatpush1.msra.mxu0 0.0
    %321 = vmatprep.subr.mxu0 0.0
    %322 = vmatpush1.msra.mxu0 0.0
    %323 = vmatprep.subr.mxu0 0.0
    %324 = vmatpush1.msra.mxu0 0.0
    %325 = vmatprep.subr.mxu0 0.0
    %326 = vmatpush1.msra.mxu0 0.0
    %327 = vmatprep.subr.mxu0 0.0
    %v328 = vand.u32 %v69, 4294901760
    %329 = vmatpush1.msra.mxu0 %v328
    %330 = vmatprep.subr.mxu0 0.0
    %331 = vmatpush2.msra.mxu0 0.0
    %332 = vmatprep.subr.mxu0 0.0
    %333 = vmatpush2.msra.mxu0 0.0
    %334 = vmatprep.subr.mxu0 0.0
    %335 = vmatpush2.msra.mxu0 0.0
    %336 = vmatprep.subr.mxu0 0.0
    %337 = vmatpush2.msra.mxu0 0.0
    %338 = vmatprep.subr.mxu0 0.0
    %339 = vmatpush2.msra.mxu0 0.0
    %340 = vmatprep.subr.mxu0 0.0
    %341 = vmatpush2.msra.mxu0 0.0
    %342 = vmatprep.subr.mxu0 0.0
    %343 = vmatpush2.msra.mxu0 0.0
    %344 = vmatprep.subr.mxu0 0.0
    %345 = vmatpush2.msra.mxu0 0.0
    %346 = vmatprep.subr.mxu0 0.0
    %347 = vmatpush2.msra.mxu0 0.0
    %348 = vmatprep.subr.mxu0 0.0
    %349 = vmatpush2.msra.mxu0 0.0
    %350 = vmatprep.subr.mxu0 0.0
    %351 = vmatpush2.msra.mxu0 0.0
    %352 = vmatprep.subr.mxu0 0.0
    %353 = vmatpush2.msra.mxu0 0.0
    %354 = vmatprep.subr.mxu0 0.0
    %355 = vmatpush2.msra.mxu0 0.0
    %356 = vmatprep.subr.mxu0 0.0
    %357 = vmatpush2.msra.mxu0 0.0
    %358 = vmatprep.subr.mxu0 0.0
    %359 = vmatpush2.msra.mxu0 0.0
    %360 = vmatprep.subr.mxu0 0.0
    %361 = vmatpush2.msra.mxu0 0.0
    %362 = vmatprep.mubr.f32.mxu0 0.0
    %v363 = vand.u32 %v65, 4294901760
    %v364 = vsub.f32 %v65, %v363
    %v365 = vand.u32 %v364, 4294901760
    %366 = vmatmul.mubr.f32.gmra.mxu0 %v365
    %v367 = vpop.f32.mrf.mxu0
    %v368 = vadd.f32 %v294, %v367
    %v369 = vpop.f32.mrf.mxu0
    %370 = vdwg.mxu0
    %371 = vmatprep.subr.mxu0 0.0
    %372 = vmatpush1.msra.mxu0 0.0
    %373 = vmatprep.subr.mxu0 0.0
    %374 = vmatpush1.msra.mxu0 0.0
    %375 = vmatprep.subr.mxu0 0.0
    %376 = vmatpush1.msra.mxu0 0.0
    %377 = vmatprep.subr.mxu0 0.0
    %378 = vmatpush1.msra.mxu0 0.0
    %379 = vmatprep.subr.mxu0 0.0
    %380 = vmatpush1.msra.mxu0 0.0
    %381 = vmatprep.subr.mxu0 0.0
    %382 = vmatpush1.msra.mxu0 0.0
    %383 = vmatprep.subr.mxu0 0.0
    %384 = vmatpush1.msra.mxu0 0.0
    %385 = vmatprep.subr.mxu0 0.0
    %386 = vmatpush1.msra.mxu0 0.0
    %387 = vmatprep.subr.mxu0 0.0
    %388 = vmatpush1.msra.mxu0 0.0
    %389 = vmatprep.subr.mxu0 0.0
    %390 = vmatpush1.msra.mxu0 0.0
    %391 = vmatprep.subr.mxu0 0.0
    %392 = vmatpush1.msra.mxu0 0.0
    %393 = vmatprep.subr.mxu0 0.0
    %394 = vmatpush1.msra.mxu0 0.0
    %395 = vmatprep.subr.mxu0 0.0
    %396 = vmatpush1.msra.mxu0 0.0
    %397 = vmatprep.subr.mxu0 0.0
    %398 = vmatpush1.msra.mxu0 0.0
    %399 = vmatprep.subr.mxu0 0.0
    %400 = vmatpush1.msra.mxu0 0.0
    %401 = vmatprep.subr.mxu0 0.0
    %v402 = vand.u32 %v69, 4294901760
    %v403 = vsub.f32 %v69, %v402
    %v404 = vand.u32 %v403, 4294901760
    %405 = vmatpush1.msra.mxu0 %v404
    %406 = vmatprep.subr.mxu0 0.0
    %407 = vmatpush2.msra.mxu0 0.0
    %408 = vmatprep.subr.mxu0 0.0
    %409 = vmatpush2.msra.mxu0 0.0
    %410 = vmatprep.subr.mxu0 0.0
    %411 = vmatpush2.msra.mxu0 0.0
    %412 = vmatprep.subr.mxu0 0.0
    %413 = vmatpush2.msra.mxu0 0.0
    %414 = vmatprep.subr.mxu0 0.0
    %415 = vmatpush2.msra.mxu0 0.0
    %416 = vmatprep.subr.mxu0 0.0
    %417 = vmatpush2.msra.mxu0 0.0
    %418 = vmatprep.subr.mxu0 0.0
    %419 = vmatpush2.msra.mxu0 0.0
    %420 = vmatprep.subr.mxu0 0.0
    %421 = vmatpush2.msra.mxu0 0.0
    %422 = vmatprep.subr.mxu0 0.0
    %423 = vmatpush2.msra.mxu0 0.0
    %424 = vmatprep.subr.mxu0 0.0
    %425 = vmatpush2.msra.mxu0 0.0
    %426 = vmatprep.subr.mxu0 0.0
    %427 = vmatpush2.msra.mxu0 0.0
    %428 = vmatprep.subr.mxu0 0.0
    %429 = vmatpush2.msra.mxu0 0.0
    %430 = vmatprep.subr.mxu0 0.0
    %431 = vmatpush2.msra.mxu0 0.0
    %432 = vmatprep.subr.mxu0 0.0
    %433 = vmatpush2.msra.mxu0 0.0
    %434 = vmatprep.subr.mxu0 0.0
    %435 = vmatpush2.msra.mxu0 0.0
    %436 = vmatprep.subr.mxu0 0.0
    %437 = vmatpush2.msra.mxu0 0.0
    %438 = vmatprep.mubr.f32.mxu0 0.0
    %v439 = vand.u32 %v65, 4294901760
    %440 = vmatmul.mubr.f32.gmra.mxu0 %v439
    %v441 = vpop.f32.mrf.mxu0
    %v442 = vadd.f32 %v368, %v441
    %v443 = vpop.f32.mrf.mxu0
    %444 = vdwg.mxu0
    %445 = vmatprep.subr.mxu0 0.0
    %446 = vmatpush1.msra.mxu0 0.0
    %447 = vmatprep.subr.mxu0 0.0
    %448 = vmatpush1.msra.mxu0 0.0
    %449 = vmatprep.subr.mxu0 0.0
    %450 = vmatpush1.msra.mxu0 0.0
    %451 = vmatprep.subr.mxu0 0.0
    %452 = vmatpush1.msra.mxu0 0.0
    %453 = vmatprep.subr.mxu0 0.0
    %454 = vmatpush1.msra.mxu0 0.0
    %455 = vmatprep.subr.mxu0 0.0
    %456 = vmatpush1.msra.mxu0 0.0
    %457 = vmatprep.subr.mxu0 0.0
    %458 = vmatpush1.msra.mxu0 0.0
    %459 = vmatprep.subr.mxu0 0.0
    %460 = vmatpush1.msra.mxu0 0.0
    %461 = vmatprep.subr.mxu0 0.0
    %462 = vmatpush1.msra.mxu0 0.0
    %463 = vmatprep.subr.mxu0 0.0
    %464 = vmatpush1.msra.mxu0 0.0
    %465 = vmatprep.subr.mxu0 0.0
    %466 = vmatpush1.msra.mxu0 0.0
    %467 = vmatprep.subr.mxu0 0.0
    %468 = vmatpush1.msra.mxu0 0.0
    %469 = vmatprep.subr.mxu0 0.0
    %470 = vmatpush1.msra.mxu0 0.0
    %471 = vmatprep.subr.mxu0 0.0
    %472 = vmatpush1.msra.mxu0 0.0
    %473 = vmatprep.subr.mxu0 0.0
    %474 = vmatpush1.msra.mxu0 0.0
    %475 = vmatprep.subr.mxu0 0.0
    %v476 = vand.u32 %v69, 4294901760
    %477 = vmatpush1.msra.mxu0 %v476
    %478 = vmatprep.subr.mxu0 0.0
    %479 = vmatpush2.msra.mxu0 0.0
    %480 = vmatprep.subr.mxu0 0.0
    %481 = vmatpush2.msra.mxu0 0.0
    %482 = vmatprep.subr.mxu0 0.0
    %483 = vmatpush2.msra.mxu0 0.0
    %484 = vmatprep.subr.mxu0 0.0
    %485 = vmatpush2.msra.mxu0 0.0
    %486 = vmatprep.subr.mxu0 0.0
    %487 = vmatpush2.msra.mxu0 0.0
    %488 = vmatprep.subr.mxu0 0.0
    %489 = vmatpush2.msra.mxu0 0.0
    %490 = vmatprep.subr.mxu0 0.0
    %491 = vmatpush2.msra.mxu0 0.0
    %492 = vmatprep.subr.mxu0 0.0
    %493 = vmatpush2.msra.mxu0 0.0
    %494 = vmatprep.subr.mxu0 0.0
    %495 = vmatpush2.msra.mxu0 0.0
    %496 = vmatprep.subr.mxu0 0.0
    %497 = vmatpush2.msra.mxu0 0.0
    %498 = vmatprep.subr.mxu0 0.0
    %499 = vmatpush2.msra.mxu0 0.0
    %500 = vmatprep.subr.mxu0 0.0
    %501 = vmatpush2.msra.mxu0 0.0
    %502 = vmatprep.subr.mxu0 0.0
    %503 = vmatpush2.msra.mxu0 0.0
    %504 = vmatprep.subr.mxu0 0.0
    %505 = vmatpush2.msra.mxu0 0.0
    %506 = vmatprep.subr.mxu0 0.0
    %507 = vmatpush2.msra.mxu0 0.0
    %508 = vmatprep.subr.mxu0 0.0
    %509 = vmatpush2.msra.mxu0 0.0
    %510 = vmatprep.mubr.f32.mxu0 0.0
    %v511 = vand.u32 %v65, 4294901760
    %512 = vmatmul.mubr.f32.gmra.mxu0 %v511
    %v513 = vpop.f32.mrf.mxu0
    %v514 = vadd.f32 %v442, %v513
    %v515 = vpop.f32.mrf.mxu0
    %516 = vdwg.mxu0
    %v517 = vtanh.pop %v514
    %v518 = vld [vmem:[#allocation2] sm:$0xff]
    %v519 = vld [vmem:[#allocation2 + $0x8] sm:$0xff]
    %v520 = vld [vmem:[#allocation2 + $0x10] sm:$0xff]
    %v521 = vld [vmem:[#allocation2 + $0x18] sm:$0xff]
    %v522 = vld [vmem:[#allocation2 + $0x20] sm:$0xff]
    %v523 = vld [vmem:[#allocation2 + $0x28] sm:$0xff]
    %v524 = vld [vmem:[#allocation2 + $0x30] sm:$0xff]
    %v525 = vld [vmem:[#allocation2 + $0x38] sm:$0xff]
    %v526 = vld [vmem:[#allocation2 + $0x40] sm:$0xff]
    %v527 = vld [vmem:[#allocation2 + $0x48] sm:$0xff]
    %v528 = vld [vmem:[#allocation2 + $0x50] sm:$0xff]
    %v529 = vld [vmem:[#allocation2 + $0x58] sm:$0xff]
    %v530 = vld [vmem:[#allocation2 + $0x60] sm:$0xff]
    %v531 = vld [vmem:[#allocation2 + $0x68] sm:$0xff]
    %v532 = vld [vmem:[#allocation2 + $0x70] sm:$0xff]
    %v533 = vld [vmem:[#allocation2 + $0x78] sm:$0xff]
    %v534 = vld [vmem:[%s4] sm:$0x1]
    %v536 = vlaneseq
    %v537 = vshrl.u32 %v536, 7
    %v538 = vsub.s32 0, %v537
    %v539 = vrot.slane %v534, %v538
    %541 = vmatprep.subr.mxu0 0.0
    %v542 = vand.u32 %v533, 4294901760
    %543 = vmatpush1.msra.mxu0 %v542
    %544 = vmatprep.subr.mxu0 0.0
    %v545 = vand.u32 %v532, 4294901760
    %546 = vmatpush1.msra.mxu0 %v545
    %547 = vmatprep.subr.mxu0 0.0
    %v548 = vand.u32 %v531, 4294901760
    %549 = vmatpush1.msra.mxu0 %v548
    %550 = vmatprep.subr.mxu0 0.0
    %v551 = vand.u32 %v530, 4294901760
    %552 = vmatpush1.msra.mxu0 %v551
    %553 = vmatprep.subr.mxu0 0.0
    %v554 = vand.u32 %v529, 4294901760
    %555 = vmatpush1.msra.mxu0 %v554
    %556 = vmatprep.subr.mxu0 0.0
    %v557 = vand.u32 %v528, 4294901760
    %558 = vmatpush1.msra.mxu0 %v557
    %559 = vmatprep.subr.mxu0 0.0
    %v560 = vand.u32 %v527, 4294901760
    %561 = vmatpush1.msra.mxu0 %v560
    %562 = vmatprep.subr.mxu0 0.0
    %v563 = vand.u32 %v526, 4294901760
    %564 = vmatpush1.msra.mxu0 %v563
    %565 = vmatprep.subr.mxu0 0.0
    %v566 = vand.u32 %v525, 4294901760
    %567 = vmatpush1.msra.mxu0 %v566
    %568 = vmatprep.subr.mxu0 0.0
    %v569 = vand.u32 %v524, 4294901760
    %570 = vmatpush1.msra.mxu0 %v569
    %571 = vmatprep.subr.mxu0 0.0
    %v572 = vand.u32 %v523, 4294901760
    %573 = vmatpush1.msra.mxu0 %v572
    %574 = vmatprep.subr.mxu0 0.0
    %v575 = vand.u32 %v522, 4294901760
    %576 = vmatpush1.msra.mxu0 %v575
    %577 = vmatprep.subr.mxu0 0.0
    %v578 = vand.u32 %v521, 4294901760
    %579 = vmatpush1.msra.mxu0 %v578
    %580 = vmatprep.subr.mxu0 0.0
    %v581 = vand.u32 %v520, 4294901760
    %582 = vmatpush1.msra.mxu0 %v581
    %583 = vmatprep.subr.mxu0 0.0
    %v584 = vand.u32 %v519, 4294901760
    %585 = vmatpush1.msra.mxu0 %v584
    %586 = vmatprep.subr.mxu0 0.0
    %v587 = vand.u32 %v518, 4294901760
    %588 = vmatpush1.msra.mxu0 %v587
    %589 = vmatprep.subr.mxu0 0.0
    %590 = vmatpush2.msra.mxu0 0.0
    %591 = vmatprep.subr.mxu0 0.0
    %592 = vmatpush2.msra.mxu0 0.0
    %593 = vmatprep.subr.mxu0 0.0
    %594 = vmatpush2.msra.mxu0 0.0
    %595 = vmatprep.subr.mxu0 0.0
    %596 = vmatpush2.msra.mxu0 0.0
    %597 = vmatprep.subr.mxu0 0.0
    %598 = vmatpush2.msra.mxu0 0.0
    %599 = vmatprep.subr.mxu0 0.0
    %600 = vmatpush2.msra.mxu0 0.0
    %601 = vmatprep.subr.mxu0 0.0
    %602 = vmatpush2.msra.mxu0 0.0
    %603 = vmatprep.subr.mxu0 0.0
    %604 = vmatpush2.msra.mxu0 0.0
    %605 = vmatprep.subr.mxu0 0.0
    %606 = vmatpush2.msra.mxu0 0.0
    %607 = vmatprep.subr.mxu0 0.0
    %608 = vmatpush2.msra.mxu0 0.0
    %609 = vmatprep.subr.mxu0 0.0
    %610 = vmatpush2.msra.mxu0 0.0
    %611 = vmatprep.subr.mxu0 0.0
    %612 = vmatpush2.msra.mxu0 0.0
    %613 = vmatprep.subr.mxu0 0.0
    %614 = vmatpush2.msra.mxu0 0.0
    %615 = vmatprep.subr.mxu0 0.0
    %616 = vmatpush2.msra.mxu0 0.0
    %617 = vmatprep.subr.mxu0 0.0
    %618 = vmatpush2.msra.mxu0 0.0
    %619 = vmatprep.subr.mxu0 0.0
    %620 = vmatpush2.msra.mxu0 0.0
    %621 = vmatprep.mubr.f32.mxu0 0.0
    %v622 = vand.u32 %v517, 4294901760
    %v623 = vsub.f32 %v517, %v622
    %v624 = vand.u32 %v623, 4294901760
    %v625 = vsub.f32 %v623, %v624
    %v626 = vand.u32 %v625, 4294901760
    %627 = vmatmul.mubr.f32.gmra.mxu0 %v626
    %v628 = vpop.f32.mrf.mxu0
    %v629 = vadd.f32 %v539, %v628
    %v630 = vpop.f32.mrf.mxu0
    %631 = vdwg.mxu0
    %632 = vmatprep.subr.mxu0 0.0
    %v633 = vand.u32 %v533, 4294901760
    %v634 = vsub.f32 %v533, %v633
    %v635 = vand.u32 %v634, 4294901760
    %v636 = vsub.f32 %v634, %v635
    %v637 = vand.u32 %v636, 4294901760
    %638 = vmatpush1.msra.mxu0 %v637
    %639 = vmatprep.subr.mxu0 0.0
    %v640 = vand.u32 %v532, 4294901760
    %v641 = vsub.f32 %v532, %v640
    %v642 = vand.u32 %v641, 4294901760
    %v643 = vsub.f32 %v641, %v642
    %v644 = vand.u32 %v643, 4294901760
    %645 = vmatpush1.msra.mxu0 %v644
    %646 = vmatprep.subr.mxu0 0.0
    %v647 = vand.u32 %v531, 4294901760
    %v648 = vsub.f32 %v531, %v647
    %v649 = vand.u32 %v648, 4294901760
    %v650 = vsub.f32 %v648, %v649
    %v651 = vand.u32 %v650, 4294901760
    %652 = vmatpush1.msra.mxu0 %v651
    %653 = vmatprep.subr.mxu0 0.0
    %v654 = vand.u32 %v530, 4294901760
    %v655 = vsub.f32 %v530, %v654
    %v656 = vand.u32 %v655, 4294901760
    %v657 = vsub.f32 %v655, %v656
    %v658 = vand.u32 %v657, 4294901760
    %659 = vmatpush1.msra.mxu0 %v658
    %660 = vmatprep.subr.mxu0 0.0
    %v661 = vand.u32 %v529, 4294901760
    %v662 = vsub.f32 %v529, %v661
    %v663 = vand.u32 %v662, 4294901760
    %v664 = vsub.f32 %v662, %v663
    %v665 = vand.u32 %v664, 4294901760
    %666 = vmatpush1.msra.mxu0 %v665
    %667 = vmatprep.subr.mxu0 0.0
    %v668 = vand.u32 %v528, 4294901760
    %v669 = vsub.f32 %v528, %v668
    %v670 = vand.u32 %v669, 4294901760
    %v671 = vsub.f32 %v669, %v670
    %v672 = vand.u32 %v671, 4294901760
    %673 = vmatpush1.msra.mxu0 %v672
    %674 = vmatprep.subr.mxu0 0.0
    %v675 = vand.u32 %v527, 4294901760
    %v676 = vsub.f32 %v527, %v675
    %v677 = vand.u32 %v676, 4294901760
    %v678 = vsub.f32 %v676, %v677
    %v679 = vand.u32 %v678, 4294901760
    %680 = vmatpush1.msra.mxu0 %v679
    %681 = vmatprep.subr.mxu0 0.0
    %v682 = vand.u32 %v526, 4294901760
    %v683 = vsub.f32 %v526, %v682
    %v684 = vand.u32 %v683, 4294901760
    %v685 = vsub.f32 %v683, %v684
    %v686 = vand.u32 %v685, 4294901760
    %687 = vmatpush1.msra.mxu0 %v686
    %688 = vmatprep.subr.mxu0 0.0
    %v689 = vand.u32 %v525, 4294901760
    %v690 = vsub.f32 %v525, %v689
    %v691 = vand.u32 %v690, 4294901760
    %v692 = vsub.f32 %v690, %v691
    %v693 = vand.u32 %v692, 4294901760
    %694 = vmatpush1.msra.mxu0 %v693
    %695 = vmatprep.subr.mxu0 0.0
    %v696 = vand.u32 %v524, 4294901760
    %v697 = vsub.f32 %v524, %v696
    %v698 = vand.u32 %v697, 4294901760
    %v699 = vsub.f32 %v697, %v698
    %v700 = vand.u32 %v699, 4294901760
    %701 = vmatpush1.msra.mxu0 %v700
    %702 = vmatprep.subr.mxu0 0.0
    %v703 = vand.u32 %v523, 4294901760
    %v704 = vsub.f32 %v523, %v703
    %v705 = vand.u32 %v704, 4294901760
    %v706 = vsub.f32 %v704, %v705
    %v707 = vand.u32 %v706, 4294901760
    %708 = vmatpush1.msra.mxu0 %v707
    %709 = vmatprep.subr.mxu0 0.0
    %v710 = vand.u32 %v522, 4294901760
    %v711 = vsub.f32 %v522, %v710
    %v712 = vand.u32 %v711, 4294901760
    %v713 = vsub.f32 %v711, %v712
    %v714 = vand.u32 %v713, 4294901760
    %715 = vmatpush1.msra.mxu0 %v714
    %716 = vmatprep.subr.mxu0 0.0
    %v717 = vand.u32 %v521, 4294901760
    %v718 = vsub.f32 %v521, %v717
    %v719 = vand.u32 %v718, 4294901760
    %v720 = vsub.f32 %v718, %v719
    %v721 = vand.u32 %v720, 4294901760
    %722 = vmatpush1.msra.mxu0 %v721
    %723 = vmatprep.subr.mxu0 0.0
    %v724 = vand.u32 %v520, 4294901760
    %v725 = vsub.f32 %v520, %v724
    %v726 = vand.u32 %v725, 4294901760
    %v727 = vsub.f32 %v725, %v726
    %v728 = vand.u32 %v727, 4294901760
    %729 = vmatpush1.msra.mxu0 %v728
    %730 = vmatprep.subr.mxu0 0.0
    %v731 = vand.u32 %v519, 4294901760
    %v732 = vsub.f32 %v519, %v731
    %v733 = vand.u32 %v732, 4294901760
    %v734 = vsub.f32 %v732, %v733
    %v735 = vand.u32 %v734, 4294901760
    %736 = vmatpush1.msra.mxu0 %v735
    %737 = vmatprep.subr.mxu0 0.0
    %v738 = vand.u32 %v518, 4294901760
    %v739 = vsub.f32 %v518, %v738
    %v740 = vand.u32 %v739, 4294901760
    %v741 = vsub.f32 %v739, %v740
    %v742 = vand.u32 %v741, 4294901760
    %743 = vmatpush1.msra.mxu0 %v742
    %744 = vmatprep.subr.mxu0 0.0
    %745 = vmatpush2.msra.mxu0 0.0
    %746 = vmatprep.subr.mxu0 0.0
    %747 = vmatpush2.msra.mxu0 0.0
    %748 = vmatprep.subr.mxu0 0.0
    %749 = vmatpush2.msra.mxu0 0.0
    %750 = vmatprep.subr.mxu0 0.0
    %751 = vmatpush2.msra.mxu0 0.0
    %752 = vmatprep.subr.mxu0 0.0
    %753 = vmatpush2.msra.mxu0 0.0
    %754 = vmatprep.subr.mxu0 0.0
    %755 = vmatpush2.msra.mxu0 0.0
    %756 = vmatprep.subr.mxu0 0.0
    %757 = vmatpush2.msra.mxu0 0.0
    %758 = vmatprep.subr.mxu0 0.0
    %759 = vmatpush2.msra.mxu0 0.0
    %760 = vmatprep.subr.mxu0 0.0
    %761 = vmatpush2.msra.mxu0 0.0
    %762 = vmatprep.subr.mxu0 0.0
    %763 = vmatpush2.msra.mxu0 0.0
    %764 = vmatprep.subr.mxu0 0.0
    %765 = vmatpush2.msra.mxu0 0.0
    %766 = vmatprep.subr.mxu0 0.0
    %767 = vmatpush2.msra.mxu0 0.0
    %768 = vmatprep.subr.mxu0 0.0
    %769 = vmatpush2.msra.mxu0 0.0
    %770 = vmatprep.subr.mxu0 0.0
    %771 = vmatpush2.msra.mxu0 0.0
    %772 = vmatprep.subr.mxu0 0.0
    %773 = vmatpush2.msra.mxu0 0.0
    %774 = vmatprep.subr.mxu0 0.0
    %775 = vmatpush2.msra.mxu0 0.0
    %776 = vmatprep.mubr.f32.mxu0 0.0
    %v777 = vand.u32 %v517, 4294901760
    %778 = vmatmul.mubr.f32.gmra.mxu0 %v777
    %v779 = vpop.f32.mrf.mxu0
    %v780 = vadd.f32 %v629, %v779
    %v781 = vpop.f32.mrf.mxu0
    %782 = vdwg.mxu0
    %783 = vmatprep.subr.mxu0 0.0
    %v784 = vand.u32 %v533, 4294901760
    %v785 = vsub.f32 %v533, %v784
    %786 = vmatpush1.msra.mxu0 %v785
    %787 = vmatprep.subr.mxu0 0.0
    %v788 = vand.u32 %v532, 4294901760
    %v789 = vsub.f32 %v532, %v788
    %790 = vmatpush1.msra.mxu0 %v789
    %791 = vmatprep.subr.mxu0 0.0
    %v792 = vand.u32 %v531, 4294901760
    %v793 = vsub.f32 %v531, %v792
    %794 = vmatpush1.msra.mxu0 %v793
    %795 = vmatprep.subr.mxu0 0.0
    %v796 = vand.u32 %v530, 4294901760
    %v797 = vsub.f32 %v530, %v796
    %798 = vmatpush1.msra.mxu0 %v797
    %799 = vmatprep.subr.mxu0 0.0
    %v800 = vand.u32 %v529, 4294901760
    %v801 = vsub.f32 %v529, %v800
    %802 = vmatpush1.msra.mxu0 %v801
    %803 = vmatprep.subr.mxu0 0.0
    %v804 = vand.u32 %v528, 4294901760
    %v805 = vsub.f32 %v528, %v804
    %806 = vmatpush1.msra.mxu0 %v805
    %807 = vmatprep.subr.mxu0 0.0
    %v808 = vand.u32 %v527, 4294901760
    %v809 = vsub.f32 %v527, %v808
    %810 = vmatpush1.msra.mxu0 %v809
    %811 = vmatprep.subr.mxu0 0.0
    %v812 = vand.u32 %v526, 4294901760
    %v813 = vsub.f32 %v526, %v812
    %814 = vmatpush1.msra.mxu0 %v813
    %815 = vmatprep.subr.mxu0 0.0
    %v816 = vand.u32 %v525, 4294901760
    %v817 = vsub.f32 %v525, %v816
    %818 = vmatpush1.msra.mxu0 %v817
    %819 = vmatprep.subr.mxu0 0.0
    %v820 = vand.u32 %v524, 4294901760
    %v821 = vsub.f32 %v524, %v820
    %822 = vmatpush1.msra.mxu0 %v821
    %823 = vmatprep.subr.mxu0 0.0
    %v824 = vand.u32 %v523, 4294901760
    %v825 = vsub.f32 %v523, %v824
    %826 = vmatpush1.msra.mxu0 %v825
    %827 = vmatprep.subr.mxu0 0.0
    %v828 = vand.u32 %v522, 4294901760
    %v829 = vsub.f32 %v522, %v828
    %830 = vmatpush1.msra.mxu0 %v829
    %831 = vmatprep.subr.mxu0 0.0
    %v832 = vand.u32 %v521, 4294901760
    %v833 = vsub.f32 %v521, %v832
    %834 = vmatpush1.msra.mxu0 %v833
    %835 = vmatprep.subr.mxu0 0.0
    %v836 = vand.u32 %v520, 4294901760
    %v837 = vsub.f32 %v520, %v836
    %838 = vmatpush1.msra.mxu0 %v837
    %839 = vmatprep.subr.mxu0 0.0
    %v840 = vand.u32 %v519, 4294901760
    %v841 = vsub.f32 %v519, %v840
    %842 = vmatpush1.msra.mxu0 %v841
    %843 = vmatprep.subr.mxu0 0.0
    %v844 = vand.u32 %v518, 4294901760
    %v845 = vsub.f32 %v518, %v844
    %846 = vmatpush1.msra.mxu0 %v845
    %847 = vmatprep.subr.mxu0 0.0
    %848 = vmatpush2.msra.mxu0 0.0
    %849 = vmatprep.subr.mxu0 0.0
    %850 = vmatpush2.msra.mxu0 0.0
    %851 = vmatprep.subr.mxu0 0.0
    %852 = vmatpush2.msra.mxu0 0.0
    %853 = vmatprep.subr.mxu0 0.0
    %854 = vmatpush2.msra.mxu0 0.0
    %855 = vmatprep.subr.mxu0 0.0
    %856 = vmatpush2.msra.mxu0 0.0
    %857 = vmatprep.subr.mxu0 0.0
    %858 = vmatpush2.msra.mxu0 0.0
    %859 = vmatprep.subr.mxu0 0.0
    %860 = vmatpush2.msra.mxu0 0.0
    %861 = vmatprep.subr.mxu0 0.0
    %862 = vmatpush2.msra.mxu0 0.0
    %863 = vmatprep.subr.mxu0 0.0
    %864 = vmatpush2.msra.mxu0 0.0
    %865 = vmatprep.subr.mxu0 0.0
    %866 = vmatpush2.msra.mxu0 0.0
    %867 = vmatprep.subr.mxu0 0.0
    %868 = vmatpush2.msra.mxu0 0.0
    %869 = vmatprep.subr.mxu0 0.0
    %870 = vmatpush2.msra.mxu0 0.0
    %871 = vmatprep.subr.mxu0 0.0
    %872 = vmatpush2.msra.mxu0 0.0
    %873 = vmatprep.subr.mxu0 0.0
    %874 = vmatpush2.msra.mxu0 0.0
    %875 = vmatprep.subr.mxu0 0.0
    %876 = vmatpush2.msra.mxu0 0.0
    %877 = vmatprep.subr.mxu0 0.0
    %878 = vmatpush2.msra.mxu0 0.0
    %879 = vmatprep.mubr.f32.mxu0 0.0
    %v880 = vand.u32 %v517, 4294901760
    %v881 = vsub.f32 %v517, %v880
    %882 = vmatmul.mubr.f32.gmra.mxu0 %v881
    %v883 = vpop.f32.mrf.mxu0
    %v884 = vadd.f32 %v780, %v883
    %v885 = vpop.f32.mrf.mxu0
    %886 = vdwg.mxu0
    %887 = vmatprep.subr.mxu0 0.0
    %v888 = vand.u32 %v533, 4294901760
    %889 = vmatpush1.msra.mxu0 %v888
    %890 = vmatprep.subr.mxu0 0.0
    %v891 = vand.u32 %v532, 4294901760
    %892 = vmatpush1.msra.mxu0 %v891
    %893 = vmatprep.subr.mxu0 0.0
    %v894 = vand.u32 %v531, 4294901760
    %895 = vmatpush1.msra.mxu0 %v894
    %896 = vmatprep.subr.mxu0 0.0
    %v897 = vand.u32 %v530, 4294901760
    %898 = vmatpush1.msra.mxu0 %v897
    %899 = vmatprep.subr.mxu0 0.0
    %v900 = vand.u32 %v529, 4294901760
    %901 = vmatpush1.msra.mxu0 %v900
    %902 = vmatprep.subr.mxu0 0.0
    %v903 = vand.u32 %v528, 4294901760
    %904 = vmatpush1.msra.mxu0 %v903
    %905 = vmatprep.subr.mxu0 0.0
    %v906 = vand.u32 %v527, 4294901760
    %907 = vmatpush1.msra.mxu0 %v906
    %908 = vmatprep.subr.mxu0 0.0
    %v909 = vand.u32 %v526, 4294901760
    %910 = vmatpush1.msra.mxu0 %v909
    %911 = vmatprep.subr.mxu0 0.0
    %v912 = vand.u32 %v525, 4294901760
    %913 = vmatpush1.msra.mxu0 %v912
    %914 = vmatprep.subr.mxu0 0.0
    %v915 = vand.u32 %v524, 4294901760
    %916 = vmatpush1.msra.mxu0 %v915
    %917 = vmatprep.subr.mxu0 0.0
    %v918 = vand.u32 %v523, 4294901760
    %919 = vmatpush1.msra.mxu0 %v918
    %920 = vmatprep.subr.mxu0 0.0
    %v921 = vand.u32 %v522, 4294901760
    %922 = vmatpush1.msra.mxu0 %v921
    %923 = vmatprep.subr.mxu0 0.0
    %v924 = vand.u32 %v521, 4294901760
    %925 = vmatpush1.msra.mxu0 %v924
    %926 = vmatprep.subr.mxu0 0.0
    %v927 = vand.u32 %v520, 4294901760
    %928 = vmatpush1.msra.mxu0 %v927
    %929 = vmatprep.subr.mxu0 0.0
    %v930 = vand.u32 %v519, 4294901760
    %931 = vmatpush1.msra.mxu0 %v930
    %932 = vmatprep.subr.mxu0 0.0
    %v933 = vand.u32 %v518, 4294901760
    %934 = vmatpush1.msra.mxu0 %v933
    %935 = vmatprep.subr.mxu0 0.0
    %936 = vmatpush2.msra.mxu0 0.0
    %937 = vmatprep.subr.mxu0 0.0
    %938 = vmatpush2.msra.mxu0 0.0
    %939 = vmatprep.subr.mxu0 0.0
    %940 = vmatpush2.msra.mxu0 0.0
    %941 = vmatprep.subr.mxu0 0.0
    %942 = vmatpush2.msra.mxu0 0.0
    %943 = vmatprep.subr.mxu0 0.0
    %944 = vmatpush2.msra.mxu0 0.0
    %945 = vmatprep.subr.mxu0 0.0
    %946 = vmatpush2.msra.mxu0 0.0
    %947 = vmatprep.subr.mxu0 0.0
    %948 = vmatpush2.msra.mxu0 0.0
    %949 = vmatprep.subr.mxu0 0.0
    %950 = vmatpush2.msra.mxu0 0.0
    %951 = vmatprep.subr.mxu0 0.0
    %952 = vmatpush2.msra.mxu0 0.0
    %953 = vmatprep.subr.mxu0 0.0
    %954 = vmatpush2.msra.mxu0 0.0
    %955 = vmatprep.subr.mxu0 0.0
    %956 = vmatpush2.msra.mxu0 0.0
    %957 = vmatprep.subr.mxu0 0.0
    %958 = vmatpush2.msra.mxu0 0.0
    %959 = vmatprep.subr.mxu0 0.0
    %960 = vmatpush2.msra.mxu0 0.0
    %961 = vmatprep.subr.mxu0 0.0
    %962 = vmatpush2.msra.mxu0 0.0
    %963 = vmatprep.subr.mxu0 0.0
    %964 = vmatpush2.msra.mxu0 0.0
    %965 = vmatprep.subr.mxu0 0.0
    %966 = vmatpush2.msra.mxu0 0.0
    %967 = vmatprep.mubr.f32.mxu0 0.0
    %v968 = vand.u32 %v517, 4294901760
    %v969 = vsub.f32 %v517, %v968
    %v970 = vand.u32 %v969, 4294901760
    %971 = vmatmul.mubr.f32.gmra.mxu0 %v970
    %v972 = vpop.f32.mrf.mxu0
    %v973 = vadd.f32 %v884, %v972
    %v974 = vpop.f32.mrf.mxu0
    %975 = vdwg.mxu0
    %976 = vmatprep.subr.mxu0 0.0
    %v977 = vand.u32 %v533, 4294901760
    %v978 = vsub.f32 %v533, %v977
    %v979 = vand.u32 %v978, 4294901760
    %980 = vmatpush1.msra.mxu0 %v979
    %981 = vmatprep.subr.mxu0 0.0
    %v982 = vand.u32 %v532, 4294901760
    %v983 = vsub.f32 %v532, %v982
    %v984 = vand.u32 %v983, 4294901760
    %985 = vmatpush1.msra.mxu0 %v984
    %986 = vmatprep.subr.mxu0 0.0
    %v987 = vand.u32 %v531, 4294901760
    %v988 = vsub.f32 %v531, %v987
    %v989 = vand.u32 %v988, 4294901760
    %990 = vmatpush1.msra.mxu0 %v989
    %991 = vmatprep.subr.mxu0 0.0
    %v992 = vand.u32 %v530, 4294901760
    %v993 = vsub.f32 %v530, %v992
    %v994 = vand.u32 %v993, 4294901760
    %995 = vmatpush1.msra.mxu0 %v994
    %996 = vmatprep.subr.mxu0 0.0
    %v997 = vand.u32 %v529, 4294901760
    %v998 = vsub.f32 %v529, %v997
    %v999 = vand.u32 %v998, 4294901760
    %1000 = vmatpush1.msra.mxu0 %v999
    %1001 = vmatprep.subr.mxu0 0.0
    %v1002 = vand.u32 %v528, 4294901760
    %v1003 = vsub.f32 %v528, %v1002
    %v1004 = vand.u32 %v1003, 4294901760
    %1005 = vmatpush1.msra.mxu0 %v1004
    %1006 = vmatprep.subr.mxu0 0.0
    %v1007 = vand.u32 %v527, 4294901760
    %v1008 = vsub.f32 %v527, %v1007
    %v1009 = vand.u32 %v1008, 4294901760
    %1010 = vmatpush1.msra.mxu0 %v1009
    %1011 = vmatprep.subr.mxu0 0.0
    %v1012 = vand.u32 %v526, 4294901760
    %v1013 = vsub.f32 %v526, %v1012
    %v1014 = vand.u32 %v1013, 4294901760
    %1015 = vmatpush1.msra.mxu0 %v1014
    %1016 = vmatprep.subr.mxu0 0.0
    %v1017 = vand.u32 %v525, 4294901760
    %v1018 = vsub.f32 %v525, %v1017
    %v1019 = vand.u32 %v1018, 4294901760
    %1020 = vmatpush1.msra.mxu0 %v1019
    %1021 = vmatprep.subr.mxu0 0.0
    %v1022 = vand.u32 %v524, 4294901760
    %v1023 = vsub.f32 %v524, %v1022
    %v1024 = vand.u32 %v1023, 4294901760
    %1025 = vmatpush1.msra.mxu0 %v1024
    %1026 = vmatprep.subr.mxu0 0.0
    %v1027 = vand.u32 %v523, 4294901760
    %v1028 = vsub.f32 %v523, %v1027
    %v1029 = vand.u32 %v1028, 4294901760
    %1030 = vmatpush1.msra.mxu0 %v1029
    %1031 = vmatprep.subr.mxu0 0.0
    %v1032 = vand.u32 %v522, 4294901760
    %v1033 = vsub.f32 %v522, %v1032
    %v1034 = vand.u32 %v1033, 4294901760
    %1035 = vmatpush1.msra.mxu0 %v1034
    %1036 = vmatprep.subr.mxu0 0.0
    %v1037 = vand.u32 %v521, 4294901760
    %v1038 = vsub.f32 %v521, %v1037
    %v1039 = vand.u32 %v1038, 4294901760
    %1040 = vmatpush1.msra.mxu0 %v1039
    %1041 = vmatprep.subr.mxu0 0.0
    %v1042 = vand.u32 %v520, 4294901760
    %v1043 = vsub.f32 %v520, %v1042
    %v1044 = vand.u32 %v1043, 4294901760
    %1045 = vmatpush1.msra.mxu0 %v1044
    %1046 = vmatprep.subr.mxu0 0.0
    %v1047 = vand.u32 %v519, 4294901760
    %v1048 = vsub.f32 %v519, %v1047
    %v1049 = vand.u32 %v1048, 4294901760
    %1050 = vmatpush1.msra.mxu0 %v1049
    %1051 = vmatprep.subr.mxu0 0.0
    %v1052 = vand.u32 %v518, 4294901760
    %v1053 = vsub.f32 %v518, %v1052
    %v1054 = vand.u32 %v1053, 4294901760
    %1055 = vmatpush1.msra.mxu0 %v1054
    %1056 = vmatprep.subr.mxu0 0.0
    %1057 = vmatpush2.msra.mxu0 0.0
    %1058 = vmatprep.subr.mxu0 0.0
    %1059 = vmatpush2.msra.mxu0 0.0
    %1060 = vmatprep.subr.mxu0 0.0
    %1061 = vmatpush2.msra.mxu0 0.0
    %1062 = vmatprep.subr.mxu0 0.0
    %1063 = vmatpush2.msra.mxu0 0.0
    %1064 = vmatprep.subr.mxu0 0.0
    %1065 = vmatpush2.msra.mxu0 0.0
    %1066 = vmatprep.subr.mxu0 0.0
    %1067 = vmatpush2.msra.mxu0 0.0
    %1068 = vmatprep.subr.mxu0 0.0
    %1069 = vmatpush2.msra.mxu0 0.0
    %1070 = vmatprep.subr.mxu0 0.0
    %1071 = vmatpush2.msra.mxu0 0.0
    %1072 = vmatprep.subr.mxu0 0.0
    %1073 = vmatpush2.msra.mxu0 0.0
    %1074 = vmatprep.subr.mxu0 0.0
    %1075 = vmatpush2.msra.mxu0 0.0
    %1076 = vmatprep.subr.mxu0 0.0
    %1077 = vmatpush2.msra.mxu0 0.0
    %1078 = vmatprep.subr.mxu0 0.0
    %1079 = vmatpush2.msra.mxu0 0.0
    %1080 = vmatprep.subr.mxu0 0.0
    %1081 = vmatpush2.msra.mxu0 0.0
    %1082 = vmatprep.subr.mxu0 0.0
    %1083 = vmatpush2.msra.mxu0 0.0
    %1084 = vmatprep.subr.mxu0 0.0
    %1085 = vmatpush2.msra.mxu0 0.0
    %1086 = vmatprep.subr.mxu0 0.0
    %1087 = vmatpush2.msra.mxu0 0.0
    %1088 = vmatprep.mubr.f32.mxu0 0.0
    %v1089 = vand.u32 %v517, 4294901760
    %1090 = vmatmul.mubr.f32.gmra.mxu0 %v1089
    %v1091 = vpop.f32.mrf.mxu0
    %v1092 = vadd.f32 %v973, %v1091
    %v1093 = vpop.f32.mrf.mxu0
    %1094 = vdwg.mxu0
    %1095 = vmatprep.subr.mxu0 0.0
    %v1096 = vand.u32 %v533, 4294901760
    %1097 = vmatpush1.msra.mxu0 %v1096
    %1098 = vmatprep.subr.mxu0 0.0
    %v1099 = vand.u32 %v532, 4294901760
    %1100 = vmatpush1.msra.mxu0 %v1099
    %1101 = vmatprep.subr.mxu0 0.0
    %v1102 = vand.u32 %v531, 4294901760
    %1103 = vmatpush1.msra.mxu0 %v1102
    %1104 = vmatprep.subr.mxu0 0.0
    %v1105 = vand.u32 %v530, 4294901760
    %1106 = vmatpush1.msra.mxu0 %v1105
    %1107 = vmatprep.subr.mxu0 0.0
    %v1108 = vand.u32 %v529, 4294901760
    %1109 = vmatpush1.msra.mxu0 %v1108
    %1110 = vmatprep.subr.mxu0 0.0
    %v1111 = vand.u32 %v528, 4294901760
    %1112 = vmatpush1.msra.mxu0 %v1111
    %1113 = vmatprep.subr.mxu0 0.0
    %v1114 = vand.u32 %v527, 4294901760
    %1115 = vmatpush1.msra.mxu0 %v1114
    %1116 = vmatprep.subr.mxu0 0.0
    %v1117 = vand.u32 %v526, 4294901760
    %1118 = vmatpush1.msra.mxu0 %v1117
    %1119 = vmatprep.subr.mxu0 0.0
    %v1120 = vand.u32 %v525, 4294901760
    %1121 = vmatpush1.msra.mxu0 %v1120
    %1122 = vmatprep.subr.mxu0 0.0
    %v1123 = vand.u32 %v524, 4294901760
    %1124 = vmatpush1.msra.mxu0 %v1123
    %1125 = vmatprep.subr.mxu0 0.0
    %v1126 = vand.u32 %v523, 4294901760
    %1127 = vmatpush1.msra.mxu0 %v1126
    %1128 = vmatprep.subr.mxu0 0.0
    %v1129 = vand.u32 %v522, 4294901760
    %1130 = vmatpush1.msra.mxu0 %v1129
    %1131 = vmatprep.subr.mxu0 0.0
    %v1132 = vand.u32 %v521, 4294901760
    %1133 = vmatpush1.msra.mxu0 %v1132
    %1134 = vmatprep.subr.mxu0 0.0
    %v1135 = vand.u32 %v520, 4294901760
    %1136 = vmatpush1.msra.mxu0 %v1135
    %1137 = vmatprep.subr.mxu0 0.0
    %v1138 = vand.u32 %v519, 4294901760
    %1139 = vmatpush1.msra.mxu0 %v1138
    %1140 = vmatprep.subr.mxu0 0.0
    %v1141 = vand.u32 %v518, 4294901760
    %1142 = vmatpush1.msra.mxu0 %v1141
    %1143 = vmatprep.subr.mxu0 0.0
    %1144 = vmatpush2.msra.mxu0 0.0
    %1145 = vmatprep.subr.mxu0 0.0
    %1146 = vmatpush2.msra.mxu0 0.0
    %1147 = vmatprep.subr.mxu0 0.0
    %1148 = vmatpush2.msra.mxu0 0.0
    %1149 = vmatprep.subr.mxu0 0.0
    %1150 = vmatpush2.msra.mxu0 0.0
    %1151 = vmatprep.subr.mxu0 0.0
    %1152 = vmatpush2.msra.mxu0 0.0
    %1153 = vmatprep.subr.mxu0 0.0
    %1154 = vmatpush2.msra.mxu0 0.0
    %1155 = vmatprep.subr.mxu0 0.0
    %1156 = vmatpush2.msra.mxu0 0.0
    %1157 = vmatprep.subr.mxu0 0.0
    %1158 = vmatpush2.msra.mxu0 0.0
    %1159 = vmatprep.subr.mxu0 0.0
    %1160 = vmatpush2.msra.mxu0 0.0
    %1161 = vmatprep.subr.mxu0 0.0
    %1162 = vmatpush2.msra.mxu0 0.0
    %1163 = vmatprep.subr.mxu0 0.0
    %1164 = vmatpush2.msra.mxu0 0.0
    %1165 = vmatprep.subr.mxu0 0.0
    %1166 = vmatpush2.msra.mxu0 0.0
    %1167 = vmatprep.subr.mxu0 0.0
    %1168 = vmatpush2.msra.mxu0 0.0
    %1169 = vmatprep.subr.mxu0 0.0
    %1170 = vmatpush2.msra.mxu0 0.0
    %1171 = vmatprep.subr.mxu0 0.0
    %1172 = vmatpush2.msra.mxu0 0.0
    %1173 = vmatprep.subr.mxu0 0.0
    %1174 = vmatpush2.msra.mxu0 0.0
    %1175 = vmatprep.mubr.f32.mxu0 0.0
    %v1176 = vand.u32 %v517, 4294901760
    %1177 = vmatmul.mubr.f32.gmra.mxu0 %v1176
    %v1178 = vpop.f32.mrf.mxu0
    %v1179 = vadd.f32 %v1092, %v1178
    %v1180 = vpop.f32.mrf.mxu0
    %1181 = vdwg.mxu0
    %v1182 = vtanh.pop %v1179
    %v1183 = vld [vmem:[#allocation4] sm:$0xff]
    %v1184 = vld [vmem:[#allocation4 + $0x8] sm:$0xff]
    %v1185 = vld [vmem:[#allocation4 + $0x10] sm:$0xff]
    %v1186 = vld [vmem:[#allocation4 + $0x18] sm:$0xff]
    %v1187 = vld [vmem:[#allocation4 + $0x20] sm:$0xff]
    %v1188 = vld [vmem:[#allocation4 + $0x28] sm:$0xff]
    %v1189 = vld [vmem:[#allocation4 + $0x30] sm:$0xff]
    %v1190 = vld [vmem:[#allocation4 + $0x38] sm:$0xff]
    %v1191 = vld [vmem:[#allocation4 + $0x40] sm:$0xff]
    %v1192 = vld [vmem:[#allocation4 + $0x48] sm:$0xff]
    %v1193 = vld [vmem:[#allocation4 + $0x50] sm:$0xff]
    %v1194 = vld [vmem:[#allocation4 + $0x58] sm:$0xff]
    %v1195 = vld [vmem:[#allocation4 + $0x60] sm:$0xff]
    %v1196 = vld [vmem:[#allocation4 + $0x68] sm:$0xff]
    %v1197 = vld [vmem:[#allocation4 + $0x70] sm:$0xff]
    %v1198 = vld [vmem:[#allocation4 + $0x78] sm:$0xff]
    %v1199 = vld [vmem:[%s6] sm:$0x1]
    %v1201 = vlaneseq
    %v1202 = vshrl.u32 %v1201, 7
    %v1203 = vsub.s32 0, %v1202
    %v1204 = vrot.slane %v1199, %v1203
    %1206 = vmatprep.subr.mxu0 0.0
    %v1207 = vand.u32 %v1198, 4294901760
    %1208 = vmatpush1.msra.mxu0 %v1207
    %1209 = vmatprep.subr.mxu0 0.0
    %v1210 = vand.u32 %v1197, 4294901760
    %1211 = vmatpush1.msra.mxu0 %v1210
    %1212 = vmatprep.subr.mxu0 0.0
    %v1213 = vand.u32 %v1196, 4294901760
    %1214 = vmatpush1.msra.mxu0 %v1213
    %1215 = vmatprep.subr.mxu0 0.0
    %v1216 = vand.u32 %v1195, 4294901760
    %1217 = vmatpush1.msra.mxu0 %v1216
    %1218 = vmatprep.subr.mxu0 0.0
    %v1219 = vand.u32 %v1194, 4294901760
    %1220 = vmatpush1.msra.mxu0 %v1219
    %1221 = vmatprep.subr.mxu0 0.0
    %v1222 = vand.u32 %v1193, 4294901760
    %1223 = vmatpush1.msra.mxu0 %v1222
    %1224 = vmatprep.subr.mxu0 0.0
    %v1225 = vand.u32 %v1192, 4294901760
    %1226 = vmatpush1.msra.mxu0 %v1225
    %1227 = vmatprep.subr.mxu0 0.0
    %v1228 = vand.u32 %v1191, 4294901760
    %1229 = vmatpush1.msra.mxu0 %v1228
    %1230 = vmatprep.subr.mxu0 0.0
    %v1231 = vand.u32 %v1190, 4294901760
    %1232 = vmatpush1.msra.mxu0 %v1231
    %1233 = vmatprep.subr.mxu0 0.0
    %v1234 = vand.u32 %v1189, 4294901760
    %1235 = vmatpush1.msra.mxu0 %v1234
    %1236 = vmatprep.subr.mxu0 0.0
    %v1237 = vand.u32 %v1188, 4294901760
    %1238 = vmatpush1.msra.mxu0 %v1237
    %1239 = vmatprep.subr.mxu0 0.0
    %v1240 = vand.u32 %v1187, 4294901760
    %1241 = vmatpush1.msra.mxu0 %v1240
    %1242 = vmatprep.subr.mxu0 0.0
    %v1243 = vand.u32 %v1186, 4294901760
    %1244 = vmatpush1.msra.mxu0 %v1243
    %1245 = vmatprep.subr.mxu0 0.0
    %v1246 = vand.u32 %v1185, 4294901760
    %1247 = vmatpush1.msra.mxu0 %v1246
    %1248 = vmatprep.subr.mxu0 0.0
    %v1249 = vand.u32 %v1184, 4294901760
    %1250 = vmatpush1.msra.mxu0 %v1249
    %1251 = vmatprep.subr.mxu0 0.0
    %v1252 = vand.u32 %v1183, 4294901760
    %1253 = vmatpush1.msra.mxu0 %v1252
    %1254 = vmatprep.subr.mxu0 0.0
    %1255 = vmatpush2.msra.mxu0 0.0
    %1256 = vmatprep.subr.mxu0 0.0
    %1257 = vmatpush2.msra.mxu0 0.0
    %1258 = vmatprep.subr.mxu0 0.0
    %1259 = vmatpush2.msra.mxu0 0.0
    %1260 = vmatprep.subr.mxu0 0.0
    %1261 = vmatpush2.msra.mxu0 0.0
    %1262 = vmatprep.subr.mxu0 0.0
    %1263 = vmatpush2.msra.mxu0 0.0
    %1264 = vmatprep.subr.mxu0 0.0
    %1265 = vmatpush2.msra.mxu0 0.0
    %1266 = vmatprep.subr.mxu0 0.0
    %1267 = vmatpush2.msra.mxu0 0.0
    %1268 = vmatprep.subr.mxu0 0.0
    %1269 = vmatpush2.msra.mxu0 0.0
    %1270 = vmatprep.subr.mxu0 0.0
    %1271 = vmatpush2.msra.mxu0 0.0
    %1272 = vmatprep.subr.mxu0 0.0
    %1273 = vmatpush2.msra.mxu0 0.0
    %1274 = vmatprep.subr.mxu0 0.0
    %1275 = vmatpush2.msra.mxu0 0.0
    %1276 = vmatprep.subr.mxu0 0.0
    %1277 = vmatpush2.msra.mxu0 0.0
    %1278 = vmatprep.subr.mxu0 0.0
    %1279 = vmatpush2.msra.mxu0 0.0
    %1280 = vmatprep.subr.mxu0 0.0
    %1281 = vmatpush2.msra.mxu0 0.0
    %1282 = vmatprep.subr.mxu0 0.0
    %1283 = vmatpush2.msra.mxu0 0.0
    %1284 = vmatprep.subr.mxu0 0.0
    %1285 = vmatpush2.msra.mxu0 0.0
    %1286 = vmatprep.mubr.f32.mxu0 0.0
    %v1287 = vand.u32 %v1182, 4294901760
    %v1288 = vsub.f32 %v1182, %v1287
    %v1289 = vand.u32 %v1288, 4294901760
    %v1290 = vsub.f32 %v1288, %v1289
    %v1291 = vand.u32 %v1290, 4294901760
    %1292 = vmatmul.mubr.f32.gmra.mxu0 %v1291
    %v1293 = vpop.f32.mrf.mxu0
    %v1294 = vadd.f32 %v1204, %v1293
    %v1295 = vpop.f32.mrf.mxu0
    %1296 = vdwg.mxu0
    %1297 = vmatprep.subr.mxu0 0.0
    %v1298 = vand.u32 %v1198, 4294901760
    %v1299 = vsub.f32 %v1198, %v1298
    %v1300 = vand.u32 %v1299, 4294901760
    %v1301 = vsub.f32 %v1299, %v1300
    %v1302 = vand.u32 %v1301, 4294901760
    %1303 = vmatpush1.msra.mxu0 %v1302
    %1304 = vmatprep.subr.mxu0 0.0
    %v1305 = vand.u32 %v1197, 4294901760
    %v1306 = vsub.f32 %v1197, %v1305
    %v1307 = vand.u32 %v1306, 4294901760
    %v1308 = vsub.f32 %v1306, %v1307
    %v1309 = vand.u32 %v1308, 4294901760
    %1310 = vmatpush1.msra.mxu0 %v1309
    %1311 = vmatprep.subr.mxu0 0.0
    %v1312 = vand.u32 %v1196, 4294901760
    %v1313 = vsub.f32 %v1196, %v1312
    %v1314 = vand.u32 %v1313, 4294901760
    %v1315 = vsub.f32 %v1313, %v1314
    %v1316 = vand.u32 %v1315, 4294901760
    %1317 = vmatpush1.msra.mxu0 %v1316
    %1318 = vmatprep.subr.mxu0 0.0
    %v1319 = vand.u32 %v1195, 4294901760
    %v1320 = vsub.f32 %v1195, %v1319
    %v1321 = vand.u32 %v1320, 4294901760
    %v1322 = vsub.f32 %v1320, %v1321
    %v1323 = vand.u32 %v1322, 4294901760
    %1324 = vmatpush1.msra.mxu0 %v1323
    %1325 = vmatprep.subr.mxu0 0.0
    %v1326 = vand.u32 %v1194, 4294901760
    %v1327 = vsub.f32 %v1194, %v1326
    %v1328 = vand.u32 %v1327, 4294901760
    %v1329 = vsub.f32 %v1327, %v1328
    %v1330 = vand.u32 %v1329, 4294901760
    %1331 = vmatpush1.msra.mxu0 %v1330
    %1332 = vmatprep.subr.mxu0 0.0
    %v1333 = vand.u32 %v1193, 4294901760
    %v1334 = vsub.f32 %v1193, %v1333
    %v1335 = vand.u32 %v1334, 4294901760
    %v1336 = vsub.f32 %v1334, %v1335
    %v1337 = vand.u32 %v1336, 4294901760
    %1338 = vmatpush1.msra.mxu0 %v1337
    %1339 = vmatprep.subr.mxu0 0.0
    %v1340 = vand.u32 %v1192, 4294901760
    %v1341 = vsub.f32 %v1192, %v1340
    %v1342 = vand.u32 %v1341, 4294901760
    %v1343 = vsub.f32 %v1341, %v1342
    %v1344 = vand.u32 %v1343, 4294901760
    %1345 = vmatpush1.msra.mxu0 %v1344
    %1346 = vmatprep.subr.mxu0 0.0
    %v1347 = vand.u32 %v1191, 4294901760
    %v1348 = vsub.f32 %v1191, %v1347
    %v1349 = vand.u32 %v1348, 4294901760
    %v1350 = vsub.f32 %v1348, %v1349
    %v1351 = vand.u32 %v1350, 4294901760
    %1352 = vmatpush1.msra.mxu0 %v1351
    %1353 = vmatprep.subr.mxu0 0.0
    %v1354 = vand.u32 %v1190, 4294901760
    %v1355 = vsub.f32 %v1190, %v1354
    %v1356 = vand.u32 %v1355, 4294901760
    %v1357 = vsub.f32 %v1355, %v1356
    %v1358 = vand.u32 %v1357, 4294901760
    %1359 = vmatpush1.msra.mxu0 %v1358
    %1360 = vmatprep.subr.mxu0 0.0
    %v1361 = vand.u32 %v1189, 4294901760
    %v1362 = vsub.f32 %v1189, %v1361
    %v1363 = vand.u32 %v1362, 4294901760
    %v1364 = vsub.f32 %v1362, %v1363
    %v1365 = vand.u32 %v1364, 4294901760
    %1366 = vmatpush1.msra.mxu0 %v1365
    %1367 = vmatprep.subr.mxu0 0.0
    %v1368 = vand.u32 %v1188, 4294901760
    %v1369 = vsub.f32 %v1188, %v1368
    %v1370 = vand.u32 %v1369, 4294901760
    %v1371 = vsub.f32 %v1369, %v1370
    %v1372 = vand.u32 %v1371, 4294901760
    %1373 = vmatpush1.msra.mxu0 %v1372
    %1374 = vmatprep.subr.mxu0 0.0
    %v1375 = vand.u32 %v1187, 4294901760
    %v1376 = vsub.f32 %v1187, %v1375
    %v1377 = vand.u32 %v1376, 4294901760
    %v1378 = vsub.f32 %v1376, %v1377
    %v1379 = vand.u32 %v1378, 4294901760
    %1380 = vmatpush1.msra.mxu0 %v1379
    %1381 = vmatprep.subr.mxu0 0.0
    %v1382 = vand.u32 %v1186, 4294901760
    %v1383 = vsub.f32 %v1186, %v1382
    %v1384 = vand.u32 %v1383, 4294901760
    %v1385 = vsub.f32 %v1383, %v1384
    %v1386 = vand.u32 %v1385, 4294901760
    %1387 = vmatpush1.msra.mxu0 %v1386
    %1388 = vmatprep.subr.mxu0 0.0
    %v1389 = vand.u32 %v1185, 4294901760
    %v1390 = vsub.f32 %v1185, %v1389
    %v1391 = vand.u32 %v1390, 4294901760
    %v1392 = vsub.f32 %v1390, %v1391
    %v1393 = vand.u32 %v1392, 4294901760
    %1394 = vmatpush1.msra.mxu0 %v1393
    %1395 = vmatprep.subr.mxu0 0.0
    %v1396 = vand.u32 %v1184, 4294901760
    %v1397 = vsub.f32 %v1184, %v1396
    %v1398 = vand.u32 %v1397, 4294901760
    %v1399 = vsub.f32 %v1397, %v1398
    %v1400 = vand.u32 %v1399, 4294901760
    %1401 = vmatpush1.msra.mxu0 %v1400
    %1402 = vmatprep.subr.mxu0 0.0
    %v1403 = vand.u32 %v1183, 4294901760
    %v1404 = vsub.f32 %v1183, %v1403
    %v1405 = vand.u32 %v1404, 4294901760
    %v1406 = vsub.f32 %v1404, %v1405
    %v1407 = vand.u32 %v1406, 4294901760
    %1408 = vmatpush1.msra.mxu0 %v1407
    %1409 = vmatprep.subr.mxu0 0.0
    %1410 = vmatpush2.msra.mxu0 0.0
    %1411 = vmatprep.subr.mxu0 0.0
    %1412 = vmatpush2.msra.mxu0 0.0
    %1413 = vmatprep.subr.mxu0 0.0
    %1414 = vmatpush2.msra.mxu0 0.0
    %1415 = vmatprep.subr.mxu0 0.0
    %1416 = vmatpush2.msra.mxu0 0.0
    %1417 = vmatprep.subr.mxu0 0.0
    %1418 = vmatpush2.msra.mxu0 0.0
    %1419 = vmatprep.subr.mxu0 0.0
    %1420 = vmatpush2.msra.mxu0 0.0
    %1421 = vmatprep.subr.mxu0 0.0
    %1422 = vmatpush2.msra.mxu0 0.0
    %1423 = vmatprep.subr.mxu0 0.0
    %1424 = vmatpush2.msra.mxu0 0.0
    %1425 = vmatprep.subr.mxu0 0.0
    %1426 = vmatpush2.msra.mxu0 0.0
    %1427 = vmatprep.subr.mxu0 0.0
    %1428 = vmatpush2.msra.mxu0 0.0
    %1429 = vmatprep.subr.mxu0 0.0
    %1430 = vmatpush2.msra.mxu0 0.0
    %1431 = vmatprep.subr.mxu0 0.0
    %1432 = vmatpush2.msra.mxu0 0.0
    %1433 = vmatprep.subr.mxu0 0.0
    %1434 = vmatpush2.msra.mxu0 0.0
    %1435 = vmatprep.subr.mxu0 0.0
    %1436 = vmatpush2.msra.mxu0 0.0
    %1437 = vmatprep.subr.mxu0 0.0
    %1438 = vmatpush2.msra.mxu0 0.0
    %1439 = vmatprep.subr.mxu0 0.0
    %1440 = vmatpush2.msra.mxu0 0.0
    %1441 = vmatprep.mubr.f32.mxu0 0.0
    %v1442 = vand.u32 %v1182, 4294901760
    %1443 = vmatmul.mubr.f32.gmra.mxu0 %v1442
    %v1444 = vpop.f32.mrf.mxu0
    %v1445 = vadd.f32 %v1294, %v1444
    %v1446 = vpop.f32.mrf.mxu0
    %1447 = vdwg.mxu0
    %1448 = vmatprep.subr.mxu0 0.0
    %v1449 = vand.u32 %v1198, 4294901760
    %v1450 = vsub.f32 %v1198, %v1449
    %1451 = vmatpush1.msra.mxu0 %v1450
    %1452 = vmatprep.subr.mxu0 0.0
    %v1453 = vand.u32 %v1197, 4294901760
    %v1454 = vsub.f32 %v1197, %v1453
    %1455 = vmatpush1.msra.mxu0 %v1454
    %1456 = vmatprep.subr.mxu0 0.0
    %v1457 = vand.u32 %v1196, 4294901760
    %v1458 = vsub.f32 %v1196, %v1457
    %1459 = vmatpush1.msra.mxu0 %v1458
    %1460 = vmatprep.subr.mxu0 0.0
    %v1461 = vand.u32 %v1195, 4294901760
    %v1462 = vsub.f32 %v1195, %v1461
    %1463 = vmatpush1.msra.mxu0 %v1462
    %1464 = vmatprep.subr.mxu0 0.0
    %v1465 = vand.u32 %v1194, 4294901760
    %v1466 = vsub.f32 %v1194, %v1465
    %1467 = vmatpush1.msra.mxu0 %v1466
    %1468 = vmatprep.subr.mxu0 0.0
    %v1469 = vand.u32 %v1193, 4294901760
    %v1470 = vsub.f32 %v1193, %v1469
    %1471 = vmatpush1.msra.mxu0 %v1470
    %1472 = vmatprep.subr.mxu0 0.0
    %v1473 = vand.u32 %v1192, 4294901760
    %v1474 = vsub.f32 %v1192, %v1473
    %1475 = vmatpush1.msra.mxu0 %v1474
    %1476 = vmatprep.subr.mxu0 0.0
    %v1477 = vand.u32 %v1191, 4294901760
    %v1478 = vsub.f32 %v1191, %v1477
    %1479 = vmatpush1.msra.mxu0 %v1478
    %1480 = vmatprep.subr.mxu0 0.0
    %v1481 = vand.u32 %v1190, 4294901760
    %v1482 = vsub.f32 %v1190, %v1481
    %1483 = vmatpush1.msra.mxu0 %v1482
    %1484 = vmatprep.subr.mxu0 0.0
    %v1485 = vand.u32 %v1189, 4294901760
    %v1486 = vsub.f32 %v1189, %v1485
    %1487 = vmatpush1.msra.mxu0 %v1486
    %1488 = vmatprep.subr.mxu0 0.0
    %v1489 = vand.u32 %v1188, 4294901760
    %v1490 = vsub.f32 %v1188, %v1489
    %1491 = vmatpush1.msra.mxu0 %v1490
    %1492 = vmatprep.subr.mxu0 0.0
    %v1493 = vand.u32 %v1187, 4294901760
    %v1494 = vsub.f32 %v1187, %v1493
    %1495 = vmatpush1.msra.mxu0 %v1494
    %1496 = vmatprep.subr.mxu0 0.0
    %v1497 = vand.u32 %v1186, 4294901760
    %v1498 = vsub.f32 %v1186, %v1497
    %1499 = vmatpush1.msra.mxu0 %v1498
    %1500 = vmatprep.subr.mxu0 0.0
    %v1501 = vand.u32 %v1185, 4294901760
    %v1502 = vsub.f32 %v1185, %v1501
    %1503 = vmatpush1.msra.mxu0 %v1502
    %1504 = vmatprep.subr.mxu0 0.0
    %v1505 = vand.u32 %v1184, 4294901760
    %v1506 = vsub.f32 %v1184, %v1505
    %1507 = vmatpush1.msra.mxu0 %v1506
    %1508 = vmatprep.subr.mxu0 0.0
    %v1509 = vand.u32 %v1183, 4294901760
    %v1510 = vsub.f32 %v1183, %v1509
    %1511 = vmatpush1.msra.mxu0 %v1510
    %1512 = vmatprep.subr.mxu0 0.0
    %1513 = vmatpush2.msra.mxu0 0.0
    %1514 = vmatprep.subr.mxu0 0.0
    %1515 = vmatpush2.msra.mxu0 0.0
    %1516 = vmatprep.subr.mxu0 0.0
    %1517 = vmatpush2.msra.mxu0 0.0
    %1518 = vmatprep.subr.mxu0 0.0
    %1519 = vmatpush2.msra.mxu0 0.0
    %1520 = vmatprep.subr.mxu0 0.0
    %1521 = vmatpush2.msra.mxu0 0.0
    %1522 = vmatprep.subr.mxu0 0.0
    %1523 = vmatpush2.msra.mxu0 0.0
    %1524 = vmatprep.subr.mxu0 0.0
    %1525 = vmatpush2.msra.mxu0 0.0
    %1526 = vmatprep.subr.mxu0 0.0
    %1527 = vmatpush2.msra.mxu0 0.0
    %1528 = vmatprep.subr.mxu0 0.0
    %1529 = vmatpush2.msra.mxu0 0.0
    %1530 = vmatprep.subr.mxu0 0.0
    %1531 = vmatpush2.msra.mxu0 0.0
    %1532 = vmatprep.subr.mxu0 0.0
    %1533 = vmatpush2.msra.mxu0 0.0
    %1534 = vmatprep.subr.mxu0 0.0
    %1535 = vmatpush2.msra.mxu0 0.0
    %1536 = vmatprep.subr.mxu0 0.0
    %1537 = vmatpush2.msra.mxu0 0.0
    %1538 = vmatprep.subr.mxu0 0.0
    %1539 = vmatpush2.msra.mxu0 0.0
    %1540 = vmatprep.subr.mxu0 0.0
    %1541 = vmatpush2.msra.mxu0 0.0
    %1542 = vmatprep.subr.mxu0 0.0
    %1543 = vmatpush2.msra.mxu0 0.0
    %1544 = vmatprep.mubr.f32.mxu0 0.0
    %v1545 = vand.u32 %v1182, 4294901760
    %v1546 = vsub.f32 %v1182, %v1545
    %1547 = vmatmul.mubr.f32.gmra.mxu0 %v1546
    %v1548 = vpop.f32.mrf.mxu0
    %v1549 = vadd.f32 %v1445, %v1548
    %v1550 = vpop.f32.mrf.mxu0
    %1551 = vdwg.mxu0
    %1552 = vmatprep.subr.mxu0 0.0
    %v1553 = vand.u32 %v1198, 4294901760
    %1554 = vmatpush1.msra.mxu0 %v1553
    %1555 = vmatprep.subr.mxu0 0.0
    %v1556 = vand.u32 %v1197, 4294901760
    %1557 = vmatpush1.msra.mxu0 %v1556
    %1558 = vmatprep.subr.mxu0 0.0
    %v1559 = vand.u32 %v1196, 4294901760
    %1560 = vmatpush1.msra.mxu0 %v1559
    %1561 = vmatprep.subr.mxu0 0.0
    %v1562 = vand.u32 %v1195, 4294901760
    %1563 = vmatpush1.msra.mxu0 %v1562
    %1564 = vmatprep.subr.mxu0 0.0
    %v1565 = vand.u32 %v1194, 4294901760
    %1566 = vmatpush1.msra.mxu0 %v1565
    %1567 = vmatprep.subr.mxu0 0.0
    %v1568 = vand.u32 %v1193, 4294901760
    %1569 = vmatpush1.msra.mxu0 %v1568
    %1570 = vmatprep.subr.mxu0 0.0
    %v1571 = vand.u32 %v1192, 4294901760
    %1572 = vmatpush1.msra.mxu0 %v1571
    %1573 = vmatprep.subr.mxu0 0.0
    %v1574 = vand.u32 %v1191, 4294901760
    %1575 = vmatpush1.msra.mxu0 %v1574
    %1576 = vmatprep.subr.mxu0 0.0
    %v1577 = vand.u32 %v1190, 4294901760
    %1578 = vmatpush1.msra.mxu0 %v1577
    %1579 = vmatprep.subr.mxu0 0.0
    %v1580 = vand.u32 %v1189, 4294901760
    %1581 = vmatpush1.msra.mxu0 %v1580
    %1582 = vmatprep.subr.mxu0 0.0
    %v1583 = vand.u32 %v1188, 4294901760
    %1584 = vmatpush1.msra.mxu0 %v1583
    %1585 = vmatprep.subr.mxu0 0.0
    %v1586 = vand.u32 %v1187, 4294901760
    %1587 = vmatpush1.msra.mxu0 %v1586
    %1588 = vmatprep.subr.mxu0 0.0
    %v1589 = vand.u32 %v1186, 4294901760
    %1590 = vmatpush1.msra.mxu0 %v1589
    %1591 = vmatprep.subr.mxu0 0.0
    %v1592 = vand.u32 %v1185, 4294901760
    %1593 = vmatpush1.msra.mxu0 %v1592
    %1594 = vmatprep.subr.mxu0 0.0
    %v1595 = vand.u32 %v1184, 4294901760
    %1596 = vmatpush1.msra.mxu0 %v1595
    %1597 = vmatprep.subr.mxu0 0.0
    %v1598 = vand.u32 %v1183, 4294901760
    %1599 = vmatpush1.msra.mxu0 %v1598
    %1600 = vmatprep.subr.mxu0 0.0
    %1601 = vmatpush2.msra.mxu0 0.0
    %1602 = vmatprep.subr.mxu0 0.0
    %1603 = vmatpush2.msra.mxu0 0.0
    %1604 = vmatprep.subr.mxu0 0.0
    %1605 = vmatpush2.msra.mxu0 0.0
    %1606 = vmatprep.subr.mxu0 0.0
    %1607 = vmatpush2.msra.mxu0 0.0
    %1608 = vmatprep.subr.mxu0 0.0
    %1609 = vmatpush2.msra.mxu0 0.0
    %1610 = vmatprep.subr.mxu0 0.0
    %1611 = vmatpush2.msra.mxu0 0.0
    %1612 = vmatprep.subr.mxu0 0.0
    %1613 = vmatpush2.msra.mxu0 0.0
    %1614 = vmatprep.subr.mxu0 0.0
    %1615 = vmatpush2.msra.mxu0 0.0
    %1616 = vmatprep.subr.mxu0 0.0
    %1617 = vmatpush2.msra.mxu0 0.0
    %1618 = vmatprep.subr.mxu0 0.0
    %1619 = vmatpush2.msra.mxu0 0.0
    %1620 = vmatprep.subr.mxu0 0.0
    %1621 = vmatpush2.msra.mxu0 0.0
    %1622 = vmatprep.subr.mxu0 0.0
    %1623 = vmatpush2.msra.mxu0 0.0
    %1624 = vmatprep.subr.mxu0 0.0
    %1625 = vmatpush2.msra.mxu0 0.0
    %1626 = vmatprep.subr.mxu0 0.0
    %1627 = vmatpush2.msra.mxu0 0.0
    %1628 = vmatprep.subr.mxu0 0.0
    %1629 = vmatpush2.msra.mxu0 0.0
    %1630 = vmatprep.subr.mxu0 0.0
    %1631 = vmatpush2.msra.mxu0 0.0
    %1632 = vmatprep.mubr.f32.mxu0 0.0
    %v1633 = vand.u32 %v1182, 4294901760
    %v1634 = vsub.f32 %v1182, %v1633
    %v1635 = vand.u32 %v1634, 4294901760
    %1636 = vmatmul.mubr.f32.gmra.mxu0 %v1635
    %v1637 = vpop.f32.mrf.mxu0
    %v1638 = vadd.f32 %v1549, %v1637
    %v1639 = vpop.f32.mrf.mxu0
    %1640 = vdwg.mxu0
    %1641 = vmatprep.subr.mxu0 0.0
    %v1642 = vand.u32 %v1198, 4294901760
    %v1643 = vsub.f32 %v1198, %v1642
    %v1644 = vand.u32 %v1643, 4294901760
    %1645 = vmatpush1.msra.mxu0 %v1644
    %1646 = vmatprep.subr.mxu0 0.0
    %v1647 = vand.u32 %v1197, 4294901760
    %v1648 = vsub.f32 %v1197, %v1647
    %v1649 = vand.u32 %v1648, 4294901760
    %1650 = vmatpush1.msra.mxu0 %v1649
    %1651 = vmatprep.subr.mxu0 0.0
    %v1652 = vand.u32 %v1196, 4294901760
    %v1653 = vsub.f32 %v1196, %v1652
    %v1654 = vand.u32 %v1653, 4294901760
    %1655 = vmatpush1.msra.mxu0 %v1654
    %1656 = vmatprep.subr.mxu0 0.0
    %v1657 = vand.u32 %v1195, 4294901760
    %v1658 = vsub.f32 %v1195, %v1657
    %v1659 = vand.u32 %v1658, 4294901760
    %1660 = vmatpush1.msra.mxu0 %v1659
    %1661 = vmatprep.subr.mxu0 0.0
    %v1662 = vand.u32 %v1194, 4294901760
    %v1663 = vsub.f32 %v1194, %v1662
    %v1664 = vand.u32 %v1663, 4294901760
    %1665 = vmatpush1.msra.mxu0 %v1664
    %1666 = vmatprep.subr.mxu0 0.0
    %v1667 = vand.u32 %v1193, 4294901760
    %v1668 = vsub.f32 %v1193, %v1667
    %v1669 = vand.u32 %v1668, 4294901760
    %1670 = vmatpush1.msra.mxu0 %v1669
    %1671 = vmatprep.subr.mxu0 0.0
    %v1672 = vand.u32 %v1192, 4294901760
    %v1673 = vsub.f32 %v1192, %v1672
    %v1674 = vand.u32 %v1673, 4294901760
    %1675 = vmatpush1.msra.mxu0 %v1674
    %1676 = vmatprep.subr.mxu0 0.0
    %v1677 = vand.u32 %v1191, 4294901760
    %v1678 = vsub.f32 %v1191, %v1677
    %v1679 = vand.u32 %v1678, 4294901760
    %1680 = vmatpush1.msra.mxu0 %v1679
    %1681 = vmatprep.subr.mxu0 0.0
    %v1682 = vand.u32 %v1190, 4294901760
    %v1683 = vsub.f32 %v1190, %v1682
    %v1684 = vand.u32 %v1683, 4294901760
    %1685 = vmatpush1.msra.mxu0 %v1684
    %1686 = vmatprep.subr.mxu0 0.0
    %v1687 = vand.u32 %v1189, 4294901760
    %v1688 = vsub.f32 %v1189, %v1687
    %v1689 = vand.u32 %v1688, 4294901760
    %1690 = vmatpush1.msra.mxu0 %v1689
    %1691 = vmatprep.subr.mxu0 0.0
    %v1692 = vand.u32 %v1188, 4294901760
    %v1693 = vsub.f32 %v1188, %v1692
    %v1694 = vand.u32 %v1693, 4294901760
    %1695 = vmatpush1.msra.mxu0 %v1694
    %1696 = vmatprep.subr.mxu0 0.0
    %v1697 = vand.u32 %v1187, 4294901760
    %v1698 = vsub.f32 %v1187, %v1697
    %v1699 = vand.u32 %v1698, 4294901760
    %1700 = vmatpush1.msra.mxu0 %v1699
    %1701 = vmatprep.subr.mxu0 0.0
    %v1702 = vand.u32 %v1186, 4294901760
    %v1703 = vsub.f32 %v1186, %v1702
    %v1704 = vand.u32 %v1703, 4294901760
    %1705 = vmatpush1.msra.mxu0 %v1704
    %1706 = vmatprep.subr.mxu0 0.0
    %v1707 = vand.u32 %v1185, 4294901760
    %v1708 = vsub.f32 %v1185, %v1707
    %v1709 = vand.u32 %v1708, 4294901760
    %1710 = vmatpush1.msra.mxu0 %v1709
    %1711 = vmatprep.subr.mxu0 0.0
    %v1712 = vand.u32 %v1184, 4294901760
    %v1713 = vsub.f32 %v1184, %v1712
    %v1714 = vand.u32 %v1713, 4294901760
    %1715 = vmatpush1.msra.mxu0 %v1714
    %1716 = vmatprep.subr.mxu0 0.0
    %v1717 = vand.u32 %v1183, 4294901760
    %v1718 = vsub.f32 %v1183, %v1717
    %v1719 = vand.u32 %v1718, 4294901760
    %1720 = vmatpush1.msra.mxu0 %v1719
    %1721 = vmatprep.subr.mxu0 0.0
    %1722 = vmatpush2.msra.mxu0 0.0
    %1723 = vmatprep.subr.mxu0 0.0
    %1724 = vmatpush2.msra.mxu0 0.0
    %1725 = vmatprep.subr.mxu0 0.0
    %1726 = vmatpush2.msra.mxu0 0.0
    %1727 = vmatprep.subr.mxu0 0.0
    %1728 = vmatpush2.msra.mxu0 0.0
    %1729 = vmatprep.subr.mxu0 0.0
    %1730 = vmatpush2.msra.mxu0 0.0
    %1731 = vmatprep.subr.mxu0 0.0
    %1732 = vmatpush2.msra.mxu0 0.0
    %1733 = vmatprep.subr.mxu0 0.0
    %1734 = vmatpush2.msra.mxu0 0.0
    %1735 = vmatprep.subr.mxu0 0.0
    %1736 = vmatpush2.msra.mxu0 0.0
    %1737 = vmatprep.subr.mxu0 0.0
    %1738 = vmatpush2.msra.mxu0 0.0
    %1739 = vmatprep.subr.mxu0 0.0
    %1740 = vmatpush2.msra.mxu0 0.0
    %1741 = vmatprep.subr.mxu0 0.0
    %1742 = vmatpush2.msra.mxu0 0.0
    %1743 = vmatprep.subr.mxu0 0.0
    %1744 = vmatpush2.msra.mxu0 0.0
    %1745 = vmatprep.subr.mxu0 0.0
    %1746 = vmatpush2.msra.mxu0 0.0
    %1747 = vmatprep.subr.mxu0 0.0
    %1748 = vmatpush2.msra.mxu0 0.0
    %1749 = vmatprep.subr.mxu0 0.0
    %1750 = vmatpush2.msra.mxu0 0.0
    %1751 = vmatprep.subr.mxu0 0.0
    %1752 = vmatpush2.msra.mxu0 0.0
    %1753 = vmatprep.mubr.f32.mxu0 0.0
    %v1754 = vand.u32 %v1182, 4294901760
    %1755 = vmatmul.mubr.f32.gmra.mxu0 %v1754
    %v1756 = vpop.f32.mrf.mxu0
    %v1757 = vadd.f32 %v1638, %v1756
    %v1758 = vpop.f32.mrf.mxu0
    %1759 = vdwg.mxu0
    %1760 = vmatprep.subr.mxu0 0.0
    %v1761 = vand.u32 %v1198, 4294901760
    %1762 = vmatpush1.msra.mxu0 %v1761
    %1763 = vmatprep.subr.mxu0 0.0
    %v1764 = vand.u32 %v1197, 4294901760
    %1765 = vmatpush1.msra.mxu0 %v1764
    %1766 = vmatprep.subr.mxu0 0.0
    %v1767 = vand.u32 %v1196, 4294901760
    %1768 = vmatpush1.msra.mxu0 %v1767
    %1769 = vmatprep.subr.mxu0 0.0
    %v1770 = vand.u32 %v1195, 4294901760
    %1771 = vmatpush1.msra.mxu0 %v1770
    %1772 = vmatprep.subr.mxu0 0.0
    %v1773 = vand.u32 %v1194, 4294901760
    %1774 = vmatpush1.msra.mxu0 %v1773
    %1775 = vmatprep.subr.mxu0 0.0
    %v1776 = vand.u32 %v1193, 4294901760
    %1777 = vmatpush1.msra.mxu0 %v1776
    %1778 = vmatprep.subr.mxu0 0.0
    %v1779 = vand.u32 %v1192, 4294901760
    %1780 = vmatpush1.msra.mxu0 %v1779
    %1781 = vmatprep.subr.mxu0 0.0
    %v1782 = vand.u32 %v1191, 4294901760
    %1783 = vmatpush1.msra.mxu0 %v1782
    %1784 = vmatprep.subr.mxu0 0.0
    %v1785 = vand.u32 %v1190, 4294901760
    %1786 = vmatpush1.msra.mxu0 %v1785
    %1787 = vmatprep.subr.mxu0 0.0
    %v1788 = vand.u32 %v1189, 4294901760
    %1789 = vmatpush1.msra.mxu0 %v1788
    %1790 = vmatprep.subr.mxu0 0.0
    %v1791 = vand.u32 %v1188, 4294901760
    %1792 = vmatpush1.msra.mxu0 %v1791
    %1793 = vmatprep.subr.mxu0 0.0
    %v1794 = vand.u32 %v1187, 4294901760
    %1795 = vmatpush1.msra.mxu0 %v1794
    %1796 = vmatprep.subr.mxu0 0.0
    %v1797 = vand.u32 %v1186, 4294901760
    %1798 = vmatpush1.msra.mxu0 %v1797
    %1799 = vmatprep.subr.mxu0 0.0
    %v1800 = vand.u32 %v1185, 4294901760
    %1801 = vmatpush1.msra.mxu0 %v1800
    %1802 = vmatprep.subr.mxu0 0.0
    %v1803 = vand.u32 %v1184, 4294901760
    %1804 = vmatpush1.msra.mxu0 %v1803
    %1805 = vmatprep.subr.mxu0 0.0
    %v1806 = vand.u32 %v1183, 4294901760
    %1807 = vmatpush1.msra.mxu0 %v1806
    %1808 = vmatprep.subr.mxu0 0.0
    %1809 = vmatpush2.msra.mxu0 0.0
    %1810 = vmatprep.subr.mxu0 0.0
    %1811 = vmatpush2.msra.mxu0 0.0
    %1812 = vmatprep.subr.mxu0 0.0
    %1813 = vmatpush2.msra.mxu0 0.0
    %1814 = vmatprep.subr.mxu0 0.0
    %1815 = vmatpush2.msra.mxu0 0.0
    %1816 = vmatprep.subr.mxu0 0.0
    %1817 = vmatpush2.msra.mxu0 0.0
    %1818 = vmatprep.subr.mxu0 0.0
    %1819 = vmatpush2.msra.mxu0 0.0
    %1820 = vmatprep.subr.mxu0 0.0
    %1821 = vmatpush2.msra.mxu0 0.0
    %1822 = vmatprep.subr.mxu0 0.0
    %1823 = vmatpush2.msra.mxu0 0.0
    %1824 = vmatprep.subr.mxu0 0.0
    %1825 = vmatpush2.msra.mxu0 0.0
    %1826 = vmatprep.subr.mxu0 0.0
    %1827 = vmatpush2.msra.mxu0 0.0
    %1828 = vmatprep.subr.mxu0 0.0
    %1829 = vmatpush2.msra.mxu0 0.0
    %1830 = vmatprep.subr.mxu0 0.0
    %1831 = vmatpush2.msra.mxu0 0.0
    %1832 = vmatprep.subr.mxu0 0.0
    %1833 = vmatpush2.msra.mxu0 0.0
    %1834 = vmatprep.subr.mxu0 0.0
    %1835 = vmatpush2.msra.mxu0 0.0
    %1836 = vmatprep.subr.mxu0 0.0
    %1837 = vmatpush2.msra.mxu0 0.0
    %1838 = vmatprep.subr.mxu0 0.0
    %1839 = vmatpush2.msra.mxu0 0.0
    %1840 = vmatprep.mubr.f32.mxu0 0.0
    %v1841 = vand.u32 %v1182, 4294901760
    %1842 = vmatmul.mubr.f32.gmra.mxu0 %v1841
    %v1843 = vpop.f32.mrf.mxu0
    %v1844 = vadd.f32 %v1757, %v1843
    %v1845 = vpop.f32.mrf.mxu0
    %1846 = vdwg.mxu0
    %1847 = vst [vmem:[%s7] sm:$0xff] %v1844
    // Predicated region
    $region38: #{_forward_impl.1} parent=1 // pred_check
      _
    $region39: #{_forward_impl.1} parent=1 // pred_check_branch
      %1849 = sbr.rel (0) target = $region41
    $region40: #{_forward_impl.1} parent=1 // pred_region
      _
    $region41: #{_forward_impl.1} parent=1 // pred_fallthru
      _
    // Predicated region
    $region42: #{_forward_impl.1} parent=1 // pred_check
      _
    $region43: #{_forward_impl.1} parent=1 // pred_check_branch
      %1851 = sbr.rel (0) target = $region45
    $region44: #{_forward_impl.1} parent=1 // pred_region
      _
    $region45: #{_forward_impl.1} parent=1 // pred_fallthru
      _
    %1852 = vsyncpa [#allocation3], 1
    %1853 = vsyncpa [#allocation5], 1

</llo_original>
